<compile_context>
chip_gen: v6e
topology: v6e:2x2x1
jax: 0.10.0
libtpu: 0.0.40
codegen_flags: <defaults>
</compile_context>

<pallas_src>
import functools
import math

import jax
import jax.numpy as jnp
from jax import lax
from jax.experimental import pallas as pl
from jax.experimental.pallas import tpu as pltpu


def _round_up(x, m):
    return ((x + m - 1) // m) * m


def _sigmoid(x):
    # sigmoid(x) == 0.5 * (tanh(x/2) + 1): one EUP tanh instead of exp + divide (2 EUP ops).
    return 0.5 * jnp.tanh(0.5 * x) + 0.5


def _resident_spec(block_shape):
    """BlockSpec for an operand whose block index never changes (weights / bias).

    Single-buffered (pl.Buffered(1)) so resident weights don't get a useless second copy.
    """
    n = len(block_shape)
    kwargs = {}
    if hasattr(pl, "Buffered"):
        kwargs["pipeline_mode"] = pl.Buffered(1)
    return pl.BlockSpec(block_shape, lambda *_: (0,) * n, **kwargs)


# ----------------------------- LSTM layer kernel ------------------------------

def _lstm_layer_kernel(*refs, TT, B, fuse_fc):
    """One grid step = one chunk of TT timesteps over a 2-D time-major slab.

    (h, c) are carried across grid steps in VMEM scratch. When fuse_fc, the Linear head is
    applied to the chunk's hidden slab in the epilogue and written as the kernel output.
    """
    if fuse_fc:
        (x_ref, wih_ref, whh_ref, b_ref, wfc_ref, bfc_ref,
         out_ref, h_scr, c_scr, xg_scr, hseq_scr) = refs
        hseq_ref = hseq_scr                      # bf16 (TT*B, H) scratch slab
    else:
        x_ref, wih_ref, whh_ref, b_ref, out_ref, h_scr, c_scr, xg_scr = refs
        hseq_ref = out_ref                       # hidden states go straight to bf16 output

    H = h_scr.shape[-1]
    step = pl.program_id(0)

    @pl.when(step == 0)
    def _():
        h_scr[...] = jnp.zeros_like(h_scr)
        c_scr[...] = jnp.zeros_like(c_scr)

    # Whole-chunk input projection: ONE bf16 MXU matmul with f32 accumulation; bias hoisted
    # out of the recurrence (added once per chunk).
    xg_scr[...] = (
        jnp.dot(x_ref[...], wih_ref[...], preferred_element_type=jnp.float32) + b_ref[...]
    )

    whh = whh_ref[...]                           # (H, 4H) bf16, resident across the chunk

    def body(t, carry):
        h_prev, c_prev = carry                   # f32 (B, H)
        row = pl.multiple_of(t * B, B)           # sublane-aligned row offset into 2-D slabs
        # Only this small matmul sits on the sequential critical path.
        gates = xg_scr[pl.ds(row, B), :] + jnp.dot(
            h_prev.astype(jnp.bfloat16), whh, preferred_element_type=jnp.float32)
        i_g = _sigmoid(gates[:, 0 * H:1 * H])
        f_g = _sigmoid(gates[:, 1 * H:2 * H])
        g_g = jnp.tanh(gates[:, 2 * H:3 * H])
        o_g = _sigmoid(gates[:, 3 * H:4 * H])
        c_new = f_g * c_prev + i_g * g_g
        h_new = o_g * jnp.tanh(c_new)
        hseq_ref[pl.ds(row, B), :] = h_new.astype(hseq_ref.dtype)
        return h_new, c_new

    h_fin, c_fin = lax.fori_loop(0, TT, body, (h_scr[...], c_scr[...]),
                                 unroll=min(TT, 8))
    h_scr[...] = h_fin
    c_scr[...] = c_fin

    if fuse_fc:
        # Fused Linear head: rides the MXU in the chunk epilogue; lane-dense f32 output block.
        out_ref[...] = (
            jnp.dot(hseq_ref[...], wfc_ref[...], preferred_element_type=jnp.float32)
            + bfc_ref[...]
        )


def lstm_layer(x_2d, *, T_pad, B_pad, TT, w_ih_t, w_hh_t, bias_row,
               fc_w_t=None, fc_b_row=None):
    """One LSTM layer over a time-major 2-D activation slab.

    x_2d:     (T_pad * B_pad, I) bf16, time-major (row index = t * B_pad + b).
    w_ih_t:   (I, 4H) bf16   w_hh_t: (H, 4H) bf16   bias_row: (1, 4H) f32
    fc_w_t:   optional (H, O_pad) bf16 + fc_b_row (1, O_pad) f32 -> fuse the Linear head.
    Returns (T_pad*B_pad, H) bf16, or (T_pad*B_pad, O_pad) f32 when the FC is fused.
    """
    TBI, I = x_2d.shape
    assert TBI == T_pad * B_pad and T_pad % TT == 0 and B_pad % 8 == 0
    H4 = w_ih_t.shape[1]
    H = H4 // 4
    rows = TT * B_pad
    fuse_fc = fc_w_t is not None

    in_specs = [
        pl.BlockSpec((rows, I), lambda s: (s, 0)),   # x time-chunk slab
        _resident_spec((I, H4)),                     # W_ih^T
        _resident_spec((H, H4)),                     # W_hh^T
        _resident_spec((1, H4)),                     # bias row
    ]
    args = [x_2d, w_ih_t, w_hh_t, bias_row]
    scratch = [
        pltpu.VMEM((B_pad, H), jnp.float32),         # h carry
        pltpu.VMEM((B_pad, H), jnp.float32),         # c carry
        pltpu.VMEM((rows, H4), jnp.float32),         # per-chunk precomputed input gates
    ]

    if fuse_fc:
        O_pad = fc_w_t.shape[1]
        in_specs += [_resident_spec((H, O_pad)), _resident_spec((1, O_pad))]
        args += [fc_w_t, fc_b_row]
        out_shape = jax.ShapeDtypeStruct((T_pad * B_pad, O_pad), jnp.float32)
        out_spec = pl.BlockSpec((rows, O_pad), lambda s: (s, 0))
        scratch.append(pltpu.VMEM((rows, H), jnp.bfloat16))  # hidden slab for FC epilogue
        out_row_bytes = O_pad * 4
        fc_bytes = fc_w_t.size * 2 + fc_b_row.size * 4 + rows * H * 2
    else:
        out_shape = jax.ShapeDtypeStruct((T_pad * B_pad, H), jnp.bfloat16)
        out_spec = pl.BlockSpec((rows, H), lambda s: (s, 0))
        out_row_bytes = H * 2
        fc_bytes = 0

    # VMEM budget: single-buffered weights + double-buffered x/out slabs + scratch + headroom,
    # clamped to 64 MiB so the same code is safe on v7x as well as v5e/v6e.
    vmem_bytes = (
        (I * H4 + H * H4) * 2 + H4 * 4 + fc_bytes
        + 2 * rows * I * 2                 # x blocks (pipelined)
        + 2 * rows * out_row_bytes         # out blocks (pipelined)
        + 2 * B_pad * H * 4                # h/c carries
        + rows * H4 * 4                    # xg scratch
        + (4 << 20)                        # headroom
    )
    vmem_limit = int(min(max(vmem_bytes, 32 << 20), 64 << 20))

    kernel = functools.partial(_lstm_layer_kernel, TT=TT, B=B_pad, fuse_fc=fuse_fc)
    return pl.pallas_call(
        kernel,
        out_shape=out_shape,
        grid_spec=pltpu.PrefetchScalarGridSpec(
            num_scalar_prefetch=0,
            grid=(T_pad // TT,),
            in_specs=in_specs,
            out_specs=out_spec,
            scratch_shapes=scratch,
        ),
        compiler_params=pltpu.CompilerParams(
            dimension_semantics=("arbitrary",),      # sequential recurrence over time chunks
            vmem_limit_bytes=vmem_limit,
        ),
    )(*args)


# ------------------------------- full model ------------------------------------

def init_params(key, input_size, hidden_size, num_layers, output_size):
    """PyTorch-style uniform(-1/sqrt(H), 1/sqrt(H)) init; matmul weights stored bf16."""
    params = {"lstm": [], "fc": None}
    bound = 1.0 / math.sqrt(hidden_size)
    for layer in range(num_layers):
        in_sz = input_size if layer == 0 else hidden_size
        key, k1, k2, k3, k4 = jax.random.split(key, 5)
        w_ih = jax.random.uniform(k1, (4 * hidden_size, in_sz), jnp.float32, -bound, bound)
        w_hh = jax.random.uniform(k2, (4 * hidden_size, hidden_size), jnp.float32, -bound, bound)
        b_ih = jax.random.uniform(k3, (4 * hidden_size,), jnp.float32, -bound, bound)
        b_hh = jax.random.uniform(k4, (4 * hidden_size,), jnp.float32, -bound, bound)
        params["lstm"].append(dict(
            w_ih_t=w_ih.T.astype(jnp.bfloat16),            # (I or H, 4H)
            w_hh_t=w_hh.T.astype(jnp.bfloat16),            # (H, 4H)
            bias_row=(b_ih + b_hh)[None, :],               # (1, 4H) f32
        ))
    key, k1, k2 = jax.random.split(key, 3)
    w_fc = jax.random.uniform(k1, (output_size, hidden_size), jnp.float32, -bound, bound)
    b_fc = jax.random.uniform(k2, (output_size,), jnp.float32, -bound, bound)
    # Lane-dense fused-FC output: pad O to a multiple of 128; true O columns sliced outside.
    o_pad = _round_up(output_size, 128)
    w_fc_t = jnp.zeros((hidden_size, o_pad), jnp.bfloat16)
    w_fc_t = w_fc_t.at[:, :output_size].set(w_fc.T.astype(jnp.bfloat16))
    b_fc_row = jnp.zeros((1, o_pad), jnp.float32).at[:, :output_size].set(b_fc[None, :])
    params["fc"] = dict(w_t=w_fc_t, b_row=b_fc_row)
    return params


@functools.partial(jax.jit, static_argnames=("output_size", "time_block"))
def lstm_model_forward(params, x, *, output_size, time_block=32):
    """x: (B, T, input_size) -> (B, T, output_size). Eval-mode dropout == identity."""
    B, T, I = x.shape
    TT = min(time_block, T)
    T_pad = _round_up(T, TT)
    # Pad batch to a full sublane tile so per-step ops/stores are full (8,128) tiles.
    # Padded rows are independent batch rows; they never mix with real rows and are sliced off.
    B_pad = max(8, _round_up(B, 8))

    # Single entry transpose to time-major, fused with the bf16 cast and zero padding.
    xt = jnp.transpose(x, (1, 0, 2)).astype(jnp.bfloat16)             # (T, B, I)
    xt = jnp.pad(xt, ((0, T_pad - T), (0, B_pad - B), (0, 0)))
    h = xt.reshape(T_pad * B_pad, I)                                  # time-major 2-D slab

    n_layers = len(params["lstm"])
    out2d = None
    for li, lp in enumerate(params["lstm"]):
        if li == n_layers - 1:
            # Inter-layer / post-LSTM dropout is identity in eval mode; FC fused into last layer.
            out2d = lstm_layer(h, T_pad=T_pad, B_pad=B_pad, TT=TT,
                               w_ih_t=lp["w_ih_t"], w_hh_t=lp["w_hh_t"],
                               bias_row=lp["bias_row"],
                               fc_w_t=params["fc"]["w_t"], fc_b_row=params["fc"]["b_row"])
        else:
            h = lstm_layer(h, T_pad=T_pad, B_pad=B_pad, TT=TT,
                           w_ih_t=lp["w_ih_t"], w_hh_t=lp["w_hh_t"],
                           bias_row=lp["bias_row"])

    o_pad = out2d.shape[-1]
    out = out2d.reshape(T_pad, B_pad, o_pad)[:T, :B, :output_size]
    return jnp.transpose(out, (1, 0, 2))                              # (B, T, O) f32


def reference_forward(params, x, *, output_size):
    """Pure-JAX f32 reference (same bf16-stored weights upcast) for validation."""
    B, T, _ = x.shape
    h_seq = jnp.transpose(x, (1, 0, 2)).astype(jnp.float32)
    for lp in params["lstm"]:
        wih = lp["w_ih_t"].astype(jnp.float32)
        whh = lp["w_hh_t"].astype(jnp.float32)
        b = lp["bias_row"].astype(jnp.float32)
        H = whh.shape[0]

        def step(carry, x_t, wih=wih, whh=whh, b=b, H=H):
            h, c = carry
            g = x_t @ wih + h @ whh + b
            i = jax.nn.sigmoid(g[:, :H])
            f = jax.nn.sigmoid(g[:, H:2 * H])
            gg = jnp.tanh(g[:, 2 * H:3 * H])
            o = jax.nn.sigmoid(g[:, 3 * H:])
            c = f * c + i * gg
            h = o * jnp.tanh(c)
            return (h, c), h

        _, h_seq = lax.scan(step, (jnp.zeros((B, H)), jnp.zeros((B, H))), h_seq)
    w_fc = params["fc"]["w_t"].astype(jnp.float32)
    b_fc = params["fc"]["b_row"].astype(jnp.float32)
    out = h_seq @ w_fc + b_fc
    return jnp.transpose(out, (1, 0, 2))[:, :, :output_size]


if __name__ == "__main__":
    B, T = 2, 8
    input_size, hidden_size, num_layers, output_size, dropout = 8, 32, 2, 4, 0.0

    key = jax.random.PRNGKey(0)
    key, kx = jax.random.split(key)
    x = jax.random.normal(kx, (B, T, input_size), jnp.float32)

    params = init_params(key, input_size, hidden_size, num_layers, output_size)

    out = lstm_model_forward(params, x, output_size=output_size)
    jax.block_until_ready(out)
    assert out.shape == (B, T, output_size), out.shape

    # Sanity-check against a pure-JAX reference (bf16 matmul activations -> loose tolerance;
    # re-validate tolerance for long sequences / deep stacks / large H).
    ref = reference_forward(params, x, output_size=output_size)
    max_err = float(jnp.max(jnp.abs(out - ref)))
    assert max_err < 0.1, f"max abs error vs reference: {max_err}"

    print("KERNEL_OK")
</pallas_src>

<mosaic_0001>
module attributes {stable_mosaic.version = 11 : i64} {
  func.func @_lstm_layer_kernel(%arg0: i32, %arg1: memref<64x8xbf16, #tpu.memory_space<vmem>>, %arg2: memref<8x128xbf16, #tpu.memory_space<vmem>>, %arg3: memref<32x128xbf16, #tpu.memory_space<vmem>>, %arg4: memref<1x128xf32, #tpu.memory_space<vmem>>, %arg5: memref<64x32xbf16, #tpu.memory_space<vmem>>, %arg6: memref<8x32xf32, #tpu.memory_space<vmem>>, %arg7: memref<8x32xf32, #tpu.memory_space<vmem>>, %arg8: memref<64x128xf32, #tpu.memory_space<vmem>>) attributes {dimension_semantics = [#tpu.dimension_semantics<arbitrary>], iteration_bounds = array<i64: 1>, scalar_prefetch = 0 : i64, scratch_operands = 3 : i64, tpu.core_type = #tpu.core_type<tc>, window_params = [{transform_indices = @transform_0, window_bounds = array<i64: 64, 8>}, {pipeline_mode = #tpu.pipeline_mode<synchronous>, transform_indices = @transform_1, window_bounds = array<i64: 8, 128>}, {pipeline_mode = #tpu.pipeline_mode<synchronous>, transform_indices = @transform_2, window_bounds = array<i64: 32, 128>}, {pipeline_mode = #tpu.pipeline_mode<synchronous>, transform_indices = @transform_3, window_bounds = array<i64: 1, 128>}, {transform_indices = @transform_4, window_bounds = array<i64: 64, 32>}]} {
    %c0_i32 = arith.constant 0 : i32
    %0 = arith.cmpi eq, %arg0, %c0_i32 : i32
    %1 = arith.extui %0 : i1 to i32
    %c0_i32_0 = arith.constant 0 : i32
    %2 = arith.cmpi ne, %1, %c0_i32_0 : i32
    scf.if %2 {
      %cst_123 = arith.constant 0.000000e+00 : f32
      %343 = vector.broadcast %cst_123 : f32 to vector<8x32xf32>
      %c0_124 = arith.constant 0 : index
      %c0_125 = arith.constant 0 : index
      %344 = vector.load %arg6[%c0_124, %c0_125] : memref<8x32xf32, #tpu.memory_space<vmem>>, vector<8x32xf32>
      tpu.vector_store %arg6[%c0_124, %c0_125], %343 {strides = array<i32>} : memref<8x32xf32, #tpu.memory_space<vmem>>, vector<8x32xf32>,
      %cst_126 = arith.constant 0.000000e+00 : f32
      %345 = vector.broadcast %cst_126 : f32 to vector<8x32xf32>
      %c0_127 = arith.constant 0 : index
      %c0_128 = arith.constant 0 : index
      %346 = vector.load %arg7[%c0_127, %c0_128] : memref<8x32xf32, #tpu.memory_space<vmem>>, vector<8x32xf32>
      tpu.vector_store %arg7[%c0_127, %c0_128], %345 {strides = array<i32>} : memref<8x32xf32, #tpu.memory_space<vmem>>, vector<8x32xf32>,
    } else {
    }
    %c0 = arith.constant 0 : index
    %c0_1 = arith.constant 0 : index
    %3 = vector.load %arg1[%c0, %c0_1] : memref<64x8xbf16, #tpu.memory_space<vmem>>, vector<64x8xbf16>
    %c0_2 = arith.constant 0 : index
    %c0_3 = arith.constant 0 : index
    %4 = vector.load %arg2[%c0_2, %c0_3] : memref<8x128xbf16, #tpu.memory_space<vmem>>, vector<8x128xbf16>
    %cst = arith.constant dense<0.000000e+00> : vector<64x128xf32>
    %5 = tpu.matmul %3, %4, %cst {dimension_numbers = #tpu.dot_dimension_numbers<[1], [0], [0], [1], [0, 0, 1, 1], [], []>} : vector<64x8xbf16>, vector<8x128xbf16>, vector<64x128xf32> -> vector<64x128xf32>
    %c0_4 = arith.constant 0 : index
    %c0_5 = arith.constant 0 : index
    %6 = vector.load %arg4[%c0_4, %c0_5] : memref<1x128xf32, #tpu.memory_space<vmem>>, vector<1x128xf32>
    %7 = vector.broadcast %6 : vector<1x128xf32> to vector<64x128xf32>
    %8 = arith.addf %5, %7 : vector<64x128xf32>
    %c0_6 = arith.constant 0 : index
    %c0_7 = arith.constant 0 : index
    %9 = vector.load %arg8[%c0_6, %c0_7] : memref<64x128xf32, #tpu.memory_space<vmem>>, vector<64x128xf32>
    tpu.vector_store %arg8[%c0_6, %c0_7], %8 {strides = array<i32>} : memref<64x128xf32, #tpu.memory_space<vmem>>, vector<64x128xf32>,
    %c0_8 = arith.constant 0 : index
    %c0_9 = arith.constant 0 : index
    %10 = vector.load %arg3[%c0_8, %c0_9] : memref<32x128xbf16, #tpu.memory_space<vmem>>, vector<32x128xbf16>
    %c0_10 = arith.constant 0 : index
    %c0_11 = arith.constant 0 : index
    %11 = vector.load %arg6[%c0_10, %c0_11] : memref<8x32xf32, #tpu.memory_space<vmem>>, vector<8x32xf32>
    %c0_12 = arith.constant 0 : index
    %c0_13 = arith.constant 0 : index
    %12 = vector.load %arg7[%c0_12, %c0_13] : memref<8x32xf32, #tpu.memory_space<vmem>>, vector<8x32xf32>
    %c0_i32_14 = arith.constant 0 : i32
    %c8_i32 = arith.constant 8 : i32
    %13 = arith.muli %c0_i32_14, %c8_i32 : i32
    %14 = tpu.assume_multiple %13, 8 : i32
    %15 = arith.index_cast %14 : i32 to index
    %c0_15 = arith.constant 0 : index
    %16 = vector.load %arg8[%15, %c0_15] : memref<64x128xf32, #tpu.memory_space<vmem>>, vector<8x128xf32>
    %17 = arith.truncf %11 : vector<8x32xf32> to vector<8x32xbf16>
    %cst_16 = arith.constant dense<0.000000e+00> : vector<8x128xf32>
    %18 = tpu.matmul %17, %10, %cst_16 {dimension_numbers = #tpu.dot_dimension_numbers<[1], [0], [0], [1], [0, 0, 1, 1], [], []>} : vector<8x32xbf16>, vector<32x128xbf16>, vector<8x128xf32> -> vector<8x128xf32>
    %19 = arith.addf %16, %18 : vector<8x128xf32>
    %20 = vector.extract_strided_slice %19 {offsets = [0, 0], sizes = [8, 32], strides = [1, 1]} : vector<8x128xf32> to vector<8x32xf32>
    %cst_17 = arith.constant 5.000000e-01 : f32
    %21 = vector.broadcast %cst_17 : f32 to vector<8x32xf32>
    %22 = arith.mulf %21, %20 : vector<8x32xf32>
    %23 = math.tanh %22 : vector<8x32xf32>
    %cst_18 = arith.constant 5.000000e-01 : f32
    %24 = vector.broadcast %cst_18 : f32 to vector<8x32xf32>
    %25 = arith.mulf %24, %23 : vector<8x32xf32>
    %cst_19 = arith.constant 5.000000e-01 : f32
    %26 = vector.broadcast %cst_19 : f32 to vector<8x32xf32>
    %27 = arith.addf %25, %26 : vector<8x32xf32>
    %28 = vector.extract_strided_slice %19 {offsets = [0, 32], sizes = [8, 32], strides = [1, 1]} : vector<8x128xf32> to vector<8x32xf32>
    %cst_20 = arith.constant 5.000000e-01 : f32
    %29 = vector.broadcast %cst_20 : f32 to vector<8x32xf32>
    %30 = arith.mulf %29, %28 : vector<8x32xf32>
    %31 = math.tanh %30 : vector<8x32xf32>
    %cst_21 = arith.constant 5.000000e-01 : f32
    %32 = vector.broadcast %cst_21 : f32 to vector<8x32xf32>
    %33 = arith.mulf %32, %31 : vector<8x32xf32>
    %cst_22 = arith.constant 5.000000e-01 : f32
    %34 = vector.broadcast %cst_22 : f32 to vector<8x32xf32>
    %35 = arith.addf %33, %34 : vector<8x32xf32>
    %36 = vector.extract_strided_slice %19 {offsets = [0, 64], sizes = [8, 32], strides = [1, 1]} : vector<8x128xf32> to vector<8x32xf32>
    %37 = math.tanh %36 : vector<8x32xf32>
    %38 = vector.extract_strided_slice %19 {offsets = [0, 96], sizes = [8, 32], strides = [1, 1]} : vector<8x128xf32> to vector<8x32xf32>
    %cst_23 = arith.constant 5.000000e-01 : f32
    %39 = vector.broadcast %cst_23 : f32 to vector<8x32xf32>
    %40 = arith.mulf %39, %38 : vector<8x32xf32>
    %41 = math.tanh %40 : vector<8x32xf32>
    %cst_24 = arith.constant 5.000000e-01 : f32
    %42 = vector.broadcast %cst_24 : f32 to vector<8x32xf32>
    %43 = arith.mulf %42, %41 : vector<8x32xf32>
    %cst_25 = arith.constant 5.000000e-01 : f32
    %44 = vector.broadcast %cst_25 : f32 to vector<8x32xf32>
    %45 = arith.addf %43, %44 : vector<8x32xf32>
    %46 = arith.mulf %35, %12 : vector<8x32xf32>
    %47 = arith.mulf %27, %37 : vector<8x32xf32>
    %48 = arith.addf %46, %47 : vector<8x32xf32>
    %49 = math.tanh %48 : vector<8x32xf32>
    %50 = arith.mulf %45, %49 : vector<8x32xf32>
    %51 = arith.truncf %50 : vector<8x32xf32> to vector<8x32xbf16>
    %52 = arith.index_cast %14 : i32 to index
    %c0_26 = arith.constant 0 : index
    %53 = vector.load %arg5[%52, %c0_26] : memref<64x32xbf16, #tpu.memory_space<vmem>>, vector<8x32xbf16>
    tpu.vector_store %arg5[%52, %c0_26], %51 {strides = array<i32>} : memref<64x32xbf16, #tpu.memory_space<vmem>>, vector<8x32xbf16>,
    %c1_i32 = arith.constant 1 : i32
    %c8_i32_27 = arith.constant 8 : i32
    %54 = arith.muli %c1_i32, %c8_i32_27 : i32
    %55 = tpu.assume_multiple %54, 8 : i32
    %56 = arith.index_cast %55 : i32 to index
    %c0_28 = arith.constant 0 : index
    %57 = vector.load %arg8[%56, %c0_28] : memref<64x128xf32, #tpu.memory_space<vmem>>, vector<8x128xf32>
    %58 = arith.truncf %50 : vector<8x32xf32> to vector<8x32xbf16>
    %cst_29 = arith.constant dense<0.000000e+00> : vector<8x128xf32>
    %59 = tpu.matmul %58, %10, %cst_29 {dimension_numbers = #tpu.dot_dimension_numbers<[1], [0], [0], [1], [0, 0, 1, 1], [], []>} : vector<8x32xbf16>, vector<32x128xbf16>, vector<8x128xf32> -> vector<8x128xf32>
    %60 = arith.addf %57, %59 : vector<8x128xf32>
    %61 = vector.extract_strided_slice %60 {offsets = [0, 0], sizes = [8, 32], strides = [1, 1]} : vector<8x128xf32> to vector<8x32xf32>
    %cst_30 = arith.constant 5.000000e-01 : f32
    %62 = vector.broadcast %cst_30 : f32 to vector<8x32xf32>
    %63 = arith.mulf %62, %61 : vector<8x32xf32>
    %64 = math.tanh %63 : vector<8x32xf32>
    %cst_31 = arith.constant 5.000000e-01 : f32
    %65 = vector.broadcast %cst_31 : f32 to vector<8x32xf32>
    %66 = arith.mulf %65, %64 : vector<8x32xf32>
    %cst_32 = arith.constant 5.000000e-01 : f32
    %67 = vector.broadcast %cst_32 : f32 to vector<8x32xf32>
    %68 = arith.addf %66, %67 : vector<8x32xf32>
    %69 = vector.extract_strided_slice %60 {offsets = [0, 32], sizes = [8, 32], strides = [1, 1]} : vector<8x128xf32> to vector<8x32xf32>
    %cst_33 = arith.constant 5.000000e-01 : f32
    %70 = vector.broadcast %cst_33 : f32 to vector<8x32xf32>
    %71 = arith.mulf %70, %69 : vector<8x32xf32>
    %72 = math.tanh %71 : vector<8x32xf32>
    %cst_34 = arith.constant 5.000000e-01 : f32
    %73 = vector.broadcast %cst_34 : f32 to vector<8x32xf32>
    %74 = arith.mulf %73, %72 : vector<8x32xf32>
    %cst_35 = arith.constant 5.000000e-01 : f32
    %75 = vector.broadcast %cst_35 : f32 to vector<8x32xf32>
    %76 = arith.addf %74, %75 : vector<8x32xf32>
    %77 = vector.extract_strided_slice %60 {offsets = [0, 64], sizes = [8, 32], strides = [1, 1]} : vector<8x128xf32> to vector<8x32xf32>
    %78 = math.tanh %77 : vector<8x32xf32>
    %79 = vector.extract_strided_slice %60 {offsets = [0, 96], sizes = [8, 32], strides = [1, 1]} : vector<8x128xf32> to vector<8x32xf32>
    %cst_36 = arith.constant 5.000000e-01 : f32
    %80 = vector.broadcast %cst_36 : f32 to vector<8x32xf32>
    %81 = arith.mulf %80, %79 : vector<8x32xf32>
    %82 = math.tanh %81 : vector<8x32xf32>
    %cst_37 = arith.constant 5.000000e-01 : f32
    %83 = vector.broadcast %cst_37 : f32 to vector<8x32xf32>
    %84 = arith.mulf %83, %82 : vector<8x32xf32>
    %cst_38 = arith.constant 5.000000e-01 : f32
    %85 = vector.broadcast %cst_38 : f32 to vector<8x32xf32>
    %86 = arith.addf %84, %85 : vector<8x32xf32>
    %87 = arith.mulf %76, %48 : vector<8x32xf32>
    %88 = arith.mulf %68, %78 : vector<8x32xf32>
    %89 = arith.addf %87, %88 : vector<8x32xf32>
    %90 = math.tanh %89 : vector<8x32xf32>
    %91 = arith.mulf %86, %90 : vector<8x32xf32>
    %92 = arith.truncf %91 : vector<8x32xf32> to vector<8x32xbf16>
    %93 = arith.index_cast %55 : i32 to index
    %c0_39 = arith.constant 0 : index
    %94 = vector.load %arg5[%93, %c0_39] : memref<64x32xbf16, #tpu.memory_space<vmem>>, vector<8x32xbf16>
    tpu.vector_store %arg5[%93, %c0_39], %92 {strides = array<i32>} : memref<64x32xbf16, #tpu.memory_space<vmem>>, vector<8x32xbf16>,
    %c2_i32 = arith.constant 2 : i32
    %c8_i32_40 = arith.constant 8 : i32
    %95 = arith.muli %c2_i32, %c8_i32_40 : i32
    %96 = tpu.assume_multiple %95, 8 : i32
    %97 = arith.index_cast %96 : i32 to index
    %c0_41 = arith.constant 0 : index
    %98 = vector.load %arg8[%97, %c0_41] : memref<64x128xf32, #tpu.memory_space<vmem>>, vector<8x128xf32>
    %99 = arith.truncf %91 : vector<8x32xf32> to vector<8x32xbf16>
    %cst_42 = arith.constant dense<0.000000e+00> : vector<8x128xf32>
    %100 = tpu.matmul %99, %10, %cst_42 {dimension_numbers = #tpu.dot_dimension_numbers<[1], [0], [0], [1], [0, 0, 1, 1], [], []>} : vector<8x32xbf16>, vector<32x128xbf16>, vector<8x128xf32> -> vector<8x128xf32>
    %101 = arith.addf %98, %100 : vector<8x128xf32>
    %102 = vector.extract_strided_slice %101 {offsets = [0, 0], sizes = [8, 32], strides = [1, 1]} : vector<8x128xf32> to vector<8x32xf32>
    %cst_43 = arith.constant 5.000000e-01 : f32
    %103 = vector.broadcast %cst_43 : f32 to vector<8x32xf32>
    %104 = arith.mulf %103, %102 : vector<8x32xf32>
    %105 = math.tanh %104 : vector<8x32xf32>
    %cst_44 = arith.constant 5.000000e-01 : f32
    %106 = vector.broadcast %cst_44 : f32 to vector<8x32xf32>
    %107 = arith.mulf %106, %105 : vector<8x32xf32>
    %cst_45 = arith.constant 5.000000e-01 : f32
    %108 = vector.broadcast %cst_45 : f32 to vector<8x32xf32>
    %109 = arith.addf %107, %108 : vector<8x32xf32>
    %110 = vector.extract_strided_slice %101 {offsets = [0, 32], sizes = [8, 32], strides = [1, 1]} : vector<8x128xf32> to vector<8x32xf32>
    %cst_46 = arith.constant 5.000000e-01 : f32
    %111 = vector.broadcast %cst_46 : f32 to vector<8x32xf32>
    %112 = arith.mulf %111, %110 : vector<8x32xf32>
    %113 = math.tanh %112 : vector<8x32xf32>
    %cst_47 = arith.constant 5.000000e-01 : f32
    %114 = vector.broadcast %cst_47 : f32 to vector<8x32xf32>
    %115 = arith.mulf %114, %113 : vector<8x32xf32>
    %cst_48 = arith.constant 5.000000e-01 : f32
    %116 = vector.broadcast %cst_48 : f32 to vector<8x32xf32>
    %117 = arith.addf %115, %116 : vector<8x32xf32>
    %118 = vector.extract_strided_slice %101 {offsets = [0, 64], sizes = [8, 32], strides = [1, 1]} : vector<8x128xf32> to vector<8x32xf32>
    %119 = math.tanh %118 : vector<8x32xf32>
    %120 = vector.extract_strided_slice %101 {offsets = [0, 96], sizes = [8, 32], strides = [1, 1]} : vector<8x128xf32> to vector<8x32xf32>
    %cst_49 = arith.constant 5.000000e-01 : f32
    %121 = vector.broadcast %cst_49 : f32 to vector<8x32xf32>
    %122 = arith.mulf %121, %120 : vector<8x32xf32>
    %123 = math.tanh %122 : vector<8x32xf32>
    %cst_50 = arith.constant 5.000000e-01 : f32
    %124 = vector.broadcast %cst_50 : f32 to vector<8x32xf32>
    %125 = arith.mulf %124, %123 : vector<8x32xf32>
    %cst_51 = arith.constant 5.000000e-01 : f32
    %126 = vector.broadcast %cst_51 : f32 to vector<8x32xf32>
    %127 = arith.addf %125, %126 : vector<8x32xf32>
    %128 = arith.mulf %117, %89 : vector<8x32xf32>
    %129 = arith.mulf %109, %119 : vector<8x32xf32>
    %130 = arith.addf %128, %129 : vector<8x32xf32>
    %131 = math.tanh %130 : vector<8x32xf32>
    %132 = arith.mulf %127, %131 : vector<8x32xf32>
    %133 = arith.truncf %132 : vector<8x32xf32> to vector<8x32xbf16>
    %134 = arith.index_cast %96 : i32 to index
    %c0_52 = arith.constant 0 : index
    %135 = vector.load %arg5[%134, %c0_52] : memref<64x32xbf16, #tpu.memory_space<vmem>>, vector<8x32xbf16>
    tpu.vector_store %arg5[%134, %c0_52], %133 {strides = array<i32>} : memref<64x32xbf16, #tpu.memory_space<vmem>>, vector<8x32xbf16>,
    %c3_i32 = arith.constant 3 : i32
    %c8_i32_53 = arith.constant 8 : i32
    %136 = arith.muli %c3_i32, %c8_i32_53 : i32
    %137 = tpu.assume_multiple %136, 8 : i32
    %138 = arith.index_cast %137 : i32 to index
    %c0_54 = arith.constant 0 : index
    %139 = vector.load %arg8[%138, %c0_54] : memref<64x128xf32, #tpu.memory_space<vmem>>, vector<8x128xf32>
    %140 = arith.truncf %132 : vector<8x32xf32> to vector<8x32xbf16>
    %cst_55 = arith.constant dense<0.000000e+00> : vector<8x128xf32>
    %141 = tpu.matmul %140, %10, %cst_55 {dimension_numbers = #tpu.dot_dimension_numbers<[1], [0], [0], [1], [0, 0, 1, 1], [], []>} : vector<8x32xbf16>, vector<32x128xbf16>, vector<8x128xf32> -> vector<8x128xf32>
    %142 = arith.addf %139, %141 : vector<8x128xf32>
    %143 = vector.extract_strided_slice %142 {offsets = [0, 0], sizes = [8, 32], strides = [1, 1]} : vector<8x128xf32> to vector<8x32xf32>
    %cst_56 = arith.constant 5.000000e-01 : f32
    %144 = vector.broadcast %cst_56 : f32 to vector<8x32xf32>
    %145 = arith.mulf %144, %143 : vector<8x32xf32>
    %146 = math.tanh %145 : vector<8x32xf32>
    %cst_57 = arith.constant 5.000000e-01 : f32
    %147 = vector.broadcast %cst_57 : f32 to vector<8x32xf32>
    %148 = arith.mulf %147, %146 : vector<8x32xf32>
    %cst_58 = arith.constant 5.000000e-01 : f32
    %149 = vector.broadcast %cst_58 : f32 to vector<8x32xf32>
    %150 = arith.addf %148, %149 : vector<8x32xf32>
    %151 = vector.extract_strided_slice %142 {offsets = [0, 32], sizes = [8, 32], strides = [1, 1]} : vector<8x128xf32> to vector<8x32xf32>
    %cst_59 = arith.constant 5.000000e-01 : f32
    %152 = vector.broadcast %cst_59 : f32 to vector<8x32xf32>
    %153 = arith.mulf %152, %151 : vector<8x32xf32>
    %154 = math.tanh %153 : vector<8x32xf32>
    %cst_60 = arith.constant 5.000000e-01 : f32
    %155 = vector.broadcast %cst_60 : f32 to vector<8x32xf32>
    %156 = arith.mulf %155, %154 : vector<8x32xf32>
    %cst_61 = arith.constant 5.000000e-01 : f32
    %157 = vector.broadcast %cst_61 : f32 to vector<8x32xf32>
    %158 = arith.addf %156, %157 : vector<8x32xf32>
    %159 = vector.extract_strided_slice %142 {offsets = [0, 64], sizes = [8, 32], strides = [1, 1]} : vector<8x128xf32> to vector<8x32xf32>
    %160 = math.tanh %159 : vector<8x32xf32>
    %161 = vector.extract_strided_slice %142 {offsets = [0, 96], sizes = [8, 32], strides = [1, 1]} : vector<8x128xf32> to vector<8x32xf32>
    %cst_62 = arith.constant 5.000000e-01 : f32
    %162 = vector.broadcast %cst_62 : f32 to vector<8x32xf32>
    %163 = arith.mulf %162, %161 : vector<8x32xf32>
    %164 = math.tanh %163 : vector<8x32xf32>
    %cst_63 = arith.constant 5.000000e-01 : f32
    %165 = vector.broadcast %cst_63 : f32 to vector<8x32xf32>
    %166 = arith.mulf %165, %164 : vector<8x32xf32>
    %cst_64 = arith.constant 5.000000e-01 : f32
    %167 = vector.broadcast %cst_64 : f32 to vector<8x32xf32>
    %168 = arith.addf %166, %167 : vector<8x32xf32>
    %169 = arith.mulf %158, %130 : vector<8x32xf32>
    %170 = arith.mulf %150, %160 : vector<8x32xf32>
    %171 = arith.addf %169, %170 : vector<8x32xf32>
    %172 = math.tanh %171 : vector<8x32xf32>
    %173 = arith.mulf %168, %172 : vector<8x32xf32>
    %174 = arith.truncf %173 : vector<8x32xf32> to vector<8x32xbf16>
    %175 = arith.index_cast %137 : i32 to index
    %c0_65 = arith.constant 0 : index
    %176 = vector.load %arg5[%175, %c0_65] : memref<64x32xbf16, #tpu.memory_space<vmem>>, vector<8x32xbf16>
    tpu.vector_store %arg5[%175, %c0_65], %174 {strides = array<i32>} : memref<64x32xbf16, #tpu.memory_space<vmem>>, vector<8x32xbf16>,
    %c4_i32 = arith.constant 4 : i32
    %c8_i32_66 = arith.constant 8 : i32
    %177 = arith.muli %c4_i32, %c8_i32_66 : i32
    %178 = tpu.assume_multiple %177, 8 : i32
    %179 = arith.index_cast %178 : i32 to index
    %c0_67 = arith.constant 0 : index
    %180 = vector.load %arg8[%179, %c0_67] : memref<64x128xf32, #tpu.memory_space<vmem>>, vector<8x128xf32>
    %181 = arith.truncf %173 : vector<8x32xf32> to vector<8x32xbf16>
    %cst_68 = arith.constant dense<0.000000e+00> : vector<8x128xf32>
    %182 = tpu.matmul %181, %10, %cst_68 {dimension_numbers = #tpu.dot_dimension_numbers<[1], [0], [0], [1], [0, 0, 1, 1], [], []>} : vector<8x32xbf16>, vector<32x128xbf16>, vector<8x128xf32> -> vector<8x128xf32>
    %183 = arith.addf %180, %182 : vector<8x128xf32>
    %184 = vector.extract_strided_slice %183 {offsets = [0, 0], sizes = [8, 32], strides = [1, 1]} : vector<8x128xf32> to vector<8x32xf32>
    %cst_69 = arith.constant 5.000000e-01 : f32
    %185 = vector.broadcast %cst_69 : f32 to vector<8x32xf32>
    %186 = arith.mulf %185, %184 : vector<8x32xf32>
    %187 = math.tanh %186 : vector<8x32xf32>
    %cst_70 = arith.constant 5.000000e-01 : f32
    %188 = vector.broadcast %cst_70 : f32 to vector<8x32xf32>
    %189 = arith.mulf %188, %187 : vector<8x32xf32>
    %cst_71 = arith.constant 5.000000e-01 : f32
    %190 = vector.broadcast %cst_71 : f32 to vector<8x32xf32>
    %191 = arith.addf %189, %190 : vector<8x32xf32>
    %192 = vector.extract_strided_slice %183 {offsets = [0, 32], sizes = [8, 32], strides = [1, 1]} : vector<8x128xf32> to vector<8x32xf32>
    %cst_72 = arith.constant 5.000000e-01 : f32
    %193 = vector.broadcast %cst_72 : f32 to vector<8x32xf32>
    %194 = arith.mulf %193, %192 : vector<8x32xf32>
    %195 = math.tanh %194 : vector<8x32xf32>
    %cst_73 = arith.constant 5.000000e-01 : f32
    %196 = vector.broadcast %cst_73 : f32 to vector<8x32xf32>
    %197 = arith.mulf %196, %195 : vector<8x32xf32>
    %cst_74 = arith.constant 5.000000e-01 : f32
    %198 = vector.broadcast %cst_74 : f32 to vector<8x32xf32>
    %199 = arith.addf %197, %198 : vector<8x32xf32>
    %200 = vector.extract_strided_slice %183 {offsets = [0, 64], sizes = [8, 32], strides = [1, 1]} : vector<8x128xf32> to vector<8x32xf32>
    %201 = math.tanh %200 : vector<8x32xf32>
    %202 = vector.extract_strided_slice %183 {offsets = [0, 96], sizes = [8, 32], strides = [1, 1]} : vector<8x128xf32> to vector<8x32xf32>
    %cst_75 = arith.constant 5.000000e-01 : f32
    %203 = vector.broadcast %cst_75 : f32 to vector<8x32xf32>
    %204 = arith.mulf %203, %202 : vector<8x32xf32>
    %205 = math.tanh %204 : vector<8x32xf32>
    %cst_76 = arith.constant 5.000000e-01 : f32
    %206 = vector.broadcast %cst_76 : f32 to vector<8x32xf32>
    %207 = arith.mulf %206, %205 : vector<8x32xf32>
    %cst_77 = arith.constant 5.000000e-01 : f32
    %208 = vector.broadcast %cst_77 : f32 to vector<8x32xf32>
    %209 = arith.addf %207, %208 : vector<8x32xf32>
    %210 = arith.mulf %199, %171 : vector<8x32xf32>
    %211 = arith.mulf %191, %201 : vector<8x32xf32>
    %212 = arith.addf %210, %211 : vector<8x32xf32>
    %213 = math.tanh %212 : vector<8x32xf32>
    %214 = arith.mulf %209, %213 : vector<8x32xf32>
    %215 = arith.truncf %214 : vector<8x32xf32> to vector<8x32xbf16>
    %216 = arith.index_cast %178 : i32 to index
    %c0_78 = arith.constant 0 : index
    %217 = vector.load %arg5[%216, %c0_78] : memref<64x32xbf16, #tpu.memory_space<vmem>>, vector<8x32xbf16>
    tpu.vector_store %arg5[%216, %c0_78], %215 {strides = array<i32>} : memref<64x32xbf16, #tpu.memory_space<vmem>>, vector<8x32xbf16>,
    %c5_i32 = arith.constant 5 : i32
    %c8_i32_79 = arith.constant 8 : i32
    %218 = arith.muli %c5_i32, %c8_i32_79 : i32
    %219 = tpu.assume_multiple %218, 8 : i32
    %220 = arith.index_cast %219 : i32 to index
    %c0_80 = arith.constant 0 : index
    %221 = vector.load %arg8[%220, %c0_80] : memref<64x128xf32, #tpu.memory_space<vmem>>, vector<8x128xf32>
    %222 = arith.truncf %214 : vector<8x32xf32> to vector<8x32xbf16>
    %cst_81 = arith.constant dense<0.000000e+00> : vector<8x128xf32>
    %223 = tpu.matmul %222, %10, %cst_81 {dimension_numbers = #tpu.dot_dimension_numbers<[1], [0], [0], [1], [0, 0, 1, 1], [], []>} : vector<8x32xbf16>, vector<32x128xbf16>, vector<8x128xf32> -> vector<8x128xf32>
    %224 = arith.addf %221, %223 : vector<8x128xf32>
    %225 = vector.extract_strided_slice %224 {offsets = [0, 0], sizes = [8, 32], strides = [1, 1]} : vector<8x128xf32> to vector<8x32xf32>
    %cst_82 = arith.constant 5.000000e-01 : f32
    %226 = vector.broadcast %cst_82 : f32 to vector<8x32xf32>
    %227 = arith.mulf %226, %225 : vector<8x32xf32>
    %228 = math.tanh %227 : vector<8x32xf32>
    %cst_83 = arith.constant 5.000000e-01 : f32
    %229 = vector.broadcast %cst_83 : f32 to vector<8x32xf32>
    %230 = arith.mulf %229, %228 : vector<8x32xf32>
    %cst_84 = arith.constant 5.000000e-01 : f32
    %231 = vector.broadcast %cst_84 : f32 to vector<8x32xf32>
    %232 = arith.addf %230, %231 : vector<8x32xf32>
    %233 = vector.extract_strided_slice %224 {offsets = [0, 32], sizes = [8, 32], strides = [1, 1]} : vector<8x128xf32> to vector<8x32xf32>
    %cst_85 = arith.constant 5.000000e-01 : f32
    %234 = vector.broadcast %cst_85 : f32 to vector<8x32xf32>
    %235 = arith.mulf %234, %233 : vector<8x32xf32>
    %236 = math.tanh %235 : vector<8x32xf32>
    %cst_86 = arith.constant 5.000000e-01 : f32
    %237 = vector.broadcast %cst_86 : f32 to vector<8x32xf32>
    %238 = arith.mulf %237, %236 : vector<8x32xf32>
    %cst_87 = arith.constant 5.000000e-01 : f32
    %239 = vector.broadcast %cst_87 : f32 to vector<8x32xf32>
    %240 = arith.addf %238, %239 : vector<8x32xf32>
    %241 = vector.extract_strided_slice %224 {offsets = [0, 64], sizes = [8, 32], strides = [1, 1]} : vector<8x128xf32> to vector<8x32xf32>
    %242 = math.tanh %241 : vector<8x32xf32>
    %243 = vector.extract_strided_slice %224 {offsets = [0, 96], sizes = [8, 32], strides = [1, 1]} : vector<8x128xf32> to vector<8x32xf32>
    %cst_88 = arith.constant 5.000000e-01 : f32
    %244 = vector.broadcast %cst_88 : f32 to vector<8x32xf32>
    %245 = arith.mulf %244, %243 : vector<8x32xf32>
    %246 = math.tanh %245 : vector<8x32xf32>
    %cst_89 = arith.constant 5.000000e-01 : f32
    %247 = vector.broadcast %cst_89 : f32 to vector<8x32xf32>
    %248 = arith.mulf %247, %246 : vector<8x32xf32>
    %cst_90 = arith.constant 5.000000e-01 : f32
    %249 = vector.broadcast %cst_90 : f32 to vector<8x32xf32>
    %250 = arith.addf %248, %249 : vector<8x32xf32>
    %251 = arith.mulf %240, %212 : vector<8x32xf32>
    %252 = arith.mulf %232, %242 : vector<8x32xf32>
    %253 = arith.addf %251, %252 : vector<8x32xf32>
    %254 = math.tanh %253 : vector<8x32xf32>
    %255 = arith.mulf %250, %254 : vector<8x32xf32>
    %256 = arith.truncf %255 : vector<8x32xf32> to vector<8x32xbf16>
    %257 = arith.index_cast %219 : i32 to index
    %c0_91 = arith.constant 0 : index
    %258 = vector.load %arg5[%257, %c0_91] : memref<64x32xbf16, #tpu.memory_space<vmem>>, vector<8x32xbf16>
    tpu.vector_store %arg5[%257, %c0_91], %256 {strides = array<i32>} : memref<64x32xbf16, #tpu.memory_space<vmem>>, vector<8x32xbf16>,
    %c6_i32 = arith.constant 6 : i32
    %c8_i32_92 = arith.constant 8 : i32
    %259 = arith.muli %c6_i32, %c8_i32_92 : i32
    %260 = tpu.assume_multiple %259, 8 : i32
    %261 = arith.index_cast %260 : i32 to index
    %c0_93 = arith.constant 0 : index
    %262 = vector.load %arg8[%261, %c0_93] : memref<64x128xf32, #tpu.memory_space<vmem>>, vector<8x128xf32>
    %263 = arith.truncf %255 : vector<8x32xf32> to vector<8x32xbf16>
    %cst_94 = arith.constant dense<0.000000e+00> : vector<8x128xf32>
    %264 = tpu.matmul %263, %10, %cst_94 {dimension_numbers = #tpu.dot_dimension_numbers<[1], [0], [0], [1], [0, 0, 1, 1], [], []>} : vector<8x32xbf16>, vector<32x128xbf16>, vector<8x128xf32> -> vector<8x128xf32>
    %265 = arith.addf %262, %264 : vector<8x128xf32>
    %266 = vector.extract_strided_slice %265 {offsets = [0, 0], sizes = [8, 32], strides = [1, 1]} : vector<8x128xf32> to vector<8x32xf32>
    %cst_95 = arith.constant 5.000000e-01 : f32
    %267 = vector.broadcast %cst_95 : f32 to vector<8x32xf32>
    %268 = arith.mulf %267, %266 : vector<8x32xf32>
    %269 = math.tanh %268 : vector<8x32xf32>
    %cst_96 = arith.constant 5.000000e-01 : f32
    %270 = vector.broadcast %cst_96 : f32 to vector<8x32xf32>
    %271 = arith.mulf %270, %269 : vector<8x32xf32>
    %cst_97 = arith.constant 5.000000e-01 : f32
    %272 = vector.broadcast %cst_97 : f32 to vector<8x32xf32>
    %273 = arith.addf %271, %272 : vector<8x32xf32>
    %274 = vector.extract_strided_slice %265 {offsets = [0, 32], sizes = [8, 32], strides = [1, 1]} : vector<8x128xf32> to vector<8x32xf32>
    %cst_98 = arith.constant 5.000000e-01 : f32
    %275 = vector.broadcast %cst_98 : f32 to vector<8x32xf32>
    %276 = arith.mulf %275, %274 : vector<8x32xf32>
    %277 = math.tanh %276 : vector<8x32xf32>
    %cst_99 = arith.constant 5.000000e-01 : f32
    %278 = vector.broadcast %cst_99 : f32 to vector<8x32xf32>
    %279 = arith.mulf %278, %277 : vector<8x32xf32>
    %cst_100 = arith.constant 5.000000e-01 : f32
    %280 = vector.broadcast %cst_100 : f32 to vector<8x32xf32>
    %281 = arith.addf %279, %280 : vector<8x32xf32>
    %282 = vector.extract_strided_slice %265 {offsets = [0, 64], sizes = [8, 32], strides = [1, 1]} : vector<8x128xf32> to vector<8x32xf32>
    %283 = math.tanh %282 : vector<8x32xf32>
    %284 = vector.extract_strided_slice %265 {offsets = [0, 96], sizes = [8, 32], strides = [1, 1]} : vector<8x128xf32> to vector<8x32xf32>
    %cst_101 = arith.constant 5.000000e-01 : f32
    %285 = vector.broadcast %cst_101 : f32 to vector<8x32xf32>
    %286 = arith.mulf %285, %284 : vector<8x32xf32>
    %287 = math.tanh %286 : vector<8x32xf32>
    %cst_102 = arith.constant 5.000000e-01 : f32
    %288 = vector.broadcast %cst_102 : f32 to vector<8x32xf32>
    %289 = arith.mulf %288, %287 : vector<8x32xf32>
    %cst_103 = arith.constant 5.000000e-01 : f32
    %290 = vector.broadcast %cst_103 : f32 to vector<8x32xf32>
    %291 = arith.addf %289, %290 : vector<8x32xf32>
    %292 = arith.mulf %281, %253 : vector<8x32xf32>
    %293 = arith.mulf %273, %283 : vector<8x32xf32>
    %294 = arith.addf %292, %293 : vector<8x32xf32>
    %295 = math.tanh %294 : vector<8x32xf32>
    %296 = arith.mulf %291, %295 : vector<8x32xf32>
    %297 = arith.truncf %296 : vector<8x32xf32> to vector<8x32xbf16>
    %298 = arith.index_cast %260 : i32 to index
    %c0_104 = arith.constant 0 : index
    %299 = vector.load %arg5[%298, %c0_104] : memref<64x32xbf16, #tpu.memory_space<vmem>>, vector<8x32xbf16>
    tpu.vector_store %arg5[%298, %c0_104], %297 {strides = array<i32>} : memref<64x32xbf16, #tpu.memory_space<vmem>>, vector<8x32xbf16>,
    %c7_i32 = arith.constant 7 : i32
    %c8_i32_105 = arith.constant 8 : i32
    %300 = arith.muli %c7_i32, %c8_i32_105 : i32
    %301 = tpu.assume_multiple %300, 8 : i32
    %302 = arith.index_cast %301 : i32 to index
    %c0_106 = arith.constant 0 : index
    %303 = vector.load %arg8[%302, %c0_106] : memref<64x128xf32, #tpu.memory_space<vmem>>, vector<8x128xf32>
    %304 = arith.truncf %296 : vector<8x32xf32> to vector<8x32xbf16>
    %cst_107 = arith.constant dense<0.000000e+00> : vector<8x128xf32>
    %305 = tpu.matmul %304, %10, %cst_107 {dimension_numbers = #tpu.dot_dimension_numbers<[1], [0], [0], [1], [0, 0, 1, 1], [], []>} : vector<8x32xbf16>, vector<32x128xbf16>, vector<8x128xf32> -> vector<8x128xf32>
    %306 = arith.addf %303, %305 : vector<8x128xf32>
    %307 = vector.extract_strided_slice %306 {offsets = [0, 0], sizes = [8, 32], strides = [1, 1]} : vector<8x128xf32> to vector<8x32xf32>
    %cst_108 = arith.constant 5.000000e-01 : f32
    %308 = vector.broadcast %cst_108 : f32 to vector<8x32xf32>
    %309 = arith.mulf %308, %307 : vector<8x32xf32>
    %310 = math.tanh %309 : vector<8x32xf32>
    %cst_109 = arith.constant 5.000000e-01 : f32
    %311 = vector.broadcast %cst_109 : f32 to vector<8x32xf32>
    %312 = arith.mulf %311, %310 : vector<8x32xf32>
    %cst_110 = arith.constant 5.000000e-01 : f32
    %313 = vector.broadcast %cst_110 : f32 to vector<8x32xf32>
    %314 = arith.addf %312, %313 : vector<8x32xf32>
    %315 = vector.extract_strided_slice %306 {offsets = [0, 32], sizes = [8, 32], strides = [1, 1]} : vector<8x128xf32> to vector<8x32xf32>
    %cst_111 = arith.constant 5.000000e-01 : f32
    %316 = vector.broadcast %cst_111 : f32 to vector<8x32xf32>
    %317 = arith.mulf %316, %315 : vector<8x32xf32>
    %318 = math.tanh %317 : vector<8x32xf32>
    %cst_112 = arith.constant 5.000000e-01 : f32
    %319 = vector.broadcast %cst_112 : f32 to vector<8x32xf32>
    %320 = arith.mulf %319, %318 : vector<8x32xf32>
    %cst_113 = arith.constant 5.000000e-01 : f32
    %321 = vector.broadcast %cst_113 : f32 to vector<8x32xf32>
    %322 = arith.addf %320, %321 : vector<8x32xf32>
    %323 = vector.extract_strided_slice %306 {offsets = [0, 64], sizes = [8, 32], strides = [1, 1]} : vector<8x128xf32> to vector<8x32xf32>
    %324 = math.tanh %323 : vector<8x32xf32>
    %325 = vector.extract_strided_slice %306 {offsets = [0, 96], sizes = [8, 32], strides = [1, 1]} : vector<8x128xf32> to vector<8x32xf32>
    %cst_114 = arith.constant 5.000000e-01 : f32
    %326 = vector.broadcast %cst_114 : f32 to vector<8x32xf32>
    %327 = arith.mulf %326, %325 : vector<8x32xf32>
    %328 = math.tanh %327 : vector<8x32xf32>
    %cst_115 = arith.constant 5.000000e-01 : f32
    %329 = vector.broadcast %cst_115 : f32 to vector<8x32xf32>
    %330 = arith.mulf %329, %328 : vector<8x32xf32>
    %cst_116 = arith.constant 5.000000e-01 : f32
    %331 = vector.broadcast %cst_116 : f32 to vector<8x32xf32>
    %332 = arith.addf %330, %331 : vector<8x32xf32>
    %333 = arith.mulf %322, %294 : vector<8x32xf32>
    %334 = arith.mulf %314, %324 : vector<8x32xf32>
    %335 = arith.addf %333, %334 : vector<8x32xf32>
    %336 = math.tanh %335 : vector<8x32xf32>
    %337 = arith.mulf %332, %336 : vector<8x32xf32>
    %338 = arith.truncf %337 : vector<8x32xf32> to vector<8x32xbf16>
    %339 = arith.index_cast %301 : i32 to index
    %c0_117 = arith.constant 0 : index
    %340 = vector.load %arg5[%339, %c0_117] : memref<64x32xbf16, #tpu.memory_space<vmem>>, vector<8x32xbf16>
    tpu.vector_store %arg5[%339, %c0_117], %338 {strides = array<i32>} : memref<64x32xbf16, #tpu.memory_space<vmem>>, vector<8x32xbf16>,
    %c8_i32_118 = arith.constant 8 : i32
    %c0_119 = arith.constant 0 : index
    %c0_120 = arith.constant 0 : index
    %341 = vector.load %arg6[%c0_119, %c0_120] : memref<8x32xf32, #tpu.memory_space<vmem>>, vector<8x32xf32>
    tpu.vector_store %arg6[%c0_119, %c0_120], %337 {strides = array<i32>} : memref<8x32xf32, #tpu.memory_space<vmem>>, vector<8x32xf32>,
    %c0_121 = arith.constant 0 : index
    %c0_122 = arith.constant 0 : index
    %342 = vector.load %arg7[%c0_121, %c0_122] : memref<8x32xf32, #tpu.memory_space<vmem>>, vector<8x32xf32>
    tpu.vector_store %arg7[%c0_121, %c0_122], %335 {strides = array<i32>} : memref<8x32xf32, #tpu.memory_space<vmem>>, vector<8x32xf32>,
    return
  }
  func.func @transform_0(%arg0: i32) -> (i32, i32) {
    %c0_i32 = arith.constant 0 : i32
    %c0_i32_0 = arith.constant 0 : i32
    return %arg0, %c0_i32 : i32, i32
  }
  func.func @transform_1(%arg0: i32) -> (i32, i32) {
    %c0_i32 = arith.constant 0 : i32
    %c0_i32_0 = arith.constant 0 : i32
    %c0_i32_1 = arith.constant 0 : i32
    return %c0_i32, %c0_i32_0 : i32, i32
  }
  func.func @transform_2(%arg0: i32) -> (i32, i32) {
    %c0_i32 = arith.constant 0 : i32
    %c0_i32_0 = arith.constant 0 : i32
    %c0_i32_1 = arith.constant 0 : i32
    return %c0_i32, %c0_i32_0 : i32, i32
  }
  func.func @transform_3(%arg0: i32) -> (i32, i32) {
    %c0_i32 = arith.constant 0 : i32
    %c0_i32_0 = arith.constant 0 : i32
    %c0_i32_1 = arith.constant 0 : i32
    return %c0_i32, %c0_i32_0 : i32, i32
  }
  func.func @transform_4(%arg0: i32) -> (i32, i32) {
    %c0_i32 = arith.constant 0 : i32
    %c0_i32_0 = arith.constant 0 : i32
    return %arg0, %c0_i32 : i32, i32
  }
}

module attributes {stable_mosaic.version = 11 : i64} {
  func.func @_lstm_layer_kernel(%arg0: i32, %arg1: memref<64x32xbf16, #tpu.memory_space<vmem>>, %arg2: memref<32x128xbf16, #tpu.memory_space<vmem>>, %arg3: memref<32x128xbf16, #tpu.memory_space<vmem>>, %arg4: memref<1x128xf32, #tpu.memory_space<vmem>>, %arg5: memref<32x128xbf16, #tpu.memory_space<vmem>>, %arg6: memref<1x128xf32, #tpu.memory_space<vmem>>, %arg7: memref<64x128xf32, #tpu.memory_space<vmem>>, %arg8: memref<8x32xf32, #tpu.memory_space<vmem>>, %arg9: memref<8x32xf32, #tpu.memory_space<vmem>>, %arg10: memref<64x128xf32, #tpu.memory_space<vmem>>, %arg11: memref<64x32xbf16, #tpu.memory_space<vmem>>) attributes {dimension_semantics = [#tpu.dimension_semantics<arbitrary>], iteration_bounds = array<i64: 1>, scalar_prefetch = 0 : i64, scratch_operands = 4 : i64, tpu.core_type = #tpu.core_type<tc>, window_params = [{transform_indices = @transform_0, window_bounds = array<i64: 64, 32>}, {pipeline_mode = #tpu.pipeline_mode<synchronous>, transform_indices = @transform_1, window_bounds = array<i64: 32, 128>}, {pipeline_mode = #tpu.pipeline_mode<synchronous>, transform_indices = @transform_2, window_bounds = array<i64: 32, 128>}, {pipeline_mode = #tpu.pipeline_mode<synchronous>, transform_indices = @transform_3, window_bounds = array<i64: 1, 128>}, {pipeline_mode = #tpu.pipeline_mode<synchronous>, transform_indices = @transform_4, window_bounds = array<i64: 32, 128>}, {pipeline_mode = #tpu.pipeline_mode<synchronous>, transform_indices = @transform_5, window_bounds = array<i64: 1, 128>}, {transform_indices = @transform_6, window_bounds = array<i64: 64, 128>}]} {
    %c0_i32 = arith.constant 0 : i32
    %0 = arith.cmpi eq, %arg0, %c0_i32 : i32
    %1 = arith.extui %0 : i1 to i32
    %c0_i32_0 = arith.constant 0 : i32
    %2 = arith.cmpi ne, %1, %c0_i32_0 : i32
    scf.if %2 {
      %cst_132 = arith.constant 0.000000e+00 : f32
      %350 = vector.broadcast %cst_132 : f32 to vector<8x32xf32>
      %c0_133 = arith.constant 0 : index
      %c0_134 = arith.constant 0 : index
      %351 = vector.load %arg8[%c0_133, %c0_134] : memref<8x32xf32, #tpu.memory_space<vmem>>, vector<8x32xf32>
      tpu.vector_store %arg8[%c0_133, %c0_134], %350 {strides = array<i32>} : memref<8x32xf32, #tpu.memory_space<vmem>>, vector<8x32xf32>,
      %cst_135 = arith.constant 0.000000e+00 : f32
      %352 = vector.broadcast %cst_135 : f32 to vector<8x32xf32>
      %c0_136 = arith.constant 0 : index
      %c0_137 = arith.constant 0 : index
      %353 = vector.load %arg9[%c0_136, %c0_137] : memref<8x32xf32, #tpu.memory_space<vmem>>, vector<8x32xf32>
      tpu.vector_store %arg9[%c0_136, %c0_137], %352 {strides = array<i32>} : memref<8x32xf32, #tpu.memory_space<vmem>>, vector<8x32xf32>,
    } else {
    }
    %c0 = arith.constant 0 : index
    %c0_1 = arith.constant 0 : index
    %3 = vector.load %arg1[%c0, %c0_1] : memref<64x32xbf16, #tpu.memory_space<vmem>>, vector<64x32xbf16>
    %c0_2 = arith.constant 0 : index
    %c0_3 = arith.constant 0 : index
    %4 = vector.load %arg2[%c0_2, %c0_3] : memref<32x128xbf16, #tpu.memory_space<vmem>>, vector<32x128xbf16>
    %cst = arith.constant dense<0.000000e+00> : vector<64x128xf32>
    %5 = tpu.matmul %3, %4, %cst {dimension_numbers = #tpu.dot_dimension_numbers<[1], [0], [0], [1], [0, 0, 1, 1], [], []>} : vector<64x32xbf16>, vector<32x128xbf16>, vector<64x128xf32> -> vector<64x128xf32>
    %c0_4 = arith.constant 0 : index
    %c0_5 = arith.constant 0 : index
    %6 = vector.load %arg4[%c0_4, %c0_5] : memref<1x128xf32, #tpu.memory_space<vmem>>, vector<1x128xf32>
    %7 = vector.broadcast %6 : vector<1x128xf32> to vector<64x128xf32>
    %8 = arith.addf %5, %7 : vector<64x128xf32>
    %c0_6 = arith.constant 0 : index
    %c0_7 = arith.constant 0 : index
    %9 = vector.load %arg10[%c0_6, %c0_7] : memref<64x128xf32, #tpu.memory_space<vmem>>, vector<64x128xf32>
    tpu.vector_store %arg10[%c0_6, %c0_7], %8 {strides = array<i32>} : memref<64x128xf32, #tpu.memory_space<vmem>>, vector<64x128xf32>,
    %c0_8 = arith.constant 0 : index
    %c0_9 = arith.constant 0 : index
    %10 = vector.load %arg3[%c0_8, %c0_9] : memref<32x128xbf16, #tpu.memory_space<vmem>>, vector<32x128xbf16>
    %c0_10 = arith.constant 0 : index
    %c0_11 = arith.constant 0 : index
    %11 = vector.load %arg8[%c0_10, %c0_11] : memref<8x32xf32, #tpu.memory_space<vmem>>, vector<8x32xf32>
    %c0_12 = arith.constant 0 : index
    %c0_13 = arith.constant 0 : index
    %12 = vector.load %arg9[%c0_12, %c0_13] : memref<8x32xf32, #tpu.memory_space<vmem>>, vector<8x32xf32>
    %c0_i32_14 = arith.constant 0 : i32
    %c8_i32 = arith.constant 8 : i32
    %13 = arith.muli %c0_i32_14, %c8_i32 : i32
    %14 = tpu.assume_multiple %13, 8 : i32
    %15 = arith.index_cast %14 : i32 to index
    %c0_15 = arith.constant 0 : index
    %16 = vector.load %arg10[%15, %c0_15] : memref<64x128xf32, #tpu.memory_space<vmem>>, vector<8x128xf32>
    %17 = arith.truncf %11 : vector<8x32xf32> to vector<8x32xbf16>
    %cst_16 = arith.constant dense<0.000000e+00> : vector<8x128xf32>
    %18 = tpu.matmul %17, %10, %cst_16 {dimension_numbers = #tpu.dot_dimension_numbers<[1], [0], [0], [1], [0, 0, 1, 1], [], []>} : vector<8x32xbf16>, vector<32x128xbf16>, vector<8x128xf32> -> vector<8x128xf32>
    %19 = arith.addf %16, %18 : vector<8x128xf32>
    %20 = vector.extract_strided_slice %19 {offsets = [0, 0], sizes = [8, 32], strides = [1, 1]} : vector<8x128xf32> to vector<8x32xf32>
    %cst_17 = arith.constant 5.000000e-01 : f32
    %21 = vector.broadcast %cst_17 : f32 to vector<8x32xf32>
    %22 = arith.mulf %21, %20 : vector<8x32xf32>
    %23 = math.tanh %22 : vector<8x32xf32>
    %cst_18 = arith.constant 5.000000e-01 : f32
    %24 = vector.broadcast %cst_18 : f32 to vector<8x32xf32>
    %25 = arith.mulf %24, %23 : vector<8x32xf32>
    %cst_19 = arith.constant 5.000000e-01 : f32
    %26 = vector.broadcast %cst_19 : f32 to vector<8x32xf32>
    %27 = arith.addf %25, %26 : vector<8x32xf32>
    %28 = vector.extract_strided_slice %19 {offsets = [0, 32], sizes = [8, 32], strides = [1, 1]} : vector<8x128xf32> to vector<8x32xf32>
    %cst_20 = arith.constant 5.000000e-01 : f32
    %29 = vector.broadcast %cst_20 : f32 to vector<8x32xf32>
    %30 = arith.mulf %29, %28 : vector<8x32xf32>
    %31 = math.tanh %30 : vector<8x32xf32>
    %cst_21 = arith.constant 5.000000e-01 : f32
    %32 = vector.broadcast %cst_21 : f32 to vector<8x32xf32>
    %33 = arith.mulf %32, %31 : vector<8x32xf32>
    %cst_22 = arith.constant 5.000000e-01 : f32
    %34 = vector.broadcast %cst_22 : f32 to vector<8x32xf32>
    %35 = arith.addf %33, %34 : vector<8x32xf32>
    %36 = vector.extract_strided_slice %19 {offsets = [0, 64], sizes = [8, 32], strides = [1, 1]} : vector<8x128xf32> to vector<8x32xf32>
    %37 = math.tanh %36 : vector<8x32xf32>
    %38 = vector.extract_strided_slice %19 {offsets = [0, 96], sizes = [8, 32], strides = [1, 1]} : vector<8x128xf32> to vector<8x32xf32>
    %cst_23 = arith.constant 5.000000e-01 : f32
    %39 = vector.broadcast %cst_23 : f32 to vector<8x32xf32>
    %40 = arith.mulf %39, %38 : vector<8x32xf32>
    %41 = math.tanh %40 : vector<8x32xf32>
    %cst_24 = arith.constant 5.000000e-01 : f32
    %42 = vector.broadcast %cst_24 : f32 to vector<8x32xf32>
    %43 = arith.mulf %42, %41 : vector<8x32xf32>
    %cst_25 = arith.constant 5.000000e-01 : f32
    %44 = vector.broadcast %cst_25 : f32 to vector<8x32xf32>
    %45 = arith.addf %43, %44 : vector<8x32xf32>
    %46 = arith.mulf %35, %12 : vector<8x32xf32>
    %47 = arith.mulf %27, %37 : vector<8x32xf32>
    %48 = arith.addf %46, %47 : vector<8x32xf32>
    %49 = math.tanh %48 : vector<8x32xf32>
    %50 = arith.mulf %45, %49 : vector<8x32xf32>
    %51 = arith.truncf %50 : vector<8x32xf32> to vector<8x32xbf16>
    %52 = arith.index_cast %14 : i32 to index
    %c0_26 = arith.constant 0 : index
    %53 = vector.load %arg11[%52, %c0_26] : memref<64x32xbf16, #tpu.memory_space<vmem>>, vector<8x32xbf16>
    tpu.vector_store %arg11[%52, %c0_26], %51 {strides = array<i32>} : memref<64x32xbf16, #tpu.memory_space<vmem>>, vector<8x32xbf16>,
    %c1_i32 = arith.constant 1 : i32
    %c8_i32_27 = arith.constant 8 : i32
    %54 = arith.muli %c1_i32, %c8_i32_27 : i32
    %55 = tpu.assume_multiple %54, 8 : i32
    %56 = arith.index_cast %55 : i32 to index
    %c0_28 = arith.constant 0 : index
    %57 = vector.load %arg10[%56, %c0_28] : memref<64x128xf32, #tpu.memory_space<vmem>>, vector<8x128xf32>
    %58 = arith.truncf %50 : vector<8x32xf32> to vector<8x32xbf16>
    %cst_29 = arith.constant dense<0.000000e+00> : vector<8x128xf32>
    %59 = tpu.matmul %58, %10, %cst_29 {dimension_numbers = #tpu.dot_dimension_numbers<[1], [0], [0], [1], [0, 0, 1, 1], [], []>} : vector<8x32xbf16>, vector<32x128xbf16>, vector<8x128xf32> -> vector<8x128xf32>
    %60 = arith.addf %57, %59 : vector<8x128xf32>
    %61 = vector.extract_strided_slice %60 {offsets = [0, 0], sizes = [8, 32], strides = [1, 1]} : vector<8x128xf32> to vector<8x32xf32>
    %cst_30 = arith.constant 5.000000e-01 : f32
    %62 = vector.broadcast %cst_30 : f32 to vector<8x32xf32>
    %63 = arith.mulf %62, %61 : vector<8x32xf32>
    %64 = math.tanh %63 : vector<8x32xf32>
    %cst_31 = arith.constant 5.000000e-01 : f32
    %65 = vector.broadcast %cst_31 : f32 to vector<8x32xf32>
    %66 = arith.mulf %65, %64 : vector<8x32xf32>
    %cst_32 = arith.constant 5.000000e-01 : f32
    %67 = vector.broadcast %cst_32 : f32 to vector<8x32xf32>
    %68 = arith.addf %66, %67 : vector<8x32xf32>
    %69 = vector.extract_strided_slice %60 {offsets = [0, 32], sizes = [8, 32], strides = [1, 1]} : vector<8x128xf32> to vector<8x32xf32>
    %cst_33 = arith.constant 5.000000e-01 : f32
    %70 = vector.broadcast %cst_33 : f32 to vector<8x32xf32>
    %71 = arith.mulf %70, %69 : vector<8x32xf32>
    %72 = math.tanh %71 : vector<8x32xf32>
    %cst_34 = arith.constant 5.000000e-01 : f32
    %73 = vector.broadcast %cst_34 : f32 to vector<8x32xf32>
    %74 = arith.mulf %73, %72 : vector<8x32xf32>
    %cst_35 = arith.constant 5.000000e-01 : f32
    %75 = vector.broadcast %cst_35 : f32 to vector<8x32xf32>
    %76 = arith.addf %74, %75 : vector<8x32xf32>
    %77 = vector.extract_strided_slice %60 {offsets = [0, 64], sizes = [8, 32], strides = [1, 1]} : vector<8x128xf32> to vector<8x32xf32>
    %78 = math.tanh %77 : vector<8x32xf32>
    %79 = vector.extract_strided_slice %60 {offsets = [0, 96], sizes = [8, 32], strides = [1, 1]} : vector<8x128xf32> to vector<8x32xf32>
    %cst_36 = arith.constant 5.000000e-01 : f32
    %80 = vector.broadcast %cst_36 : f32 to vector<8x32xf32>
    %81 = arith.mulf %80, %79 : vector<8x32xf32>
    %82 = math.tanh %81 : vector<8x32xf32>
    %cst_37 = arith.constant 5.000000e-01 : f32
    %83 = vector.broadcast %cst_37 : f32 to vector<8x32xf32>
    %84 = arith.mulf %83, %82 : vector<8x32xf32>
    %cst_38 = arith.constant 5.000000e-01 : f32
    %85 = vector.broadcast %cst_38 : f32 to vector<8x32xf32>
    %86 = arith.addf %84, %85 : vector<8x32xf32>
    %87 = arith.mulf %76, %48 : vector<8x32xf32>
    %88 = arith.mulf %68, %78 : vector<8x32xf32>
    %89 = arith.addf %87, %88 : vector<8x32xf32>
    %90 = math.tanh %89 : vector<8x32xf32>
    %91 = arith.mulf %86, %90 : vector<8x32xf32>
    %92 = arith.truncf %91 : vector<8x32xf32> to vector<8x32xbf16>
    %93 = arith.index_cast %55 : i32 to index
    %c0_39 = arith.constant 0 : index
    %94 = vector.load %arg11[%93, %c0_39] : memref<64x32xbf16, #tpu.memory_space<vmem>>, vector<8x32xbf16>
    tpu.vector_store %arg11[%93, %c0_39], %92 {strides = array<i32>} : memref<64x32xbf16, #tpu.memory_space<vmem>>, vector<8x32xbf16>,
    %c2_i32 = arith.constant 2 : i32
    %c8_i32_40 = arith.constant 8 : i32
    %95 = arith.muli %c2_i32, %c8_i32_40 : i32
    %96 = tpu.assume_multiple %95, 8 : i32
    %97 = arith.index_cast %96 : i32 to index
    %c0_41 = arith.constant 0 : index
    %98 = vector.load %arg10[%97, %c0_41] : memref<64x128xf32, #tpu.memory_space<vmem>>, vector<8x128xf32>
    %99 = arith.truncf %91 : vector<8x32xf32> to vector<8x32xbf16>
    %cst_42 = arith.constant dense<0.000000e+00> : vector<8x128xf32>
    %100 = tpu.matmul %99, %10, %cst_42 {dimension_numbers = #tpu.dot_dimension_numbers<[1], [0], [0], [1], [0, 0, 1, 1], [], []>} : vector<8x32xbf16>, vector<32x128xbf16>, vector<8x128xf32> -> vector<8x128xf32>
    %101 = arith.addf %98, %100 : vector<8x128xf32>
    %102 = vector.extract_strided_slice %101 {offsets = [0, 0], sizes = [8, 32], strides = [1, 1]} : vector<8x128xf32> to vector<8x32xf32>
    %cst_43 = arith.constant 5.000000e-01 : f32
    %103 = vector.broadcast %cst_43 : f32 to vector<8x32xf32>
    %104 = arith.mulf %103, %102 : vector<8x32xf32>
    %105 = math.tanh %104 : vector<8x32xf32>
    %cst_44 = arith.constant 5.000000e-01 : f32
    %106 = vector.broadcast %cst_44 : f32 to vector<8x32xf32>
    %107 = arith.mulf %106, %105 : vector<8x32xf32>
    %cst_45 = arith.constant 5.000000e-01 : f32
    %108 = vector.broadcast %cst_45 : f32 to vector<8x32xf32>
    %109 = arith.addf %107, %108 : vector<8x32xf32>
    %110 = vector.extract_strided_slice %101 {offsets = [0, 32], sizes = [8, 32], strides = [1, 1]} : vector<8x128xf32> to vector<8x32xf32>
    %cst_46 = arith.constant 5.000000e-01 : f32
    %111 = vector.broadcast %cst_46 : f32 to vector<8x32xf32>
    %112 = arith.mulf %111, %110 : vector<8x32xf32>
    %113 = math.tanh %112 : vector<8x32xf32>
    %cst_47 = arith.constant 5.000000e-01 : f32
    %114 = vector.broadcast %cst_47 : f32 to vector<8x32xf32>
    %115 = arith.mulf %114, %113 : vector<8x32xf32>
    %cst_48 = arith.constant 5.000000e-01 : f32
    %116 = vector.broadcast %cst_48 : f32 to vector<8x32xf32>
    %117 = arith.addf %115, %116 : vector<8x32xf32>
    %118 = vector.extract_strided_slice %101 {offsets = [0, 64], sizes = [8, 32], strides = [1, 1]} : vector<8x128xf32> to vector<8x32xf32>
    %119 = math.tanh %118 : vector<8x32xf32>
    %120 = vector.extract_strided_slice %101 {offsets = [0, 96], sizes = [8, 32], strides = [1, 1]} : vector<8x128xf32> to vector<8x32xf32>
    %cst_49 = arith.constant 5.000000e-01 : f32
    %121 = vector.broadcast %cst_49 : f32 to vector<8x32xf32>
    %122 = arith.mulf %121, %120 : vector<8x32xf32>
    %123 = math.tanh %122 : vector<8x32xf32>
    %cst_50 = arith.constant 5.000000e-01 : f32
    %124 = vector.broadcast %cst_50 : f32 to vector<8x32xf32>
    %125 = arith.mulf %124, %123 : vector<8x32xf32>
    %cst_51 = arith.constant 5.000000e-01 : f32
    %126 = vector.broadcast %cst_51 : f32 to vector<8x32xf32>
    %127 = arith.addf %125, %126 : vector<8x32xf32>
    %128 = arith.mulf %117, %89 : vector<8x32xf32>
    %129 = arith.mulf %109, %119 : vector<8x32xf32>
    %130 = arith.addf %128, %129 : vector<8x32xf32>
    %131 = math.tanh %130 : vector<8x32xf32>
    %132 = arith.mulf %127, %131 : vector<8x32xf32>
    %133 = arith.truncf %132 : vector<8x32xf32> to vector<8x32xbf16>
    %134 = arith.index_cast %96 : i32 to index
    %c0_52 = arith.constant 0 : index
    %135 = vector.load %arg11[%134, %c0_52] : memref<64x32xbf16, #tpu.memory_space<vmem>>, vector<8x32xbf16>
    tpu.vector_store %arg11[%134, %c0_52], %133 {strides = array<i32>} : memref<64x32xbf16, #tpu.memory_space<vmem>>, vector<8x32xbf16>,
    %c3_i32 = arith.constant 3 : i32
    %c8_i32_53 = arith.constant 8 : i32
    %136 = arith.muli %c3_i32, %c8_i32_53 : i32
    %137 = tpu.assume_multiple %136, 8 : i32
    %138 = arith.index_cast %137 : i32 to index
    %c0_54 = arith.constant 0 : index
    %139 = vector.load %arg10[%138, %c0_54] : memref<64x128xf32, #tpu.memory_space<vmem>>, vector<8x128xf32>
    %140 = arith.truncf %132 : vector<8x32xf32> to vector<8x32xbf16>
    %cst_55 = arith.constant dense<0.000000e+00> : vector<8x128xf32>
    %141 = tpu.matmul %140, %10, %cst_55 {dimension_numbers = #tpu.dot_dimension_numbers<[1], [0], [0], [1], [0, 0, 1, 1], [], []>} : vector<8x32xbf16>, vector<32x128xbf16>, vector<8x128xf32> -> vector<8x128xf32>
    %142 = arith.addf %139, %141 : vector<8x128xf32>
    %143 = vector.extract_strided_slice %142 {offsets = [0, 0], sizes = [8, 32], strides = [1, 1]} : vector<8x128xf32> to vector<8x32xf32>
    %cst_56 = arith.constant 5.000000e-01 : f32
    %144 = vector.broadcast %cst_56 : f32 to vector<8x32xf32>
    %145 = arith.mulf %144, %143 : vector<8x32xf32>
    %146 = math.tanh %145 : vector<8x32xf32>
    %cst_57 = arith.constant 5.000000e-01 : f32
    %147 = vector.broadcast %cst_57 : f32 to vector<8x32xf32>
    %148 = arith.mulf %147, %146 : vector<8x32xf32>
    %cst_58 = arith.constant 5.000000e-01 : f32
    %149 = vector.broadcast %cst_58 : f32 to vector<8x32xf32>
    %150 = arith.addf %148, %149 : vector<8x32xf32>
    %151 = vector.extract_strided_slice %142 {offsets = [0, 32], sizes = [8, 32], strides = [1, 1]} : vector<8x128xf32> to vector<8x32xf32>
    %cst_59 = arith.constant 5.000000e-01 : f32
    %152 = vector.broadcast %cst_59 : f32 to vector<8x32xf32>
    %153 = arith.mulf %152, %151 : vector<8x32xf32>
    %154 = math.tanh %153 : vector<8x32xf32>
    %cst_60 = arith.constant 5.000000e-01 : f32
    %155 = vector.broadcast %cst_60 : f32 to vector<8x32xf32>
    %156 = arith.mulf %155, %154 : vector<8x32xf32>
    %cst_61 = arith.constant 5.000000e-01 : f32
    %157 = vector.broadcast %cst_61 : f32 to vector<8x32xf32>
    %158 = arith.addf %156, %157 : vector<8x32xf32>
    %159 = vector.extract_strided_slice %142 {offsets = [0, 64], sizes = [8, 32], strides = [1, 1]} : vector<8x128xf32> to vector<8x32xf32>
    %160 = math.tanh %159 : vector<8x32xf32>
    %161 = vector.extract_strided_slice %142 {offsets = [0, 96], sizes = [8, 32], strides = [1, 1]} : vector<8x128xf32> to vector<8x32xf32>
    %cst_62 = arith.constant 5.000000e-01 : f32
    %162 = vector.broadcast %cst_62 : f32 to vector<8x32xf32>
    %163 = arith.mulf %162, %161 : vector<8x32xf32>
    %164 = math.tanh %163 : vector<8x32xf32>
    %cst_63 = arith.constant 5.000000e-01 : f32
    %165 = vector.broadcast %cst_63 : f32 to vector<8x32xf32>
    %166 = arith.mulf %165, %164 : vector<8x32xf32>
    %cst_64 = arith.constant 5.000000e-01 : f32
    %167 = vector.broadcast %cst_64 : f32 to vector<8x32xf32>
    %168 = arith.addf %166, %167 : vector<8x32xf32>
    %169 = arith.mulf %158, %130 : vector<8x32xf32>
    %170 = arith.mulf %150, %160 : vector<8x32xf32>
    %171 = arith.addf %169, %170 : vector<8x32xf32>
    %172 = math.tanh %171 : vector<8x32xf32>
    %173 = arith.mulf %168, %172 : vector<8x32xf32>
    %174 = arith.truncf %173 : vector<8x32xf32> to vector<8x32xbf16>
    %175 = arith.index_cast %137 : i32 to index
    %c0_65 = arith.constant 0 : index
    %176 = vector.load %arg11[%175, %c0_65] : memref<64x32xbf16, #tpu.memory_space<vmem>>, vector<8x32xbf16>
    tpu.vector_store %arg11[%175, %c0_65], %174 {strides = array<i32>} : memref<64x32xbf16, #tpu.memory_space<vmem>>, vector<8x32xbf16>,
    %c4_i32 = arith.constant 4 : i32
    %c8_i32_66 = arith.constant 8 : i32
    %177 = arith.muli %c4_i32, %c8_i32_66 : i32
    %178 = tpu.assume_multiple %177, 8 : i32
    %179 = arith.index_cast %178 : i32 to index
    %c0_67 = arith.constant 0 : index
    %180 = vector.load %arg10[%179, %c0_67] : memref<64x128xf32, #tpu.memory_space<vmem>>, vector<8x128xf32>
    %181 = arith.truncf %173 : vector<8x32xf32> to vector<8x32xbf16>
    %cst_68 = arith.constant dense<0.000000e+00> : vector<8x128xf32>
    %182 = tpu.matmul %181, %10, %cst_68 {dimension_numbers = #tpu.dot_dimension_numbers<[1], [0], [0], [1], [0, 0, 1, 1], [], []>} : vector<8x32xbf16>, vector<32x128xbf16>, vector<8x128xf32> -> vector<8x128xf32>
    %183 = arith.addf %180, %182 : vector<8x128xf32>
    %184 = vector.extract_strided_slice %183 {offsets = [0, 0], sizes = [8, 32], strides = [1, 1]} : vector<8x128xf32> to vector<8x32xf32>
    %cst_69 = arith.constant 5.000000e-01 : f32
    %185 = vector.broadcast %cst_69 : f32 to vector<8x32xf32>
    %186 = arith.mulf %185, %184 : vector<8x32xf32>
    %187 = math.tanh %186 : vector<8x32xf32>
    %cst_70 = arith.constant 5.000000e-01 : f32
    %188 = vector.broadcast %cst_70 : f32 to vector<8x32xf32>
    %189 = arith.mulf %188, %187 : vector<8x32xf32>
    %cst_71 = arith.constant 5.000000e-01 : f32
    %190 = vector.broadcast %cst_71 : f32 to vector<8x32xf32>
    %191 = arith.addf %189, %190 : vector<8x32xf32>
    %192 = vector.extract_strided_slice %183 {offsets = [0, 32], sizes = [8, 32], strides = [1, 1]} : vector<8x128xf32> to vector<8x32xf32>
    %cst_72 = arith.constant 5.000000e-01 : f32
    %193 = vector.broadcast %cst_72 : f32 to vector<8x32xf32>
    %194 = arith.mulf %193, %192 : vector<8x32xf32>
    %195 = math.tanh %194 : vector<8x32xf32>
    %cst_73 = arith.constant 5.000000e-01 : f32
    %196 = vector.broadcast %cst_73 : f32 to vector<8x32xf32>
    %197 = arith.mulf %196, %195 : vector<8x32xf32>
    %cst_74 = arith.constant 5.000000e-01 : f32
    %198 = vector.broadcast %cst_74 : f32 to vector<8x32xf32>
    %199 = arith.addf %197, %198 : vector<8x32xf32>
    %200 = vector.extract_strided_slice %183 {offsets = [0, 64], sizes = [8, 32], strides = [1, 1]} : vector<8x128xf32> to vector<8x32xf32>
    %201 = math.tanh %200 : vector<8x32xf32>
    %202 = vector.extract_strided_slice %183 {offsets = [0, 96], sizes = [8, 32], strides = [1, 1]} : vector<8x128xf32> to vector<8x32xf32>
    %cst_75 = arith.constant 5.000000e-01 : f32
    %203 = vector.broadcast %cst_75 : f32 to vector<8x32xf32>
    %204 = arith.mulf %203, %202 : vector<8x32xf32>
    %205 = math.tanh %204 : vector<8x32xf32>
    %cst_76 = arith.constant 5.000000e-01 : f32
    %206 = vector.broadcast %cst_76 : f32 to vector<8x32xf32>
    %207 = arith.mulf %206, %205 : vector<8x32xf32>
    %cst_77 = arith.constant 5.000000e-01 : f32
    %208 = vector.broadcast %cst_77 : f32 to vector<8x32xf32>
    %209 = arith.addf %207, %208 : vector<8x32xf32>
    %210 = arith.mulf %199, %171 : vector<8x32xf32>
    %211 = arith.mulf %191, %201 : vector<8x32xf32>
    %212 = arith.addf %210, %211 : vector<8x32xf32>
    %213 = math.tanh %212 : vector<8x32xf32>
    %214 = arith.mulf %209, %213 : vector<8x32xf32>
    %215 = arith.truncf %214 : vector<8x32xf32> to vector<8x32xbf16>
    %216 = arith.index_cast %178 : i32 to index
    %c0_78 = arith.constant 0 : index
    %217 = vector.load %arg11[%216, %c0_78] : memref<64x32xbf16, #tpu.memory_space<vmem>>, vector<8x32xbf16>
    tpu.vector_store %arg11[%216, %c0_78], %215 {strides = array<i32>} : memref<64x32xbf16, #tpu.memory_space<vmem>>, vector<8x32xbf16>,
    %c5_i32 = arith.constant 5 : i32
    %c8_i32_79 = arith.constant 8 : i32
    %218 = arith.muli %c5_i32, %c8_i32_79 : i32
    %219 = tpu.assume_multiple %218, 8 : i32
    %220 = arith.index_cast %219 : i32 to index
    %c0_80 = arith.constant 0 : index
    %221 = vector.load %arg10[%220, %c0_80] : memref<64x128xf32, #tpu.memory_space<vmem>>, vector<8x128xf32>
    %222 = arith.truncf %214 : vector<8x32xf32> to vector<8x32xbf16>
    %cst_81 = arith.constant dense<0.000000e+00> : vector<8x128xf32>
    %223 = tpu.matmul %222, %10, %cst_81 {dimension_numbers = #tpu.dot_dimension_numbers<[1], [0], [0], [1], [0, 0, 1, 1], [], []>} : vector<8x32xbf16>, vector<32x128xbf16>, vector<8x128xf32> -> vector<8x128xf32>
    %224 = arith.addf %221, %223 : vector<8x128xf32>
    %225 = vector.extract_strided_slice %224 {offsets = [0, 0], sizes = [8, 32], strides = [1, 1]} : vector<8x128xf32> to vector<8x32xf32>
    %cst_82 = arith.constant 5.000000e-01 : f32
    %226 = vector.broadcast %cst_82 : f32 to vector<8x32xf32>
    %227 = arith.mulf %226, %225 : vector<8x32xf32>
    %228 = math.tanh %227 : vector<8x32xf32>
    %cst_83 = arith.constant 5.000000e-01 : f32
    %229 = vector.broadcast %cst_83 : f32 to vector<8x32xf32>
    %230 = arith.mulf %229, %228 : vector<8x32xf32>
    %cst_84 = arith.constant 5.000000e-01 : f32
    %231 = vector.broadcast %cst_84 : f32 to vector<8x32xf32>
    %232 = arith.addf %230, %231 : vector<8x32xf32>
    %233 = vector.extract_strided_slice %224 {offsets = [0, 32], sizes = [8, 32], strides = [1, 1]} : vector<8x128xf32> to vector<8x32xf32>
    %cst_85 = arith.constant 5.000000e-01 : f32
    %234 = vector.broadcast %cst_85 : f32 to vector<8x32xf32>
    %235 = arith.mulf %234, %233 : vector<8x32xf32>
    %236 = math.tanh %235 : vector<8x32xf32>
    %cst_86 = arith.constant 5.000000e-01 : f32
    %237 = vector.broadcast %cst_86 : f32 to vector<8x32xf32>
    %238 = arith.mulf %237, %236 : vector<8x32xf32>
    %cst_87 = arith.constant 5.000000e-01 : f32
    %239 = vector.broadcast %cst_87 : f32 to vector<8x32xf32>
    %240 = arith.addf %238, %239 : vector<8x32xf32>
    %241 = vector.extract_strided_slice %224 {offsets = [0, 64], sizes = [8, 32], strides = [1, 1]} : vector<8x128xf32> to vector<8x32xf32>
    %242 = math.tanh %241 : vector<8x32xf32>
    %243 = vector.extract_strided_slice %224 {offsets = [0, 96], sizes = [8, 32], strides = [1, 1]} : vector<8x128xf32> to vector<8x32xf32>
    %cst_88 = arith.constant 5.000000e-01 : f32
    %244 = vector.broadcast %cst_88 : f32 to vector<8x32xf32>
    %245 = arith.mulf %244, %243 : vector<8x32xf32>
    %246 = math.tanh %245 : vector<8x32xf32>
    %cst_89 = arith.constant 5.000000e-01 : f32
    %247 = vector.broadcast %cst_89 : f32 to vector<8x32xf32>
    %248 = arith.mulf %247, %246 : vector<8x32xf32>
    %cst_90 = arith.constant 5.000000e-01 : f32
    %249 = vector.broadcast %cst_90 : f32 to vector<8x32xf32>
    %250 = arith.addf %248, %249 : vector<8x32xf32>
    %251 = arith.mulf %240, %212 : vector<8x32xf32>
    %252 = arith.mulf %232, %242 : vector<8x32xf32>
    %253 = arith.addf %251, %252 : vector<8x32xf32>
    %254 = math.tanh %253 : vector<8x32xf32>
    %255 = arith.mulf %250, %254 : vector<8x32xf32>
    %256 = arith.truncf %255 : vector<8x32xf32> to vector<8x32xbf16>
    %257 = arith.index_cast %219 : i32 to index
    %c0_91 = arith.constant 0 : index
    %258 = vector.load %arg11[%257, %c0_91] : memref<64x32xbf16, #tpu.memory_space<vmem>>, vector<8x32xbf16>
    tpu.vector_store %arg11[%257, %c0_91], %256 {strides = array<i32>} : memref<64x32xbf16, #tpu.memory_space<vmem>>, vector<8x32xbf16>,
    %c6_i32 = arith.constant 6 : i32
    %c8_i32_92 = arith.constant 8 : i32
    %259 = arith.muli %c6_i32, %c8_i32_92 : i32
    %260 = tpu.assume_multiple %259, 8 : i32
    %261 = arith.index_cast %260 : i32 to index
    %c0_93 = arith.constant 0 : index
    %262 = vector.load %arg10[%261, %c0_93] : memref<64x128xf32, #tpu.memory_space<vmem>>, vector<8x128xf32>
    %263 = arith.truncf %255 : vector<8x32xf32> to vector<8x32xbf16>
    %cst_94 = arith.constant dense<0.000000e+00> : vector<8x128xf32>
    %264 = tpu.matmul %263, %10, %cst_94 {dimension_numbers = #tpu.dot_dimension_numbers<[1], [0], [0], [1], [0, 0, 1, 1], [], []>} : vector<8x32xbf16>, vector<32x128xbf16>, vector<8x128xf32> -> vector<8x128xf32>
    %265 = arith.addf %262, %264 : vector<8x128xf32>
    %266 = vector.extract_strided_slice %265 {offsets = [0, 0], sizes = [8, 32], strides = [1, 1]} : vector<8x128xf32> to vector<8x32xf32>
    %cst_95 = arith.constant 5.000000e-01 : f32
    %267 = vector.broadcast %cst_95 : f32 to vector<8x32xf32>
    %268 = arith.mulf %267, %266 : vector<8x32xf32>
    %269 = math.tanh %268 : vector<8x32xf32>
    %cst_96 = arith.constant 5.000000e-01 : f32
    %270 = vector.broadcast %cst_96 : f32 to vector<8x32xf32>
    %271 = arith.mulf %270, %269 : vector<8x32xf32>
    %cst_97 = arith.constant 5.000000e-01 : f32
    %272 = vector.broadcast %cst_97 : f32 to vector<8x32xf32>
    %273 = arith.addf %271, %272 : vector<8x32xf32>
    %274 = vector.extract_strided_slice %265 {offsets = [0, 32], sizes = [8, 32], strides = [1, 1]} : vector<8x128xf32> to vector<8x32xf32>
    %cst_98 = arith.constant 5.000000e-01 : f32
    %275 = vector.broadcast %cst_98 : f32 to vector<8x32xf32>
    %276 = arith.mulf %275, %274 : vector<8x32xf32>
    %277 = math.tanh %276 : vector<8x32xf32>
    %cst_99 = arith.constant 5.000000e-01 : f32
    %278 = vector.broadcast %cst_99 : f32 to vector<8x32xf32>
    %279 = arith.mulf %278, %277 : vector<8x32xf32>
    %cst_100 = arith.constant 5.000000e-01 : f32
    %280 = vector.broadcast %cst_100 : f32 to vector<8x32xf32>
    %281 = arith.addf %279, %280 : vector<8x32xf32>
    %282 = vector.extract_strided_slice %265 {offsets = [0, 64], sizes = [8, 32], strides = [1, 1]} : vector<8x128xf32> to vector<8x32xf32>
    %283 = math.tanh %282 : vector<8x32xf32>
    %284 = vector.extract_strided_slice %265 {offsets = [0, 96], sizes = [8, 32], strides = [1, 1]} : vector<8x128xf32> to vector<8x32xf32>
    %cst_101 = arith.constant 5.000000e-01 : f32
    %285 = vector.broadcast %cst_101 : f32 to vector<8x32xf32>
    %286 = arith.mulf %285, %284 : vector<8x32xf32>
    %287 = math.tanh %286 : vector<8x32xf32>
    %cst_102 = arith.constant 5.000000e-01 : f32
    %288 = vector.broadcast %cst_102 : f32 to vector<8x32xf32>
    %289 = arith.mulf %288, %287 : vector<8x32xf32>
    %cst_103 = arith.constant 5.000000e-01 : f32
    %290 = vector.broadcast %cst_103 : f32 to vector<8x32xf32>
    %291 = arith.addf %289, %290 : vector<8x32xf32>
    %292 = arith.mulf %281, %253 : vector<8x32xf32>
    %293 = arith.mulf %273, %283 : vector<8x32xf32>
    %294 = arith.addf %292, %293 : vector<8x32xf32>
    %295 = math.tanh %294 : vector<8x32xf32>
    %296 = arith.mulf %291, %295 : vector<8x32xf32>
    %297 = arith.truncf %296 : vector<8x32xf32> to vector<8x32xbf16>
    %298 = arith.index_cast %260 : i32 to index
    %c0_104 = arith.constant 0 : index
    %299 = vector.load %arg11[%298, %c0_104] : memref<64x32xbf16, #tpu.memory_space<vmem>>, vector<8x32xbf16>
    tpu.vector_store %arg11[%298, %c0_104], %297 {strides = array<i32>} : memref<64x32xbf16, #tpu.memory_space<vmem>>, vector<8x32xbf16>,
    %c7_i32 = arith.constant 7 : i32
    %c8_i32_105 = arith.constant 8 : i32
    %300 = arith.muli %c7_i32, %c8_i32_105 : i32
    %301 = tpu.assume_multiple %300, 8 : i32
    %302 = arith.index_cast %301 : i32 to index
    %c0_106 = arith.constant 0 : index
    %303 = vector.load %arg10[%302, %c0_106] : memref<64x128xf32, #tpu.memory_space<vmem>>, vector<8x128xf32>
    %304 = arith.truncf %296 : vector<8x32xf32> to vector<8x32xbf16>
    %cst_107 = arith.constant dense<0.000000e+00> : vector<8x128xf32>
    %305 = tpu.matmul %304, %10, %cst_107 {dimension_numbers = #tpu.dot_dimension_numbers<[1], [0], [0], [1], [0, 0, 1, 1], [], []>} : vector<8x32xbf16>, vector<32x128xbf16>, vector<8x128xf32> -> vector<8x128xf32>
    %306 = arith.addf %303, %305 : vector<8x128xf32>
    %307 = vector.extract_strided_slice %306 {offsets = [0, 0], sizes = [8, 32], strides = [1, 1]} : vector<8x128xf32> to vector<8x32xf32>
    %cst_108 = arith.constant 5.000000e-01 : f32
    %308 = vector.broadcast %cst_108 : f32 to vector<8x32xf32>
    %309 = arith.mulf %308, %307 : vector<8x32xf32>
    %310 = math.tanh %309 : vector<8x32xf32>
    %cst_109 = arith.constant 5.000000e-01 : f32
    %311 = vector.broadcast %cst_109 : f32 to vector<8x32xf32>
    %312 = arith.mulf %311, %310 : vector<8x32xf32>
    %cst_110 = arith.constant 5.000000e-01 : f32
    %313 = vector.broadcast %cst_110 : f32 to vector<8x32xf32>
    %314 = arith.addf %312, %313 : vector<8x32xf32>
    %315 = vector.extract_strided_slice %306 {offsets = [0, 32], sizes = [8, 32], strides = [1, 1]} : vector<8x128xf32> to vector<8x32xf32>
    %cst_111 = arith.constant 5.000000e-01 : f32
    %316 = vector.broadcast %cst_111 : f32 to vector<8x32xf32>
    %317 = arith.mulf %316, %315 : vector<8x32xf32>
    %318 = math.tanh %317 : vector<8x32xf32>
    %cst_112 = arith.constant 5.000000e-01 : f32
    %319 = vector.broadcast %cst_112 : f32 to vector<8x32xf32>
    %320 = arith.mulf %319, %318 : vector<8x32xf32>
    %cst_113 = arith.constant 5.000000e-01 : f32
    %321 = vector.broadcast %cst_113 : f32 to vector<8x32xf32>
    %322 = arith.addf %320, %321 : vector<8x32xf32>
    %323 = vector.extract_strided_slice %306 {offsets = [0, 64], sizes = [8, 32], strides = [1, 1]} : vector<8x128xf32> to vector<8x32xf32>
    %324 = math.tanh %323 : vector<8x32xf32>
    %325 = vector.extract_strided_slice %306 {offsets = [0, 96], sizes = [8, 32], strides = [1, 1]} : vector<8x128xf32> to vector<8x32xf32>
    %cst_114 = arith.constant 5.000000e-01 : f32
    %326 = vector.broadcast %cst_114 : f32 to vector<8x32xf32>
    %327 = arith.mulf %326, %325 : vector<8x32xf32>
    %328 = math.tanh %327 : vector<8x32xf32>
    %cst_115 = arith.constant 5.000000e-01 : f32
    %329 = vector.broadcast %cst_115 : f32 to vector<8x32xf32>
    %330 = arith.mulf %329, %328 : vector<8x32xf32>
    %cst_116 = arith.constant 5.000000e-01 : f32
    %331 = vector.broadcast %cst_116 : f32 to vector<8x32xf32>
    %332 = arith.addf %330, %331 : vector<8x32xf32>
    %333 = arith.mulf %322, %294 : vector<8x32xf32>
    %334 = arith.mulf %314, %324 : vector<8x32xf32>
    %335 = arith.addf %333, %334 : vector<8x32xf32>
    %336 = math.tanh %335 : vector<8x32xf32>
    %337 = arith.mulf %332, %336 : vector<8x32xf32>
    %338 = arith.truncf %337 : vector<8x32xf32> to vector<8x32xbf16>
    %339 = arith.index_cast %301 : i32 to index
    %c0_117 = arith.constant 0 : index
    %340 = vector.load %arg11[%339, %c0_117] : memref<64x32xbf16, #tpu.memory_space<vmem>>, vector<8x32xbf16>
    tpu.vector_store %arg11[%339, %c0_117], %338 {strides = array<i32>} : memref<64x32xbf16, #tpu.memory_space<vmem>>, vector<8x32xbf16>,
    %c8_i32_118 = arith.constant 8 : i32
    %c0_119 = arith.constant 0 : index
    %c0_120 = arith.constant 0 : index
    %341 = vector.load %arg8[%c0_119, %c0_120] : memref<8x32xf32, #tpu.memory_space<vmem>>, vector<8x32xf32>
    tpu.vector_store %arg8[%c0_119, %c0_120], %337 {strides = array<i32>} : memref<8x32xf32, #tpu.memory_space<vmem>>, vector<8x32xf32>,
    %c0_121 = arith.constant 0 : index
    %c0_122 = arith.constant 0 : index
    %342 = vector.load %arg9[%c0_121, %c0_122] : memref<8x32xf32, #tpu.memory_space<vmem>>, vector<8x32xf32>
    tpu.vector_store %arg9[%c0_121, %c0_122], %335 {strides = array<i32>} : memref<8x32xf32, #tpu.memory_space<vmem>>, vector<8x32xf32>,
    %c0_123 = arith.constant 0 : index
    %c0_124 = arith.constant 0 : index
    %343 = vector.load %arg11[%c0_123, %c0_124] : memref<64x32xbf16, #tpu.memory_space<vmem>>, vector<64x32xbf16>
    %c0_125 = arith.constant 0 : index
    %c0_126 = arith.constant 0 : index
    %344 = vector.load %arg5[%c0_125, %c0_126] : memref<32x128xbf16, #tpu.memory_space<vmem>>, vector<32x128xbf16>
    %cst_127 = arith.constant dense<0.000000e+00> : vector<64x128xf32>
    %345 = tpu.matmul %343, %344, %cst_127 {dimension_numbers = #tpu.dot_dimension_numbers<[1], [0], [0], [1], [0, 0, 1, 1], [], []>} : vector<64x32xbf16>, vector<32x128xbf16>, vector<64x128xf32> -> vector<64x128xf32>
    %c0_128 = arith.constant 0 : index
    %c0_129 = arith.constant 0 : index
    %346 = vector.load %arg6[%c0_128, %c0_129] : memref<1x128xf32, #tpu.memory_space<vmem>>, vector<1x128xf32>
    %347 = vector.broadcast %346 : vector<1x128xf32> to vector<64x128xf32>
    %348 = arith.addf %345, %347 : vector<64x128xf32>
    %c0_130 = arith.constant 0 : index
    %c0_131 = arith.constant 0 : index
    %349 = vector.load %arg7[%c0_130, %c0_131] : memref<64x128xf32, #tpu.memory_space<vmem>>, vector<64x128xf32>
    tpu.vector_store %arg7[%c0_130, %c0_131], %348 {strides = array<i32>} : memref<64x128xf32, #tpu.memory_space<vmem>>, vector<64x128xf32>,
    return
  }
  func.func @transform_0(%arg0: i32) -> (i32, i32) {
    %c0_i32 = arith.constant 0 : i32
    %c0_i32_0 = arith.constant 0 : i32
    return %arg0, %c0_i32 : i32, i32
  }
  func.func @transform_1(%arg0: i32) -> (i32, i32) {
    %c0_i32 = arith.constant 0 : i32
    %c0_i32_0 = arith.constant 0 : i32
    %c0_i32_1 = arith.constant 0 : i32
    return %c0_i32, %c0_i32_0 : i32, i32
  }
  func.func @transform_2(%arg0: i32) -> (i32, i32) {
    %c0_i32 = arith.constant 0 : i32
    %c0_i32_0 = arith.constant 0 : i32
    %c0_i32_1 = arith.constant 0 : i32
    return %c0_i32, %c0_i32_0 : i32, i32
  }
  func.func @transform_3(%arg0: i32) -> (i32, i32) {
    %c0_i32 = arith.constant 0 : i32
    %c0_i32_0 = arith.constant 0 : i32
    %c0_i32_1 = arith.constant 0 : i32
    return %c0_i32, %c0_i32_0 : i32, i32
  }
  func.func @transform_4(%arg0: i32) -> (i32, i32) {
    %c0_i32 = arith.constant 0 : i32
    %c0_i32_0 = arith.constant 0 : i32
    %c0_i32_1 = arith.constant 0 : i32
    return %c0_i32, %c0_i32_0 : i32, i32
  }
  func.func @transform_5(%arg0: i32) -> (i32, i32) {
    %c0_i32 = arith.constant 0 : i32
    %c0_i32_0 = arith.constant 0 : i32
    %c0_i32_1 = arith.constant 0 : i32
    return %c0_i32, %c0_i32_0 : i32, i32
  }
  func.func @transform_6(%arg0: i32) -> (i32, i32) {
    %c0_i32 = arith.constant 0 : i32
    %c0_i32_0 = arith.constant 0 : i32
    return %arg0, %c0_i32 : i32, i32
  }
}

</mosaic_0001>

<llo_original>
// kernel: lstm_model_forward.2
$region0: #{lstm_model_forward.2}
  #allocation0 [shape = 'u32[]', space=smem, size = 0x4, offset = 0x4, fixed_abs, tag = 'smem constant byte address 0x4 - core index']
  #allocation1 [shape = 'u32[144,128]{1,0:T(1,128)}', space=vmem, size = 0x12000, scoped, tag = 'internal scratch']
  #allocation2 [shape = 'f32[8,32]{1,0:T(8,128)}', space=vmem, size = 0x1000, scoped, tag = 'scratch operand']
  #allocation3 [shape = 'f32[8,32]{1,0:T(8,128)}', space=vmem, size = 0x1000, scoped, tag = 'scratch operand']
  #allocation4 [shape = 'f32[64,128]{1,0:T(8,128)}', space=vmem, size = 0x8000, scoped, tag = 'scratch operand']
  %s0 = inlined_call_operand.vmem [shape: bf16[64,8], index: 0, kind: input, shape index: {}]
  %s1 = inlined_call_operand.vmem [shape: bf16[8,128], index: 1, kind: input, shape index: {}]
  %s2 = inlined_call_operand.vmem [shape: bf16[32,128], index: 2, kind: input, shape index: {}]
  %s3 = inlined_call_operand.vmem [shape: f32[1,128], index: 3, kind: input, shape index: {}]
  %s4 = inlined_call_operand.vmem [shape: bf16[64,32], index: 4, kind: output, shape index: {}]
  %s5 = sld [smem:[#allocation0]]
  $region30: #{lstm_model_forward.2} parent=0
    _
  %s7 = ssub.s32 1, %s5
  %s8 = scalar_select 0, %s7, %s5
  // Predicated region
  $region2: #{lstm_model_forward.2} parent=0 // pred_check
    _
  $region3: #{lstm_model_forward.2} parent=0 // pred_check_branch
    %10 = sbr.rel (0) target = $region5
  $region4: #{lstm_model_forward.2} parent=0 // pred_region
    _
  $region5: #{lstm_model_forward.2} parent=0 // pred_fallthru
    _
  // Predicated region
  $region6: #{lstm_model_forward.2} parent=0 // pred_check
    _
  $region7: #{lstm_model_forward.2} parent=0 // pred_check_branch
    %12 = sbr.rel (0) target = $region9
  $region8: #{lstm_model_forward.2} parent=0 // pred_region
    _
  $region9: #{lstm_model_forward.2} parent=0 // pred_fallthru
    _
  // Predicated region
  $region10: #{lstm_model_forward.2} parent=0 // pred_check
    _
  $region11: #{lstm_model_forward.2} parent=0 // pred_check_branch
    %14 = sbr.rel (0) target = $region13
  $region12: #{lstm_model_forward.2} parent=0 // pred_region
    _
  $region13: #{lstm_model_forward.2} parent=0 // pred_fallthru
    _
  // Predicated region
  $region14: #{lstm_model_forward.2} parent=0 // pred_check
    _
  $region15: #{lstm_model_forward.2} parent=0 // pred_check_branch
    %16 = sbr.rel (0) target = $region17
  $region16: #{lstm_model_forward.2} parent=0 // pred_region
    _
  $region17: #{lstm_model_forward.2} parent=0 // pred_fallthru
    _
  %p18 = scmp.eq.s32.totalorder 0, 0
  // Predicated region
  $region18: #{lstm_model_forward.2} parent=0 // pred_check
    %p19 = pneg %p18
  $region19: #{lstm_model_forward.2} parent=0 // pred_check_branch
    %21 = sbr.rel (%p19) target = $region21
  $region20: #{lstm_model_forward.2} parent=0 // pred_region
    %vm22 = vcmask 261120
    %23 = vst.msk [vmem:[#allocation2] sm:$0xff] %vm22, 0.0
    %24 = vst.msk [vmem:[#allocation3] sm:$0xff] %vm22, 0.0
  $region21: #{lstm_model_forward.2} parent=0 // pred_fallthru
    _
  %v25 = vld [vmem:[%s0] sm:$0xf]
  %v26 = vld [vmem:[%s0 + $0x4] sm:$0xf]
  %v27 = vld [vmem:[%s0 + $0x8] sm:$0xf]
  %v28 = vld [vmem:[%s0 + $0xc] sm:$0xf]
  %v29 = vld [vmem:[%s0 + $0x10] sm:$0xf]
  %v30 = vld [vmem:[%s0 + $0x14] sm:$0xf]
  %v31 = vld [vmem:[%s0 + $0x18] sm:$0xf]
  %v32 = vld [vmem:[%s0 + $0x1c] sm:$0xf]
  %v33 = vld [vmem:[%s1] sm:$0xf]
  %v34 = vld [vmem:[%s3] sm:$0x1]
  %v36 = vlaneseq
  %v37 = vshrl.u32 %v36, 7
  %v38 = vsub.s32 0, %v37
  %v39 = vrot.slane %v34, %v38
  %v49 = vunpack.c.l.b16 %v25
  %v50 = vunpack.c.l.b16 %v26
  %v51 = vunpack.c.l.b16 %v27
  %v52 = vunpack.c.l.b16 %v28
  %v53 = vunpack.c.l.b16 %v29
  %v54 = vunpack.c.l.b16 %v30
  %v55 = vunpack.c.l.b16 %v31
  %v56 = vunpack.c.l.b16 %v32
  %v57 = vpack.c.b16 %v50, %v49
  %v58 = vpack.c.b16 %v52, %v51
  %v59 = vpack.c.b16 %v54, %v53
  %v60 = vpack.c.b16 %v56, %v55
  %vm61 = vcmask 64512
  %v63 = vsel %vm61, %v57, 0
  %v66 = vsel %vm61, %v58, 0
  %v69 = vsel %vm61, %v59, 0
  %v72 = vsel %vm61, %v60, 0
  %vm74 = vcmask 1043456
  %v76 = vsel %vm74, %v33, 0
  %78 = vmatprep.subr.bf16.mxu0 0
  %79 = vmatpush1.bf16.msra.mxu0 0
  %80 = vmatprep.subr.bf16.mxu0 0
  %81 = vmatpush1.bf16.msra.mxu0 0
  %82 = vmatprep.subr.bf16.mxu0 0
  %83 = vmatpush1.bf16.msra.mxu0 0
  %84 = vmatprep.subr.bf16.mxu0 0
  %85 = vmatpush1.bf16.msra.mxu0 0
  %86 = vmatprep.subr.bf16.mxu0 0
  %87 = vmatpush1.bf16.msra.mxu0 0
  %88 = vmatprep.subr.bf16.mxu0 0
  %89 = vmatpush1.bf16.msra.mxu0 0
  %90 = vmatprep.subr.bf16.mxu0 0
  %91 = vmatpush1.bf16.msra.mxu0 0
  %92 = vmatprep.subr.bf16.mxu0 0
  %93 = vmatpush1.bf16.msra.mxu0 %v76
  %94 = vmatprep.subr.bf16.mxu0 0
  %95 = vmatpush2.bf16.msra.mxu0 0
  %96 = vmatprep.subr.bf16.mxu0 0
  %97 = vmatpush2.bf16.msra.mxu0 0
  %98 = vmatprep.subr.bf16.mxu0 0
  %99 = vmatpush2.bf16.msra.mxu0 0
  %100 = vmatprep.subr.bf16.mxu0 0
  %101 = vmatpush2.bf16.msra.mxu0 0
  %102 = vmatprep.subr.bf16.mxu0 0
  %103 = vmatpush2.bf16.msra.mxu0 0
  %104 = vmatprep.subr.bf16.mxu0 0
  %105 = vmatpush2.bf16.msra.mxu0 0
  %106 = vmatprep.subr.bf16.mxu0 0
  %107 = vmatpush2.bf16.msra.mxu0 0
  %108 = vmatprep.subr.bf16.mxu0 0
  %109 = vmatpush2.bf16.msra.mxu0 0
  %110 = vmatprep.mubr.bf16.mxu0 0
  %111 = vmatmul.mubr.bf16.gmra.mxu0 %v63
  %v112 = vpop.f32.mrf.mxu0
  %v113 = vadd.f32 %v39, %v112
  %v114 = vpop.f32.mrf.mxu0
  %v115 = vpop.f32.mrf.mxu0
  %v116 = vadd.f32 %v39, %v115
  %v117 = vpop.f32.mrf.mxu0
  %118 = vmatprep.mubr.bf16.mxu0 0
  %119 = vmatmul.mubr.bf16.gmra.mxu0 %v66
  %v120 = vpop.f32.mrf.mxu0
  %v121 = vadd.f32 %v39, %v120
  %v122 = vpop.f32.mrf.mxu0
  %v123 = vpop.f32.mrf.mxu0
  %v124 = vadd.f32 %v39, %v123
  %v125 = vpop.f32.mrf.mxu0
  %126 = vmatprep.mubr.bf16.mxu0 0
  %127 = vmatmul.mubr.bf16.gmra.mxu0 %v69
  %v128 = vpop.f32.mrf.mxu0
  %v129 = vadd.f32 %v39, %v128
  %v130 = vpop.f32.mrf.mxu0
  %v131 = vpop.f32.mrf.mxu0
  %v132 = vadd.f32 %v39, %v131
  %v133 = vpop.f32.mrf.mxu0
  %134 = vmatprep.mubr.bf16.mxu0 0
  %135 = vmatmul.mubr.bf16.gmra.mxu0 %v72
  %v136 = vpop.f32.mrf.mxu0
  %v137 = vadd.f32 %v39, %v136
  %v138 = vpop.f32.mrf.mxu0
  %v139 = vpop.f32.mrf.mxu0
  %v140 = vadd.f32 %v39, %v139
  %v141 = vpop.f32.mrf.mxu0
  %142 = vdwg.mxu0
  %143 = vst [vmem:[#allocation4] sm:$0xff] %v113
  %144 = vst [vmem:[#allocation4 + $0x8] sm:$0xff] %v116
  %145 = vst [vmem:[#allocation4 + $0x10] sm:$0xff] %v121
  %146 = vst [vmem:[#allocation4 + $0x18] sm:$0xff] %v124
  %147 = vst [vmem:[#allocation4 + $0x20] sm:$0xff] %v129
  %148 = vst [vmem:[#allocation4 + $0x28] sm:$0xff] %v132
  %149 = vst [vmem:[#allocation4 + $0x30] sm:$0xff] %v137
  %150 = vst [vmem:[#allocation4 + $0x38] sm:$0xff] %v140
  %v151 = vld [vmem:[%s2] sm:$0xf]
  %v152 = vld [vmem:[%s2 + $0x4] sm:$0xf]
  %v153 = vld [vmem:[%s2 + $0x8] sm:$0xf]
  %v154 = vld [vmem:[%s2 + $0xc] sm:$0xf]
  %v155 = vld [vmem:[#allocation2] sm:$0xff]
  %v156 = vld [vmem:[#allocation3] sm:$0xff]
  %v157 = vld [vmem:[#allocation4] sm:$0xff]
  %v158 = vpack.c.bf16 %v155, %v155
  %v163 = vunpack.c.l.b16 %v151
  %v164 = vunpack.c.l.b16 %v152
  %v165 = vunpack.c.l.b16 %v153
  %v166 = vunpack.c.l.b16 %v154
  %v167 = vpack.c.b16 %v164, %v163
  %v168 = vpack.c.b16 %v166, %v165
  %vm171 = vcmask 261120
  %v173 = vsel %vm171, %v158, 0
  %175 = vmatprep.subr.bf16.mxu0 0
  %176 = vmatpush1.bf16.msra.mxu0 0
  %177 = vmatprep.subr.bf16.mxu0 0
  %178 = vmatpush1.bf16.msra.mxu0 0
  %179 = vmatprep.subr.bf16.mxu0 0
  %180 = vmatpush1.bf16.msra.mxu0 0
  %181 = vmatprep.subr.bf16.mxu0 0
  %182 = vmatpush1.bf16.msra.mxu0 0
  %183 = vmatprep.subr.bf16.mxu0 0
  %184 = vmatpush1.bf16.msra.mxu0 0
  %185 = vmatprep.subr.bf16.mxu0 0
  %186 = vmatpush1.bf16.msra.mxu0 0
  %187 = vmatprep.subr.bf16.mxu0 0
  %188 = vmatpush1.bf16.msra.mxu0 %v168
  %189 = vmatprep.subr.bf16.mxu0 0
  %190 = vmatpush1.bf16.msra.mxu0 %v167
  %191 = vmatprep.subr.bf16.mxu0 0
  %192 = vmatpush2.bf16.msra.mxu0 0
  %193 = vmatprep.subr.bf16.mxu0 0
  %194 = vmatpush2.bf16.msra.mxu0 0
  %195 = vmatprep.subr.bf16.mxu0 0
  %196 = vmatpush2.bf16.msra.mxu0 0
  %197 = vmatprep.subr.bf16.mxu0 0
  %198 = vmatpush2.bf16.msra.mxu0 0
  %199 = vmatprep.subr.bf16.mxu0 0
  %200 = vmatpush2.bf16.msra.mxu0 0
  %201 = vmatprep.subr.bf16.mxu0 0
  %202 = vmatpush2.bf16.msra.mxu0 0
  %203 = vmatprep.subr.bf16.mxu0 0
  %204 = vmatpush2.bf16.msra.mxu0 0
  %205 = vmatprep.subr.bf16.mxu0 0
  %206 = vmatpush2.bf16.msra.mxu0 0
  %207 = vmatprep.mubr.bf16.mxu0 0
  %208 = vmatmul.mubr.bf16.gmra.mxu0 %v173
  %v209 = vpop.f32.mrf.mxu0
  %v210 = vadd.f32 0.0, %v209
  %v211 = vpop.f32.mrf.mxu0
  %v212 = vpop.f32.mrf.mxu0
  %v213 = vpop.f32.mrf.mxu0
  %214 = vdwg.mxu0
  %v215 = vadd.f32 %v157, %v210
  %v216 = vmul.f32 %v215, 0.5
  %v217 = vtanh.pop %v216
  %v218 = vmul.f32 %v217, 0.5
  %v219 = vadd.f32 %v218, 0.5
  %v220 = vtanh.pop %v215
  %222 = vrot.lane.b32.xlu0 %v156, 32
  %v223 = vpop.permute.xlu0 %222
  %v225 = vmul.f32 %v219, %v223
  %227 = vrot.lane.b32.xlu0 %v220, 64
  %v228 = vpop.permute.xlu0 %227
  %v230 = vmul.f32 %v219, %v228
  %232 = vrot.lane.b32.xlu0 %v230, 32
  %v233 = vpop.permute.xlu0 %232
  %v235 = vadd.f32 %v225, %v233
  %v236 = vtanh.pop %v235
  %238 = vrot.lane.b32.xlu0 %v236, 64
  %v239 = vpop.permute.xlu0 %238
  %v241 = vmul.f32 %v219, %v239
  %v242 = vpack.c.bf16 %v241, %v241
  %v244 = vunpack.c.l.b16 %v242
  %v245 = vpack.c.b16 %v244, %v244
  %246 = vrot.lane.b32.xlu0 %v245, 32
  %v247 = vpop.permute.xlu0 %246
  %vm249 = vcmask 257024
  %250 = vst.msk [vmem:[%s4] sm:$0xf] %vm249, %v247
  %s251 = scalar_lea.vmem [#allocation4], 8
  %v252 = vld [vmem:[%s251] sm:$0xff]
  %253 = vrot.lane.b32.xlu0 %v242, 32
  %v254 = vpop.permute.xlu0 %253
  %v256 = vsel %vm171, %v254, 0
  %258 = vmatprep.subr.bf16.mxu0 0
  %259 = vmatpush1.bf16.msra.mxu0 0
  %260 = vmatprep.subr.bf16.mxu0 0
  %261 = vmatpush1.bf16.msra.mxu0 0
  %262 = vmatprep.subr.bf16.mxu0 0
  %263 = vmatpush1.bf16.msra.mxu0 0
  %264 = vmatprep.subr.bf16.mxu0 0
  %265 = vmatpush1.bf16.msra.mxu0 0
  %266 = vmatprep.subr.bf16.mxu0 0
  %267 = vmatpush1.bf16.msra.mxu0 0
  %268 = vmatprep.subr.bf16.mxu0 0
  %269 = vmatpush1.bf16.msra.mxu0 0
  %270 = vmatprep.subr.bf16.mxu0 0
  %271 = vmatpush1.bf16.msra.mxu0 %v168
  %272 = vmatprep.subr.bf16.mxu0 0
  %273 = vmatpush1.bf16.msra.mxu0 %v167
  %274 = vmatprep.subr.bf16.mxu0 0
  %275 = vmatpush2.bf16.msra.mxu0 0
  %276 = vmatprep.subr.bf16.mxu0 0
  %277 = vmatpush2.bf16.msra.mxu0 0
  %278 = vmatprep.subr.bf16.mxu0 0
  %279 = vmatpush2.bf16.msra.mxu0 0
  %280 = vmatprep.subr.bf16.mxu0 0
  %281 = vmatpush2.bf16.msra.mxu0 0
  %282 = vmatprep.subr.bf16.mxu0 0
  %283 = vmatpush2.bf16.msra.mxu0 0
  %284 = vmatprep.subr.bf16.mxu0 0
  %285 = vmatpush2.bf16.msra.mxu0 0
  %286 = vmatprep.subr.bf16.mxu0 0
  %287 = vmatpush2.bf16.msra.mxu0 0
  %288 = vmatprep.subr.bf16.mxu0 0
  %289 = vmatpush2.bf16.msra.mxu0 0
  %290 = vmatprep.mubr.bf16.mxu0 0
  %291 = vmatmul.mubr.bf16.gmra.mxu0 %v256
  %v292 = vpop.f32.mrf.mxu0
  %v293 = vadd.f32 0.0, %v292
  %v294 = vpop.f32.mrf.mxu0
  %v295 = vpop.f32.mrf.mxu0
  %v296 = vpop.f32.mrf.mxu0
  %297 = vdwg.mxu0
  %v298 = vadd.f32 %v252, %v293
  %v299 = vmul.f32 %v298, 0.5
  %v300 = vtanh.pop %v299
  %v301 = vmul.f32 %v300, 0.5
  %v302 = vadd.f32 %v301, 0.5
  %v303 = vtanh.pop %v298
  %v304 = vmul.f32 %v302, %v235
  %306 = vrot.lane.b32.xlu0 %v303, 64
  %v307 = vpop.permute.xlu0 %306
  %v309 = vmul.f32 %v302, %v307
  %311 = vrot.lane.b32.xlu0 %v309, 32
  %v312 = vpop.permute.xlu0 %311
  %v314 = vadd.f32 %v304, %v312
  %v315 = vtanh.pop %v314
  %317 = vrot.lane.b32.xlu0 %v315, 64
  %v318 = vpop.permute.xlu0 %317
  %v320 = vmul.f32 %v302, %v318
  %v321 = vpack.c.bf16 %v320, %v320
  %v323 = vunpack.c.l.b16 %v321
  %v324 = vpack.c.b16 %v323, %v323
  %325 = vrot.lane.b32.xlu0 %v324, 32
  %v326 = vpop.permute.xlu0 %325
  %s328 = scalar_lea.vmem %s4, 4
  %329 = vst.msk [vmem:[%s328] sm:$0xf] %vm249, %v326
  %s330 = scalar_lea.vmem [#allocation4], 16
  %v331 = vld [vmem:[%s330] sm:$0xff]
  %332 = vrot.lane.b32.xlu0 %v321, 32
  %v333 = vpop.permute.xlu0 %332
  %v335 = vsel %vm171, %v333, 0
  %337 = vmatprep.subr.bf16.mxu0 0
  %338 = vmatpush1.bf16.msra.mxu0 0
  %339 = vmatprep.subr.bf16.mxu0 0
  %340 = vmatpush1.bf16.msra.mxu0 0
  %341 = vmatprep.subr.bf16.mxu0 0
  %342 = vmatpush1.bf16.msra.mxu0 0
  %343 = vmatprep.subr.bf16.mxu0 0
  %344 = vmatpush1.bf16.msra.mxu0 0
  %345 = vmatprep.subr.bf16.mxu0 0
  %346 = vmatpush1.bf16.msra.mxu0 0
  %347 = vmatprep.subr.bf16.mxu0 0
  %348 = vmatpush1.bf16.msra.mxu0 0
  %349 = vmatprep.subr.bf16.mxu0 0
  %350 = vmatpush1.bf16.msra.mxu0 %v168
  %351 = vmatprep.subr.bf16.mxu0 0
  %352 = vmatpush1.bf16.msra.mxu0 %v167
  %353 = vmatprep.subr.bf16.mxu0 0
  %354 = vmatpush2.bf16.msra.mxu0 0
  %355 = vmatprep.subr.bf16.mxu0 0
  %356 = vmatpush2.bf16.msra.mxu0 0
  %357 = vmatprep.subr.bf16.mxu0 0
  %358 = vmatpush2.bf16.msra.mxu0 0
  %359 = vmatprep.subr.bf16.mxu0 0
  %360 = vmatpush2.bf16.msra.mxu0 0
  %361 = vmatprep.subr.bf16.mxu0 0
  %362 = vmatpush2.bf16.msra.mxu0 0
  %363 = vmatprep.subr.bf16.mxu0 0
  %364 = vmatpush2.bf16.msra.mxu0 0
  %365 = vmatprep.subr.bf16.mxu0 0
  %366 = vmatpush2.bf16.msra.mxu0 0
  %367 = vmatprep.subr.bf16.mxu0 0
  %368 = vmatpush2.bf16.msra.mxu0 0
  %369 = vmatprep.mubr.bf16.mxu0 0
  %370 = vmatmul.mubr.bf16.gmra.mxu0 %v335
  %v371 = vpop.f32.mrf.mxu0
  %v372 = vadd.f32 0.0, %v371
  %v373 = vpop.f32.mrf.mxu0
  %v374 = vpop.f32.mrf.mxu0
  %v375 = vpop.f32.mrf.mxu0
  %376 = vdwg.mxu0
  %v377 = vadd.f32 %v331, %v372
  %v378 = vmul.f32 %v377, 0.5
  %v379 = vtanh.pop %v378
  %v380 = vmul.f32 %v379, 0.5
  %v381 = vadd.f32 %v380, 0.5
  %v382 = vtanh.pop %v377
  %v383 = vmul.f32 %v381, %v314
  %385 = vrot.lane.b32.xlu0 %v382, 64
  %v386 = vpop.permute.xlu0 %385
  %v388 = vmul.f32 %v381, %v386
  %390 = vrot.lane.b32.xlu0 %v388, 32
  %v391 = vpop.permute.xlu0 %390
  %v393 = vadd.f32 %v383, %v391
  %v394 = vtanh.pop %v393
  %396 = vrot.lane.b32.xlu0 %v394, 64
  %v397 = vpop.permute.xlu0 %396
  %v399 = vmul.f32 %v381, %v397
  %v400 = vpack.c.bf16 %v399, %v399
  %v402 = vunpack.c.l.b16 %v400
  %v403 = vpack.c.b16 %v402, %v402
  %404 = vrot.lane.b32.xlu0 %v403, 32
  %v405 = vpop.permute.xlu0 %404
  %s407 = scalar_lea.vmem %s4, 8
  %408 = vst.msk [vmem:[%s407] sm:$0xf] %vm249, %v405
  %s409 = scalar_lea.vmem [#allocation4], 24
  %v410 = vld [vmem:[%s409] sm:$0xff]
  %411 = vrot.lane.b32.xlu0 %v400, 32
  %v412 = vpop.permute.xlu0 %411
  %v414 = vsel %vm171, %v412, 0
  %416 = vmatprep.subr.bf16.mxu0 0
  %417 = vmatpush1.bf16.msra.mxu0 0
  %418 = vmatprep.subr.bf16.mxu0 0
  %419 = vmatpush1.bf16.msra.mxu0 0
  %420 = vmatprep.subr.bf16.mxu0 0
  %421 = vmatpush1.bf16.msra.mxu0 0
  %422 = vmatprep.subr.bf16.mxu0 0
  %423 = vmatpush1.bf16.msra.mxu0 0
  %424 = vmatprep.subr.bf16.mxu0 0
  %425 = vmatpush1.bf16.msra.mxu0 0
  %426 = vmatprep.subr.bf16.mxu0 0
  %427 = vmatpush1.bf16.msra.mxu0 0
  %428 = vmatprep.subr.bf16.mxu0 0
  %429 = vmatpush1.bf16.msra.mxu0 %v168
  %430 = vmatprep.subr.bf16.mxu0 0
  %431 = vmatpush1.bf16.msra.mxu0 %v167
  %432 = vmatprep.subr.bf16.mxu0 0
  %433 = vmatpush2.bf16.msra.mxu0 0
  %434 = vmatprep.subr.bf16.mxu0 0
  %435 = vmatpush2.bf16.msra.mxu0 0
  %436 = vmatprep.subr.bf16.mxu0 0
  %437 = vmatpush2.bf16.msra.mxu0 0
  %438 = vmatprep.subr.bf16.mxu0 0
  %439 = vmatpush2.bf16.msra.mxu0 0
  %440 = vmatprep.subr.bf16.mxu0 0
  %441 = vmatpush2.bf16.msra.mxu0 0
  %442 = vmatprep.subr.bf16.mxu0 0
  %443 = vmatpush2.bf16.msra.mxu0 0
  %444 = vmatprep.subr.bf16.mxu0 0
  %445 = vmatpush2.bf16.msra.mxu0 0
  %446 = vmatprep.subr.bf16.mxu0 0
  %447 = vmatpush2.bf16.msra.mxu0 0
  %448 = vmatprep.mubr.bf16.mxu0 0
  %449 = vmatmul.mubr.bf16.gmra.mxu0 %v414
  %v450 = vpop.f32.mrf.mxu0
  %v451 = vadd.f32 0.0, %v450
  %v452 = vpop.f32.mrf.mxu0
  %v453 = vpop.f32.mrf.mxu0
  %v454 = vpop.f32.mrf.mxu0
  %455 = vdwg.mxu0
  %v456 = vadd.f32 %v410, %v451
  %v457 = vmul.f32 %v456, 0.5
  %v458 = vtanh.pop %v457
  %v459 = vmul.f32 %v458, 0.5
  %v460 = vadd.f32 %v459, 0.5
  %v461 = vtanh.pop %v456
  %v462 = vmul.f32 %v460, %v393
  %464 = vrot.lane.b32.xlu0 %v461, 64
  %v465 = vpop.permute.xlu0 %464
  %v467 = vmul.f32 %v460, %v465
  %469 = vrot.lane.b32.xlu0 %v467, 32
  %v470 = vpop.permute.xlu0 %469
  %v472 = vadd.f32 %v462, %v470
  %v473 = vtanh.pop %v472
  %475 = vrot.lane.b32.xlu0 %v473, 64
  %v476 = vpop.permute.xlu0 %475
  %v478 = vmul.f32 %v460, %v476
  %v479 = vpack.c.bf16 %v478, %v478
  %v481 = vunpack.c.l.b16 %v479
  %v482 = vpack.c.b16 %v481, %v481
  %483 = vrot.lane.b32.xlu0 %v482, 32
  %v484 = vpop.permute.xlu0 %483
  %s486 = scalar_lea.vmem %s4, 12
  %487 = vst.msk [vmem:[%s486] sm:$0xf] %vm249, %v484
  %s488 = scalar_lea.vmem [#allocation4], 32
  %v489 = vld [vmem:[%s488] sm:$0xff]
  %490 = vrot.lane.b32.xlu0 %v479, 32
  %v491 = vpop.permute.xlu0 %490
  %v493 = vsel %vm171, %v491, 0
  %495 = vmatprep.subr.bf16.mxu0 0
  %496 = vmatpush1.bf16.msra.mxu0 0
  %497 = vmatprep.subr.bf16.mxu0 0
  %498 = vmatpush1.bf16.msra.mxu0 0
  %499 = vmatprep.subr.bf16.mxu0 0
  %500 = vmatpush1.bf16.msra.mxu0 0
  %501 = vmatprep.subr.bf16.mxu0 0
  %502 = vmatpush1.bf16.msra.mxu0 0
  %503 = vmatprep.subr.bf16.mxu0 0
  %504 = vmatpush1.bf16.msra.mxu0 0
  %505 = vmatprep.subr.bf16.mxu0 0
  %506 = vmatpush1.bf16.msra.mxu0 0
  %507 = vmatprep.subr.bf16.mxu0 0
  %508 = vmatpush1.bf16.msra.mxu0 %v168
  %509 = vmatprep.subr.bf16.mxu0 0
  %510 = vmatpush1.bf16.msra.mxu0 %v167
  %511 = vmatprep.subr.bf16.mxu0 0
  %512 = vmatpush2.bf16.msra.mxu0 0
  %513 = vmatprep.subr.bf16.mxu0 0
  %514 = vmatpush2.bf16.msra.mxu0 0
  %515 = vmatprep.subr.bf16.mxu0 0
  %516 = vmatpush2.bf16.msra.mxu0 0
  %517 = vmatprep.subr.bf16.mxu0 0
  %518 = vmatpush2.bf16.msra.mxu0 0
  %519 = vmatprep.subr.bf16.mxu0 0
  %520 = vmatpush2.bf16.msra.mxu0 0
  %521 = vmatprep.subr.bf16.mxu0 0
  %522 = vmatpush2.bf16.msra.mxu0 0
  %523 = vmatprep.subr.bf16.mxu0 0
  %524 = vmatpush2.bf16.msra.mxu0 0
  %525 = vmatprep.subr.bf16.mxu0 0
  %526 = vmatpush2.bf16.msra.mxu0 0
  %527 = vmatprep.mubr.bf16.mxu0 0
  %528 = vmatmul.mubr.bf16.gmra.mxu0 %v493
  %v529 = vpop.f32.mrf.mxu0
  %v530 = vadd.f32 0.0, %v529
  %v531 = vpop.f32.mrf.mxu0
  %v532 = vpop.f32.mrf.mxu0
  %v533 = vpop.f32.mrf.mxu0
  %534 = vdwg.mxu0
  %v535 = vadd.f32 %v489, %v530
  %v536 = vmul.f32 %v535, 0.5
  %v537 = vtanh.pop %v536
  %v538 = vmul.f32 %v537, 0.5
  %v539 = vadd.f32 %v538, 0.5
  %v540 = vtanh.pop %v535
  %v541 = vmul.f32 %v539, %v472
  %543 = vrot.lane.b32.xlu0 %v540, 64
  %v544 = vpop.permute.xlu0 %543
  %v546 = vmul.f32 %v539, %v544
  %548 = vrot.lane.b32.xlu0 %v546, 32
  %v549 = vpop.permute.xlu0 %548
  %v551 = vadd.f32 %v541, %v549
  %v552 = vtanh.pop %v551
  %554 = vrot.lane.b32.xlu0 %v552, 64
  %v555 = vpop.permute.xlu0 %554
  %v557 = vmul.f32 %v539, %v555
  %v558 = vpack.c.bf16 %v557, %v557
  %v560 = vunpack.c.l.b16 %v558
  %v561 = vpack.c.b16 %v560, %v560
  %562 = vrot.lane.b32.xlu0 %v561, 32
  %v563 = vpop.permute.xlu0 %562
  %s565 = scalar_lea.vmem %s4, 16
  %566 = vst.msk [vmem:[%s565] sm:$0xf] %vm249, %v563
  %s567 = scalar_lea.vmem [#allocation4], 40
  %v568 = vld [vmem:[%s567] sm:$0xff]
  %569 = vrot.lane.b32.xlu0 %v558, 32
  %v570 = vpop.permute.xlu0 %569
  %v572 = vsel %vm171, %v570, 0
  %574 = vmatprep.subr.bf16.mxu0 0
  %575 = vmatpush1.bf16.msra.mxu0 0
  %576 = vmatprep.subr.bf16.mxu0 0
  %577 = vmatpush1.bf16.msra.mxu0 0
  %578 = vmatprep.subr.bf16.mxu0 0
  %579 = vmatpush1.bf16.msra.mxu0 0
  %580 = vmatprep.subr.bf16.mxu0 0
  %581 = vmatpush1.bf16.msra.mxu0 0
  %582 = vmatprep.subr.bf16.mxu0 0
  %583 = vmatpush1.bf16.msra.mxu0 0
  %584 = vmatprep.subr.bf16.mxu0 0
  %585 = vmatpush1.bf16.msra.mxu0 0
  %586 = vmatprep.subr.bf16.mxu0 0
  %587 = vmatpush1.bf16.msra.mxu0 %v168
  %588 = vmatprep.subr.bf16.mxu0 0
  %589 = vmatpush1.bf16.msra.mxu0 %v167
  %590 = vmatprep.subr.bf16.mxu0 0
  %591 = vmatpush2.bf16.msra.mxu0 0
  %592 = vmatprep.subr.bf16.mxu0 0
  %593 = vmatpush2.bf16.msra.mxu0 0
  %594 = vmatprep.subr.bf16.mxu0 0
  %595 = vmatpush2.bf16.msra.mxu0 0
  %596 = vmatprep.subr.bf16.mxu0 0
  %597 = vmatpush2.bf16.msra.mxu0 0
  %598 = vmatprep.subr.bf16.mxu0 0
  %599 = vmatpush2.bf16.msra.mxu0 0
  %600 = vmatprep.subr.bf16.mxu0 0
  %601 = vmatpush2.bf16.msra.mxu0 0
  %602 = vmatprep.subr.bf16.mxu0 0
  %603 = vmatpush2.bf16.msra.mxu0 0
  %604 = vmatprep.subr.bf16.mxu0 0
  %605 = vmatpush2.bf16.msra.mxu0 0
  %606 = vmatprep.mubr.bf16.mxu0 0
  %607 = vmatmul.mubr.bf16.gmra.mxu0 %v572
  %v608 = vpop.f32.mrf.mxu0
  %v609 = vadd.f32 0.0, %v608
  %v610 = vpop.f32.mrf.mxu0
  %v611 = vpop.f32.mrf.mxu0
  %v612 = vpop.f32.mrf.mxu0
  %613 = vdwg.mxu0
  %v614 = vadd.f32 %v568, %v609
  %v615 = vmul.f32 %v614, 0.5
  %v616 = vtanh.pop %v615
  %v617 = vmul.f32 %v616, 0.5
  %v618 = vadd.f32 %v617, 0.5
  %v619 = vtanh.pop %v614
  %v620 = vmul.f32 %v618, %v551
  %622 = vrot.lane.b32.xlu0 %v619, 64
  %v623 = vpop.permute.xlu0 %622
  %v625 = vmul.f32 %v618, %v623
  %627 = vrot.lane.b32.xlu0 %v625, 32
  %v628 = vpop.permute.xlu0 %627
  %v630 = vadd.f32 %v620, %v628
  %v631 = vtanh.pop %v630
  %633 = vrot.lane.b32.xlu0 %v631, 64
  %v634 = vpop.permute.xlu0 %633
  %v636 = vmul.f32 %v618, %v634
  %v637 = vpack.c.bf16 %v636, %v636
  %v639 = vunpack.c.l.b16 %v637
  %v640 = vpack.c.b16 %v639, %v639
  %641 = vrot.lane.b32.xlu0 %v640, 32
  %v642 = vpop.permute.xlu0 %641
  %s644 = scalar_lea.vmem %s4, 20
  %645 = vst.msk [vmem:[%s644] sm:$0xf] %vm249, %v642
  %s646 = scalar_lea.vmem [#allocation4], 48
  %v647 = vld [vmem:[%s646] sm:$0xff]
  %648 = vrot.lane.b32.xlu0 %v637, 32
  %v649 = vpop.permute.xlu0 %648
  %v651 = vsel %vm171, %v649, 0
  %653 = vmatprep.subr.bf16.mxu0 0
  %654 = vmatpush1.bf16.msra.mxu0 0
  %655 = vmatprep.subr.bf16.mxu0 0
  %656 = vmatpush1.bf16.msra.mxu0 0
  %657 = vmatprep.subr.bf16.mxu0 0
  %658 = vmatpush1.bf16.msra.mxu0 0
  %659 = vmatprep.subr.bf16.mxu0 0
  %660 = vmatpush1.bf16.msra.mxu0 0
  %661 = vmatprep.subr.bf16.mxu0 0
  %662 = vmatpush1.bf16.msra.mxu0 0
  %663 = vmatprep.subr.bf16.mxu0 0
  %664 = vmatpush1.bf16.msra.mxu0 0
  %665 = vmatprep.subr.bf16.mxu0 0
  %666 = vmatpush1.bf16.msra.mxu0 %v168
  %667 = vmatprep.subr.bf16.mxu0 0
  %668 = vmatpush1.bf16.msra.mxu0 %v167
  %669 = vmatprep.subr.bf16.mxu0 0
  %670 = vmatpush2.bf16.msra.mxu0 0
  %671 = vmatprep.subr.bf16.mxu0 0
  %672 = vmatpush2.bf16.msra.mxu0 0
  %673 = vmatprep.subr.bf16.mxu0 0
  %674 = vmatpush2.bf16.msra.mxu0 0
  %675 = vmatprep.subr.bf16.mxu0 0
  %676 = vmatpush2.bf16.msra.mxu0 0
  %677 = vmatprep.subr.bf16.mxu0 0
  %678 = vmatpush2.bf16.msra.mxu0 0
  %679 = vmatprep.subr.bf16.mxu0 0
  %680 = vmatpush2.bf16.msra.mxu0 0
  %681 = vmatprep.subr.bf16.mxu0 0
  %682 = vmatpush2.bf16.msra.mxu0 0
  %683 = vmatprep.subr.bf16.mxu0 0
  %684 = vmatpush2.bf16.msra.mxu0 0
  %685 = vmatprep.mubr.bf16.mxu0 0
  %686 = vmatmul.mubr.bf16.gmra.mxu0 %v651
  %v687 = vpop.f32.mrf.mxu0
  %v688 = vadd.f32 0.0, %v687
  %v689 = vpop.f32.mrf.mxu0
  %v690 = vpop.f32.mrf.mxu0
  %v691 = vpop.f32.mrf.mxu0
  %692 = vdwg.mxu0
  %v693 = vadd.f32 %v647, %v688
  %v694 = vmul.f32 %v693, 0.5
  %v695 = vtanh.pop %v694
  %v696 = vmul.f32 %v695, 0.5
  %v697 = vadd.f32 %v696, 0.5
  %v698 = vtanh.pop %v693
  %v699 = vmul.f32 %v697, %v630
  %701 = vrot.lane.b32.xlu0 %v698, 64
  %v702 = vpop.permute.xlu0 %701
  %v704 = vmul.f32 %v697, %v702
  %706 = vrot.lane.b32.xlu0 %v704, 32
  %v707 = vpop.permute.xlu0 %706
  %v709 = vadd.f32 %v699, %v707
  %v710 = vtanh.pop %v709
  %712 = vrot.lane.b32.xlu0 %v710, 64
  %v713 = vpop.permute.xlu0 %712
  %v715 = vmul.f32 %v697, %v713
  %v716 = vpack.c.bf16 %v715, %v715
  %v718 = vunpack.c.l.b16 %v716
  %v719 = vpack.c.b16 %v718, %v718
  %720 = vrot.lane.b32.xlu0 %v719, 32
  %v721 = vpop.permute.xlu0 %720
  %s723 = scalar_lea.vmem %s4, 24
  %724 = vst.msk [vmem:[%s723] sm:$0xf] %vm249, %v721
  %s725 = scalar_lea.vmem [#allocation4], 56
  %v726 = vld [vmem:[%s725] sm:$0xff]
  %727 = vrot.lane.b32.xlu0 %v716, 32
  %v728 = vpop.permute.xlu0 %727
  %v730 = vsel %vm171, %v728, 0
  %732 = vmatprep.subr.bf16.mxu0 0
  %733 = vmatpush1.bf16.msra.mxu0 0
  %734 = vmatprep.subr.bf16.mxu0 0
  %735 = vmatpush1.bf16.msra.mxu0 0
  %736 = vmatprep.subr.bf16.mxu0 0
  %737 = vmatpush1.bf16.msra.mxu0 0
  %738 = vmatprep.subr.bf16.mxu0 0
  %739 = vmatpush1.bf16.msra.mxu0 0
  %740 = vmatprep.subr.bf16.mxu0 0
  %741 = vmatpush1.bf16.msra.mxu0 0
  %742 = vmatprep.subr.bf16.mxu0 0
  %743 = vmatpush1.bf16.msra.mxu0 0
  %744 = vmatprep.subr.bf16.mxu0 0
  %745 = vmatpush1.bf16.msra.mxu0 %v168
  %746 = vmatprep.subr.bf16.mxu0 0
  %747 = vmatpush1.bf16.msra.mxu0 %v167
  %748 = vmatprep.subr.bf16.mxu0 0
  %749 = vmatpush2.bf16.msra.mxu0 0
  %750 = vmatprep.subr.bf16.mxu0 0
  %751 = vmatpush2.bf16.msra.mxu0 0
  %752 = vmatprep.subr.bf16.mxu0 0
  %753 = vmatpush2.bf16.msra.mxu0 0
  %754 = vmatprep.subr.bf16.mxu0 0
  %755 = vmatpush2.bf16.msra.mxu0 0
  %756 = vmatprep.subr.bf16.mxu0 0
  %757 = vmatpush2.bf16.msra.mxu0 0
  %758 = vmatprep.subr.bf16.mxu0 0
  %759 = vmatpush2.bf16.msra.mxu0 0
  %760 = vmatprep.subr.bf16.mxu0 0
  %761 = vmatpush2.bf16.msra.mxu0 0
  %762 = vmatprep.subr.bf16.mxu0 0
  %763 = vmatpush2.bf16.msra.mxu0 0
  %764 = vmatprep.mubr.bf16.mxu0 0
  %765 = vmatmul.mubr.bf16.gmra.mxu0 %v730
  %v766 = vpop.f32.mrf.mxu0
  %v767 = vadd.f32 0.0, %v766
  %v768 = vpop.f32.mrf.mxu0
  %v769 = vpop.f32.mrf.mxu0
  %v770 = vpop.f32.mrf.mxu0
  %771 = vdwg.mxu0
  %v772 = vadd.f32 %v726, %v767
  %v773 = vmul.f32 %v772, 0.5
  %v774 = vtanh.pop %v773
  %v775 = vmul.f32 %v774, 0.5
  %v776 = vadd.f32 %v775, 0.5
  %v777 = vtanh.pop %v772
  %v778 = vmul.f32 %v776, %v709
  %780 = vrot.lane.b32.xlu0 %v777, 64
  %v781 = vpop.permute.xlu0 %780
  %v783 = vmul.f32 %v776, %v781
  %785 = vrot.lane.b32.xlu0 %v783, 32
  %v786 = vpop.permute.xlu0 %785
  %v788 = vadd.f32 %v778, %v786
  %v789 = vtanh.pop %v788
  %791 = vrot.lane.b32.xlu0 %v789, 64
  %v792 = vpop.permute.xlu0 %791
  %v794 = vmul.f32 %v776, %v792
  %v795 = vpack.c.bf16 %v794, %v794
  %v797 = vunpack.c.l.b16 %v795
  %v798 = vpack.c.b16 %v797, %v797
  %799 = vrot.lane.b32.xlu0 %v798, 32
  %v800 = vpop.permute.xlu0 %799
  %s802 = scalar_lea.vmem %s4, 28
  %803 = vst.msk [vmem:[%s802] sm:$0xf] %vm249, %v800
  %805 = vrot.lane.b32.xlu0 %v794, 32
  %v806 = vpop.permute.xlu0 %805
  %808 = vst.msk [vmem:[#allocation2] sm:$0xff] %vm171, %v806
  %810 = vrot.lane.b32.xlu0 %v788, 96
  %v811 = vpop.permute.xlu0 %810
  %813 = vst.msk [vmem:[#allocation3] sm:$0xff] %vm171, %v811
  // Predicated region
  $region22: #{lstm_model_forward.2} parent=0 // pred_check
    _
  $region23: #{lstm_model_forward.2} parent=0 // pred_check_branch
    %815 = sbr.rel (0) target = $region25
  $region24: #{lstm_model_forward.2} parent=0 // pred_region
    _
  $region25: #{lstm_model_forward.2} parent=0 // pred_fallthru
    _
  // Predicated region
  $region26: #{lstm_model_forward.2} parent=0 // pred_check
    _
  $region27: #{lstm_model_forward.2} parent=0 // pred_check_branch
    %817 = sbr.rel (0) target = $region29
  $region28: #{lstm_model_forward.2} parent=0 // pred_region
    _
  $region29: #{lstm_model_forward.2} parent=0 // pred_fallthru
    _

// kernel: lstm_model_forward.3
$region0: #{lstm_model_forward.3}
  #allocation0 [shape = 'u32[]', space=smem, size = 0x4, offset = 0x4, fixed_abs, tag = 'smem constant byte address 0x4 - core index']
  #allocation1 [shape = 'u32[144,128]{1,0:T(1,128)}', space=vmem, size = 0x12000, scoped, tag = 'internal scratch']
  #allocation2 [shape = 'f32[8,32]{1,0:T(8,128)}', space=vmem, size = 0x1000, scoped, tag = 'scratch operand']
  #allocation3 [shape = 'f32[8,32]{1,0:T(8,128)}', space=vmem, size = 0x1000, scoped, tag = 'scratch operand']
  #allocation4 [shape = 'f32[64,128]{1,0:T(8,128)}', space=vmem, size = 0x8000, scoped, tag = 'scratch operand']
  #allocation5 [shape = 'bf16[64,32]{1,0:T(8,128)(2,1)}', space=vmem, size = 0x4000, scoped, tag = 'scratch operand']
  %s0 = inlined_call_operand.vmem [shape: bf16[64,32], index: 0, kind: input, shape index: {}]
  %s1 = inlined_call_operand.vmem [shape: bf16[32,128], index: 1, kind: input, shape index: {}]
  %s2 = inlined_call_operand.vmem [shape: bf16[32,128], index: 2, kind: input, shape index: {}]
  %s3 = inlined_call_operand.vmem [shape: f32[1,128], index: 3, kind: input, shape index: {}]
  %s4 = inlined_call_operand.vmem [shape: bf16[32,128], index: 4, kind: input, shape index: {}]
  %s5 = inlined_call_operand.vmem [shape: f32[1,128], index: 5, kind: input, shape index: {}]
  %s6 = inlined_call_operand.vmem [shape: f32[64,128], index: 6, kind: output, shape index: {}]
  %s7 = sld [smem:[#allocation0]]
  $region38: #{lstm_model_forward.3} parent=0
    _
  %s9 = ssub.s32 1, %s7
  %s10 = scalar_select 0, %s9, %s7
  // Predicated region
  $region2: #{lstm_model_forward.3} parent=0 // pred_check
    _
  $region3: #{lstm_model_forward.3} parent=0 // pred_check_branch
    %12 = sbr.rel (0) target = $region5
  $region4: #{lstm_model_forward.3} parent=0 // pred_region
    _
  $region5: #{lstm_model_forward.3} parent=0 // pred_fallthru
    _
  // Predicated region
  $region6: #{lstm_model_forward.3} parent=0 // pred_check
    _
  $region7: #{lstm_model_forward.3} parent=0 // pred_check_branch
    %14 = sbr.rel (0) target = $region9
  $region8: #{lstm_model_forward.3} parent=0 // pred_region
    _
  $region9: #{lstm_model_forward.3} parent=0 // pred_fallthru
    _
  // Predicated region
  $region10: #{lstm_model_forward.3} parent=0 // pred_check
    _
  $region11: #{lstm_model_forward.3} parent=0 // pred_check_branch
    %16 = sbr.rel (0) target = $region13
  $region12: #{lstm_model_forward.3} parent=0 // pred_region
    _
  $region13: #{lstm_model_forward.3} parent=0 // pred_fallthru
    _
  // Predicated region
  $region14: #{lstm_model_forward.3} parent=0 // pred_check
    _
  $region15: #{lstm_model_forward.3} parent=0 // pred_check_branch
    %18 = sbr.rel (0) target = $region17
  $region16: #{lstm_model_forward.3} parent=0 // pred_region
    _
  $region17: #{lstm_model_forward.3} parent=0 // pred_fallthru
    _
  // Predicated region
  $region18: #{lstm_model_forward.3} parent=0 // pred_check
    _
  $region19: #{lstm_model_forward.3} parent=0 // pred_check_branch
    %20 = sbr.rel (0) target = $region21
  $region20: #{lstm_model_forward.3} parent=0 // pred_region
    _
  $region21: #{lstm_model_forward.3} parent=0 // pred_fallthru
    _
  // Predicated region
  $region22: #{lstm_model_forward.3} parent=0 // pred_check
    _
  $region23: #{lstm_model_forward.3} parent=0 // pred_check_branch
    %22 = sbr.rel (0) target = $region25
  $region24: #{lstm_model_forward.3} parent=0 // pred_region
    _
  $region25: #{lstm_model_forward.3} parent=0 // pred_fallthru
    _
  %p24 = scmp.eq.s32.totalorder 0, 0
  // Predicated region
  $region26: #{lstm_model_forward.3} parent=0 // pred_check
    %p25 = pneg %p24
  $region27: #{lstm_model_forward.3} parent=0 // pred_check_branch
    %27 = sbr.rel (%p25) target = $region29
  $region28: #{lstm_model_forward.3} parent=0 // pred_region
    %vm28 = vcmask 261120
    %29 = vst.msk [vmem:[#allocation2] sm:$0xff] %vm28, 0.0
    %30 = vst.msk [vmem:[#allocation3] sm:$0xff] %vm28, 0.0
  $region29: #{lstm_model_forward.3} parent=0 // pred_fallthru
    _
  %v31 = vld [vmem:[%s0] sm:$0xf]
  %v32 = vld [vmem:[%s0 + $0x4] sm:$0xf]
  %v33 = vld [vmem:[%s0 + $0x8] sm:$0xf]
  %v34 = vld [vmem:[%s0 + $0xc] sm:$0xf]
  %v35 = vld [vmem:[%s0 + $0x10] sm:$0xf]
  %v36 = vld [vmem:[%s0 + $0x14] sm:$0xf]
  %v37 = vld [vmem:[%s0 + $0x18] sm:$0xf]
  %v38 = vld [vmem:[%s0 + $0x1c] sm:$0xf]
  %v39 = vld [vmem:[%s1] sm:$0xf]
  %v40 = vld [vmem:[%s1 + $0x4] sm:$0xf]
  %v41 = vld [vmem:[%s1 + $0x8] sm:$0xf]
  %v42 = vld [vmem:[%s1 + $0xc] sm:$0xf]
  %v43 = vld [vmem:[%s3] sm:$0x1]
  %v45 = vlaneseq
  %v46 = vshrl.u32 %v45, 7
  %v47 = vsub.s32 0, %v46
  %v48 = vrot.slane %v43, %v47
  %v58 = vunpack.c.l.b16 %v31
  %v59 = vunpack.c.l.b16 %v32
  %v60 = vunpack.c.l.b16 %v33
  %v61 = vunpack.c.l.b16 %v34
  %v62 = vunpack.c.l.b16 %v35
  %v63 = vunpack.c.l.b16 %v36
  %v64 = vunpack.c.l.b16 %v37
  %v65 = vunpack.c.l.b16 %v38
  %v66 = vpack.c.b16 %v59, %v58
  %v67 = vpack.c.b16 %v61, %v60
  %v68 = vpack.c.b16 %v63, %v62
  %v69 = vpack.c.b16 %v65, %v64
  %v74 = vunpack.c.l.b16 %v39
  %v75 = vunpack.c.l.b16 %v40
  %v76 = vunpack.c.l.b16 %v41
  %v77 = vunpack.c.l.b16 %v42
  %v78 = vpack.c.b16 %v75, %v74
  %v79 = vpack.c.b16 %v77, %v76
  %vm82 = vcmask 261120
  %v84 = vsel %vm82, %v66, 0
  %v87 = vsel %vm82, %v67, 0
  %v90 = vsel %vm82, %v68, 0
  %v93 = vsel %vm82, %v69, 0
  %95 = vmatprep.subr.bf16.mxu0 0
  %96 = vmatpush1.bf16.msra.mxu0 0
  %97 = vmatprep.subr.bf16.mxu0 0
  %98 = vmatpush1.bf16.msra.mxu0 0
  %99 = vmatprep.subr.bf16.mxu0 0
  %100 = vmatpush1.bf16.msra.mxu0 0
  %101 = vmatprep.subr.bf16.mxu0 0
  %102 = vmatpush1.bf16.msra.mxu0 0
  %103 = vmatprep.subr.bf16.mxu0 0
  %104 = vmatpush1.bf16.msra.mxu0 0
  %105 = vmatprep.subr.bf16.mxu0 0
  %106 = vmatpush1.bf16.msra.mxu0 0
  %107 = vmatprep.subr.bf16.mxu0 0
  %108 = vmatpush1.bf16.msra.mxu0 %v79
  %109 = vmatprep.subr.bf16.mxu0 0
  %110 = vmatpush1.bf16.msra.mxu0 %v78
  %111 = vmatprep.subr.bf16.mxu0 0
  %112 = vmatpush2.bf16.msra.mxu0 0
  %113 = vmatprep.subr.bf16.mxu0 0
  %114 = vmatpush2.bf16.msra.mxu0 0
  %115 = vmatprep.subr.bf16.mxu0 0
  %116 = vmatpush2.bf16.msra.mxu0 0
  %117 = vmatprep.subr.bf16.mxu0 0
  %118 = vmatpush2.bf16.msra.mxu0 0
  %119 = vmatprep.subr.bf16.mxu0 0
  %120 = vmatpush2.bf16.msra.mxu0 0
  %121 = vmatprep.subr.bf16.mxu0 0
  %122 = vmatpush2.bf16.msra.mxu0 0
  %123 = vmatprep.subr.bf16.mxu0 0
  %124 = vmatpush2.bf16.msra.mxu0 0
  %125 = vmatprep.subr.bf16.mxu0 0
  %126 = vmatpush2.bf16.msra.mxu0 0
  %127 = vmatprep.mubr.bf16.mxu0 0
  %128 = vmatmul.mubr.bf16.gmra.mxu0 %v84
  %v129 = vpop.f32.mrf.mxu0
  %v130 = vadd.f32 %v48, %v129
  %v131 = vpop.f32.mrf.mxu0
  %v132 = vpop.f32.mrf.mxu0
  %v133 = vadd.f32 %v48, %v132
  %v134 = vpop.f32.mrf.mxu0
  %135 = vmatprep.mubr.bf16.mxu0 0
  %136 = vmatmul.mubr.bf16.gmra.mxu0 %v87
  %v137 = vpop.f32.mrf.mxu0
  %v138 = vadd.f32 %v48, %v137
  %v139 = vpop.f32.mrf.mxu0
  %v140 = vpop.f32.mrf.mxu0
  %v141 = vadd.f32 %v48, %v140
  %v142 = vpop.f32.mrf.mxu0
  %143 = vmatprep.mubr.bf16.mxu0 0
  %144 = vmatmul.mubr.bf16.gmra.mxu0 %v90
  %v145 = vpop.f32.mrf.mxu0
  %v146 = vadd.f32 %v48, %v145
  %v147 = vpop.f32.mrf.mxu0
  %v148 = vpop.f32.mrf.mxu0
  %v149 = vadd.f32 %v48, %v148
  %v150 = vpop.f32.mrf.mxu0
  %151 = vmatprep.mubr.bf16.mxu0 0
  %152 = vmatmul.mubr.bf16.gmra.mxu0 %v93
  %v153 = vpop.f32.mrf.mxu0
  %v154 = vadd.f32 %v48, %v153
  %v155 = vpop.f32.mrf.mxu0
  %v156 = vpop.f32.mrf.mxu0
  %v157 = vadd.f32 %v48, %v156
  %v158 = vpop.f32.mrf.mxu0
  %159 = vdwg.mxu0
  %160 = vst [vmem:[#allocation4] sm:$0xff] %v130
  %161 = vst [vmem:[#allocation4 + $0x8] sm:$0xff] %v133
  %162 = vst [vmem:[#allocation4 + $0x10] sm:$0xff] %v138
  %163 = vst [vmem:[#allocation4 + $0x18] sm:$0xff] %v141
  %164 = vst [vmem:[#allocation4 + $0x20] sm:$0xff] %v146
  %165 = vst [vmem:[#allocation4 + $0x28] sm:$0xff] %v149
  %166 = vst [vmem:[#allocation4 + $0x30] sm:$0xff] %v154
  %167 = vst [vmem:[#allocation4 + $0x38] sm:$0xff] %v157
  %v168 = vld [vmem:[%s2] sm:$0xf]
  %v169 = vld [vmem:[%s2 + $0x4] sm:$0xf]
  %v170 = vld [vmem:[%s2 + $0x8] sm:$0xf]
  %v171 = vld [vmem:[%s2 + $0xc] sm:$0xf]
  %v172 = vld [vmem:[#allocation2] sm:$0xff]
  %v173 = vld [vmem:[#allocation3] sm:$0xff]
  %v174 = vld [vmem:[#allocation4] sm:$0xff]
  %v175 = vpack.c.bf16 %v172, %v172
  %v180 = vunpack.c.l.b16 %v168
  %v181 = vunpack.c.l.b16 %v169
  %v182 = vunpack.c.l.b16 %v170
  %v183 = vunpack.c.l.b16 %v171
  %v184 = vpack.c.b16 %v181, %v180
  %v185 = vpack.c.b16 %v183, %v182
  %v189 = vsel %vm82, %v175, 0
  %191 = vmatprep.subr.bf16.mxu0 0
  %192 = vmatpush1.bf16.msra.mxu0 0
  %193 = vmatprep.subr.bf16.mxu0 0
  %194 = vmatpush1.bf16.msra.mxu0 0
  %195 = vmatprep.subr.bf16.mxu0 0
  %196 = vmatpush1.bf16.msra.mxu0 0
  %197 = vmatprep.subr.bf16.mxu0 0
  %198 = vmatpush1.bf16.msra.mxu0 0
  %199 = vmatprep.subr.bf16.mxu0 0
  %200 = vmatpush1.bf16.msra.mxu0 0
  %201 = vmatprep.subr.bf16.mxu0 0
  %202 = vmatpush1.bf16.msra.mxu0 0
  %203 = vmatprep.subr.bf16.mxu0 0
  %204 = vmatpush1.bf16.msra.mxu0 %v185
  %205 = vmatprep.subr.bf16.mxu0 0
  %206 = vmatpush1.bf16.msra.mxu0 %v184
  %207 = vmatprep.subr.bf16.mxu0 0
  %208 = vmatpush2.bf16.msra.mxu0 0
  %209 = vmatprep.subr.bf16.mxu0 0
  %210 = vmatpush2.bf16.msra.mxu0 0
  %211 = vmatprep.subr.bf16.mxu0 0
  %212 = vmatpush2.bf16.msra.mxu0 0
  %213 = vmatprep.subr.bf16.mxu0 0
  %214 = vmatpush2.bf16.msra.mxu0 0
  %215 = vmatprep.subr.bf16.mxu0 0
  %216 = vmatpush2.bf16.msra.mxu0 0
  %217 = vmatprep.subr.bf16.mxu0 0
  %218 = vmatpush2.bf16.msra.mxu0 0
  %219 = vmatprep.subr.bf16.mxu0 0
  %220 = vmatpush2.bf16.msra.mxu0 0
  %221 = vmatprep.subr.bf16.mxu0 0
  %222 = vmatpush2.bf16.msra.mxu0 0
  %223 = vmatprep.mubr.bf16.mxu0 0
  %224 = vmatmul.mubr.bf16.gmra.mxu0 %v189
  %v225 = vpop.f32.mrf.mxu0
  %v226 = vadd.f32 0.0, %v225
  %v227 = vpop.f32.mrf.mxu0
  %v228 = vpop.f32.mrf.mxu0
  %v229 = vpop.f32.mrf.mxu0
  %230 = vdwg.mxu0
  %v231 = vadd.f32 %v174, %v226
  %v232 = vmul.f32 %v231, 0.5
  %v233 = vtanh.pop %v232
  %v234 = vmul.f32 %v233, 0.5
  %v235 = vadd.f32 %v234, 0.5
  %v236 = vtanh.pop %v231
  %238 = vrot.lane.b32.xlu0 %v173, 32
  %v239 = vpop.permute.xlu0 %238
  %v241 = vmul.f32 %v235, %v239
  %243 = vrot.lane.b32.xlu0 %v236, 64
  %v244 = vpop.permute.xlu0 %243
  %v246 = vmul.f32 %v235, %v244
  %248 = vrot.lane.b32.xlu0 %v246, 32
  %v249 = vpop.permute.xlu0 %248
  %v251 = vadd.f32 %v241, %v249
  %v252 = vtanh.pop %v251
  %254 = vrot.lane.b32.xlu0 %v252, 64
  %v255 = vpop.permute.xlu0 %254
  %v257 = vmul.f32 %v235, %v255
  %v258 = vpack.c.bf16 %v257, %v257
  %v260 = vunpack.c.l.b16 %v258
  %v261 = vpack.c.b16 %v260, %v260
  %262 = vrot.lane.b32.xlu0 %v261, 32
  %v263 = vpop.permute.xlu0 %262
  %vm265 = vcmask 257024
  %266 = vst.msk [vmem:[#allocation5] sm:$0xf] %vm265, %v263
  %s267 = scalar_lea.vmem [#allocation4], 8
  %v268 = vld [vmem:[%s267] sm:$0xff]
  %269 = vrot.lane.b32.xlu0 %v258, 32
  %v270 = vpop.permute.xlu0 %269
  %v272 = vsel %vm82, %v270, 0
  %274 = vmatprep.subr.bf16.mxu0 0
  %275 = vmatpush1.bf16.msra.mxu0 0
  %276 = vmatprep.subr.bf16.mxu0 0
  %277 = vmatpush1.bf16.msra.mxu0 0
  %278 = vmatprep.subr.bf16.mxu0 0
  %279 = vmatpush1.bf16.msra.mxu0 0
  %280 = vmatprep.subr.bf16.mxu0 0
  %281 = vmatpush1.bf16.msra.mxu0 0
  %282 = vmatprep.subr.bf16.mxu0 0
  %283 = vmatpush1.bf16.msra.mxu0 0
  %284 = vmatprep.subr.bf16.mxu0 0
  %285 = vmatpush1.bf16.msra.mxu0 0
  %286 = vmatprep.subr.bf16.mxu0 0
  %287 = vmatpush1.bf16.msra.mxu0 %v185
  %288 = vmatprep.subr.bf16.mxu0 0
  %289 = vmatpush1.bf16.msra.mxu0 %v184
  %290 = vmatprep.subr.bf16.mxu0 0
  %291 = vmatpush2.bf16.msra.mxu0 0
  %292 = vmatprep.subr.bf16.mxu0 0
  %293 = vmatpush2.bf16.msra.mxu0 0
  %294 = vmatprep.subr.bf16.mxu0 0
  %295 = vmatpush2.bf16.msra.mxu0 0
  %296 = vmatprep.subr.bf16.mxu0 0
  %297 = vmatpush2.bf16.msra.mxu0 0
  %298 = vmatprep.subr.bf16.mxu0 0
  %299 = vmatpush2.bf16.msra.mxu0 0
  %300 = vmatprep.subr.bf16.mxu0 0
  %301 = vmatpush2.bf16.msra.mxu0 0
  %302 = vmatprep.subr.bf16.mxu0 0
  %303 = vmatpush2.bf16.msra.mxu0 0
  %304 = vmatprep.subr.bf16.mxu0 0
  %305 = vmatpush2.bf16.msra.mxu0 0
  %306 = vmatprep.mubr.bf16.mxu0 0
  %307 = vmatmul.mubr.bf16.gmra.mxu0 %v272
  %v308 = vpop.f32.mrf.mxu0
  %v309 = vadd.f32 0.0, %v308
  %v310 = vpop.f32.mrf.mxu0
  %v311 = vpop.f32.mrf.mxu0
  %v312 = vpop.f32.mrf.mxu0
  %313 = vdwg.mxu0
  %v314 = vadd.f32 %v268, %v309
  %v315 = vmul.f32 %v314, 0.5
  %v316 = vtanh.pop %v315
  %v317 = vmul.f32 %v316, 0.5
  %v318 = vadd.f32 %v317, 0.5
  %v319 = vtanh.pop %v314
  %v320 = vmul.f32 %v318, %v251
  %322 = vrot.lane.b32.xlu0 %v319, 64
  %v323 = vpop.permute.xlu0 %322
  %v325 = vmul.f32 %v318, %v323
  %327 = vrot.lane.b32.xlu0 %v325, 32
  %v328 = vpop.permute.xlu0 %327
  %v330 = vadd.f32 %v320, %v328
  %v331 = vtanh.pop %v330
  %333 = vrot.lane.b32.xlu0 %v331, 64
  %v334 = vpop.permute.xlu0 %333
  %v336 = vmul.f32 %v318, %v334
  %v337 = vpack.c.bf16 %v336, %v336
  %v339 = vunpack.c.l.b16 %v337
  %v340 = vpack.c.b16 %v339, %v339
  %341 = vrot.lane.b32.xlu0 %v340, 32
  %v342 = vpop.permute.xlu0 %341
  %s344 = scalar_lea.vmem [#allocation5], 4
  %345 = vst.msk [vmem:[%s344] sm:$0xf] %vm265, %v342
  %s346 = scalar_lea.vmem [#allocation4], 16
  %v347 = vld [vmem:[%s346] sm:$0xff]
  %348 = vrot.lane.b32.xlu0 %v337, 32
  %v349 = vpop.permute.xlu0 %348
  %v351 = vsel %vm82, %v349, 0
  %353 = vmatprep.subr.bf16.mxu0 0
  %354 = vmatpush1.bf16.msra.mxu0 0
  %355 = vmatprep.subr.bf16.mxu0 0
  %356 = vmatpush1.bf16.msra.mxu0 0
  %357 = vmatprep.subr.bf16.mxu0 0
  %358 = vmatpush1.bf16.msra.mxu0 0
  %359 = vmatprep.subr.bf16.mxu0 0
  %360 = vmatpush1.bf16.msra.mxu0 0
  %361 = vmatprep.subr.bf16.mxu0 0
  %362 = vmatpush1.bf16.msra.mxu0 0
  %363 = vmatprep.subr.bf16.mxu0 0
  %364 = vmatpush1.bf16.msra.mxu0 0
  %365 = vmatprep.subr.bf16.mxu0 0
  %366 = vmatpush1.bf16.msra.mxu0 %v185
  %367 = vmatprep.subr.bf16.mxu0 0
  %368 = vmatpush1.bf16.msra.mxu0 %v184
  %369 = vmatprep.subr.bf16.mxu0 0
  %370 = vmatpush2.bf16.msra.mxu0 0
  %371 = vmatprep.subr.bf16.mxu0 0
  %372 = vmatpush2.bf16.msra.mxu0 0
  %373 = vmatprep.subr.bf16.mxu0 0
  %374 = vmatpush2.bf16.msra.mxu0 0
  %375 = vmatprep.subr.bf16.mxu0 0
  %376 = vmatpush2.bf16.msra.mxu0 0
  %377 = vmatprep.subr.bf16.mxu0 0
  %378 = vmatpush2.bf16.msra.mxu0 0
  %379 = vmatprep.subr.bf16.mxu0 0
  %380 = vmatpush2.bf16.msra.mxu0 0
  %381 = vmatprep.subr.bf16.mxu0 0
  %382 = vmatpush2.bf16.msra.mxu0 0
  %383 = vmatprep.subr.bf16.mxu0 0
  %384 = vmatpush2.bf16.msra.mxu0 0
  %385 = vmatprep.mubr.bf16.mxu0 0
  %386 = vmatmul.mubr.bf16.gmra.mxu0 %v351
  %v387 = vpop.f32.mrf.mxu0
  %v388 = vadd.f32 0.0, %v387
  %v389 = vpop.f32.mrf.mxu0
  %v390 = vpop.f32.mrf.mxu0
  %v391 = vpop.f32.mrf.mxu0
  %392 = vdwg.mxu0
  %v393 = vadd.f32 %v347, %v388
  %v394 = vmul.f32 %v393, 0.5
  %v395 = vtanh.pop %v394
  %v396 = vmul.f32 %v395, 0.5
  %v397 = vadd.f32 %v396, 0.5
  %v398 = vtanh.pop %v393
  %v399 = vmul.f32 %v397, %v330
  %401 = vrot.lane.b32.xlu0 %v398, 64
  %v402 = vpop.permute.xlu0 %401
  %v404 = vmul.f32 %v397, %v402
  %406 = vrot.lane.b32.xlu0 %v404, 32
  %v407 = vpop.permute.xlu0 %406
  %v409 = vadd.f32 %v399, %v407
  %v410 = vtanh.pop %v409
  %412 = vrot.lane.b32.xlu0 %v410, 64
  %v413 = vpop.permute.xlu0 %412
  %v415 = vmul.f32 %v397, %v413
  %v416 = vpack.c.bf16 %v415, %v415
  %v418 = vunpack.c.l.b16 %v416
  %v419 = vpack.c.b16 %v418, %v418
  %420 = vrot.lane.b32.xlu0 %v419, 32
  %v421 = vpop.permute.xlu0 %420
  %s423 = scalar_lea.vmem [#allocation5], 8
  %424 = vst.msk [vmem:[%s423] sm:$0xf] %vm265, %v421
  %s425 = scalar_lea.vmem [#allocation4], 24
  %v426 = vld [vmem:[%s425] sm:$0xff]
  %427 = vrot.lane.b32.xlu0 %v416, 32
  %v428 = vpop.permute.xlu0 %427
  %v430 = vsel %vm82, %v428, 0
  %432 = vmatprep.subr.bf16.mxu0 0
  %433 = vmatpush1.bf16.msra.mxu0 0
  %434 = vmatprep.subr.bf16.mxu0 0
  %435 = vmatpush1.bf16.msra.mxu0 0
  %436 = vmatprep.subr.bf16.mxu0 0
  %437 = vmatpush1.bf16.msra.mxu0 0
  %438 = vmatprep.subr.bf16.mxu0 0
  %439 = vmatpush1.bf16.msra.mxu0 0
  %440 = vmatprep.subr.bf16.mxu0 0
  %441 = vmatpush1.bf16.msra.mxu0 0
  %442 = vmatprep.subr.bf16.mxu0 0
  %443 = vmatpush1.bf16.msra.mxu0 0
  %444 = vmatprep.subr.bf16.mxu0 0
  %445 = vmatpush1.bf16.msra.mxu0 %v185
  %446 = vmatprep.subr.bf16.mxu0 0
  %447 = vmatpush1.bf16.msra.mxu0 %v184
  %448 = vmatprep.subr.bf16.mxu0 0
  %449 = vmatpush2.bf16.msra.mxu0 0
  %450 = vmatprep.subr.bf16.mxu0 0
  %451 = vmatpush2.bf16.msra.mxu0 0
  %452 = vmatprep.subr.bf16.mxu0 0
  %453 = vmatpush2.bf16.msra.mxu0 0
  %454 = vmatprep.subr.bf16.mxu0 0
  %455 = vmatpush2.bf16.msra.mxu0 0
  %456 = vmatprep.subr.bf16.mxu0 0
  %457 = vmatpush2.bf16.msra.mxu0 0
  %458 = vmatprep.subr.bf16.mxu0 0
  %459 = vmatpush2.bf16.msra.mxu0 0
  %460 = vmatprep.subr.bf16.mxu0 0
  %461 = vmatpush2.bf16.msra.mxu0 0
  %462 = vmatprep.subr.bf16.mxu0 0
  %463 = vmatpush2.bf16.msra.mxu0 0
  %464 = vmatprep.mubr.bf16.mxu0 0
  %465 = vmatmul.mubr.bf16.gmra.mxu0 %v430
  %v466 = vpop.f32.mrf.mxu0
  %v467 = vadd.f32 0.0, %v466
  %v468 = vpop.f32.mrf.mxu0
  %v469 = vpop.f32.mrf.mxu0
  %v470 = vpop.f32.mrf.mxu0
  %471 = vdwg.mxu0
  %v472 = vadd.f32 %v426, %v467
  %v473 = vmul.f32 %v472, 0.5
  %v474 = vtanh.pop %v473
  %v475 = vmul.f32 %v474, 0.5
  %v476 = vadd.f32 %v475, 0.5
  %v477 = vtanh.pop %v472
  %v478 = vmul.f32 %v476, %v409
  %480 = vrot.lane.b32.xlu0 %v477, 64
  %v481 = vpop.permute.xlu0 %480
  %v483 = vmul.f32 %v476, %v481
  %485 = vrot.lane.b32.xlu0 %v483, 32
  %v486 = vpop.permute.xlu0 %485
  %v488 = vadd.f32 %v478, %v486
  %v489 = vtanh.pop %v488
  %491 = vrot.lane.b32.xlu0 %v489, 64
  %v492 = vpop.permute.xlu0 %491
  %v494 = vmul.f32 %v476, %v492
  %v495 = vpack.c.bf16 %v494, %v494
  %v497 = vunpack.c.l.b16 %v495
  %v498 = vpack.c.b16 %v497, %v497
  %499 = vrot.lane.b32.xlu0 %v498, 32
  %v500 = vpop.permute.xlu0 %499
  %s502 = scalar_lea.vmem [#allocation5], 12
  %503 = vst.msk [vmem:[%s502] sm:$0xf] %vm265, %v500
  %s504 = scalar_lea.vmem [#allocation4], 32
  %v505 = vld [vmem:[%s504] sm:$0xff]
  %506 = vrot.lane.b32.xlu0 %v495, 32
  %v507 = vpop.permute.xlu0 %506
  %v509 = vsel %vm82, %v507, 0
  %511 = vmatprep.subr.bf16.mxu0 0
  %512 = vmatpush1.bf16.msra.mxu0 0
  %513 = vmatprep.subr.bf16.mxu0 0
  %514 = vmatpush1.bf16.msra.mxu0 0
  %515 = vmatprep.subr.bf16.mxu0 0
  %516 = vmatpush1.bf16.msra.mxu0 0
  %517 = vmatprep.subr.bf16.mxu0 0
  %518 = vmatpush1.bf16.msra.mxu0 0
  %519 = vmatprep.subr.bf16.mxu0 0
  %520 = vmatpush1.bf16.msra.mxu0 0
  %521 = vmatprep.subr.bf16.mxu0 0
  %522 = vmatpush1.bf16.msra.mxu0 0
  %523 = vmatprep.subr.bf16.mxu0 0
  %524 = vmatpush1.bf16.msra.mxu0 %v185
  %525 = vmatprep.subr.bf16.mxu0 0
  %526 = vmatpush1.bf16.msra.mxu0 %v184
  %527 = vmatprep.subr.bf16.mxu0 0
  %528 = vmatpush2.bf16.msra.mxu0 0
  %529 = vmatprep.subr.bf16.mxu0 0
  %530 = vmatpush2.bf16.msra.mxu0 0
  %531 = vmatprep.subr.bf16.mxu0 0
  %532 = vmatpush2.bf16.msra.mxu0 0
  %533 = vmatprep.subr.bf16.mxu0 0
  %534 = vmatpush2.bf16.msra.mxu0 0
  %535 = vmatprep.subr.bf16.mxu0 0
  %536 = vmatpush2.bf16.msra.mxu0 0
  %537 = vmatprep.subr.bf16.mxu0 0
  %538 = vmatpush2.bf16.msra.mxu0 0
  %539 = vmatprep.subr.bf16.mxu0 0
  %540 = vmatpush2.bf16.msra.mxu0 0
  %541 = vmatprep.subr.bf16.mxu0 0
  %542 = vmatpush2.bf16.msra.mxu0 0
  %543 = vmatprep.mubr.bf16.mxu0 0
  %544 = vmatmul.mubr.bf16.gmra.mxu0 %v509
  %v545 = vpop.f32.mrf.mxu0
  %v546 = vadd.f32 0.0, %v545
  %v547 = vpop.f32.mrf.mxu0
  %v548 = vpop.f32.mrf.mxu0
  %v549 = vpop.f32.mrf.mxu0
  %550 = vdwg.mxu0
  %v551 = vadd.f32 %v505, %v546
  %v552 = vmul.f32 %v551, 0.5
  %v553 = vtanh.pop %v552
  %v554 = vmul.f32 %v553, 0.5
  %v555 = vadd.f32 %v554, 0.5
  %v556 = vtanh.pop %v551
  %v557 = vmul.f32 %v555, %v488
  %559 = vrot.lane.b32.xlu0 %v556, 64
  %v560 = vpop.permute.xlu0 %559
  %v562 = vmul.f32 %v555, %v560
  %564 = vrot.lane.b32.xlu0 %v562, 32
  %v565 = vpop.permute.xlu0 %564
  %v567 = vadd.f32 %v557, %v565
  %v568 = vtanh.pop %v567
  %570 = vrot.lane.b32.xlu0 %v568, 64
  %v571 = vpop.permute.xlu0 %570
  %v573 = vmul.f32 %v555, %v571
  %v574 = vpack.c.bf16 %v573, %v573
  %v576 = vunpack.c.l.b16 %v574
  %v577 = vpack.c.b16 %v576, %v576
  %578 = vrot.lane.b32.xlu0 %v577, 32
  %v579 = vpop.permute.xlu0 %578
  %s581 = scalar_lea.vmem [#allocation5], 16
  %582 = vst.msk [vmem:[%s581] sm:$0xf] %vm265, %v579
  %s583 = scalar_lea.vmem [#allocation4], 40
  %v584 = vld [vmem:[%s583] sm:$0xff]
  %585 = vrot.lane.b32.xlu0 %v574, 32
  %v586 = vpop.permute.xlu0 %585
  %v588 = vsel %vm82, %v586, 0
  %590 = vmatprep.subr.bf16.mxu0 0
  %591 = vmatpush1.bf16.msra.mxu0 0
  %592 = vmatprep.subr.bf16.mxu0 0
  %593 = vmatpush1.bf16.msra.mxu0 0
  %594 = vmatprep.subr.bf16.mxu0 0
  %595 = vmatpush1.bf16.msra.mxu0 0
  %596 = vmatprep.subr.bf16.mxu0 0
  %597 = vmatpush1.bf16.msra.mxu0 0
  %598 = vmatprep.subr.bf16.mxu0 0
  %599 = vmatpush1.bf16.msra.mxu0 0
  %600 = vmatprep.subr.bf16.mxu0 0
  %601 = vmatpush1.bf16.msra.mxu0 0
  %602 = vmatprep.subr.bf16.mxu0 0
  %603 = vmatpush1.bf16.msra.mxu0 %v185
  %604 = vmatprep.subr.bf16.mxu0 0
  %605 = vmatpush1.bf16.msra.mxu0 %v184
  %606 = vmatprep.subr.bf16.mxu0 0
  %607 = vmatpush2.bf16.msra.mxu0 0
  %608 = vmatprep.subr.bf16.mxu0 0
  %609 = vmatpush2.bf16.msra.mxu0 0
  %610 = vmatprep.subr.bf16.mxu0 0
  %611 = vmatpush2.bf16.msra.mxu0 0
  %612 = vmatprep.subr.bf16.mxu0 0
  %613 = vmatpush2.bf16.msra.mxu0 0
  %614 = vmatprep.subr.bf16.mxu0 0
  %615 = vmatpush2.bf16.msra.mxu0 0
  %616 = vmatprep.subr.bf16.mxu0 0
  %617 = vmatpush2.bf16.msra.mxu0 0
  %618 = vmatprep.subr.bf16.mxu0 0
  %619 = vmatpush2.bf16.msra.mxu0 0
  %620 = vmatprep.subr.bf16.mxu0 0
  %621 = vmatpush2.bf16.msra.mxu0 0
  %622 = vmatprep.mubr.bf16.mxu0 0
  %623 = vmatmul.mubr.bf16.gmra.mxu0 %v588
  %v624 = vpop.f32.mrf.mxu0
  %v625 = vadd.f32 0.0, %v624
  %v626 = vpop.f32.mrf.mxu0
  %v627 = vpop.f32.mrf.mxu0
  %v628 = vpop.f32.mrf.mxu0
  %629 = vdwg.mxu0
  %v630 = vadd.f32 %v584, %v625
  %v631 = vmul.f32 %v630, 0.5
  %v632 = vtanh.pop %v631
  %v633 = vmul.f32 %v632, 0.5
  %v634 = vadd.f32 %v633, 0.5
  %v635 = vtanh.pop %v630
  %v636 = vmul.f32 %v634, %v567
  %638 = vrot.lane.b32.xlu0 %v635, 64
  %v639 = vpop.permute.xlu0 %638
  %v641 = vmul.f32 %v634, %v639
  %643 = vrot.lane.b32.xlu0 %v641, 32
  %v644 = vpop.permute.xlu0 %643
  %v646 = vadd.f32 %v636, %v644
  %v647 = vtanh.pop %v646
  %649 = vrot.lane.b32.xlu0 %v647, 64
  %v650 = vpop.permute.xlu0 %649
  %v652 = vmul.f32 %v634, %v650
  %v653 = vpack.c.bf16 %v652, %v652
  %v655 = vunpack.c.l.b16 %v653
  %v656 = vpack.c.b16 %v655, %v655
  %657 = vrot.lane.b32.xlu0 %v656, 32
  %v658 = vpop.permute.xlu0 %657
  %s660 = scalar_lea.vmem [#allocation5], 20
  %661 = vst.msk [vmem:[%s660] sm:$0xf] %vm265, %v658
  %s662 = scalar_lea.vmem [#allocation4], 48
  %v663 = vld [vmem:[%s662] sm:$0xff]
  %664 = vrot.lane.b32.xlu0 %v653, 32
  %v665 = vpop.permute.xlu0 %664
  %v667 = vsel %vm82, %v665, 0
  %669 = vmatprep.subr.bf16.mxu0 0
  %670 = vmatpush1.bf16.msra.mxu0 0
  %671 = vmatprep.subr.bf16.mxu0 0
  %672 = vmatpush1.bf16.msra.mxu0 0
  %673 = vmatprep.subr.bf16.mxu0 0
  %674 = vmatpush1.bf16.msra.mxu0 0
  %675 = vmatprep.subr.bf16.mxu0 0
  %676 = vmatpush1.bf16.msra.mxu0 0
  %677 = vmatprep.subr.bf16.mxu0 0
  %678 = vmatpush1.bf16.msra.mxu0 0
  %679 = vmatprep.subr.bf16.mxu0 0
  %680 = vmatpush1.bf16.msra.mxu0 0
  %681 = vmatprep.subr.bf16.mxu0 0
  %682 = vmatpush1.bf16.msra.mxu0 %v185
  %683 = vmatprep.subr.bf16.mxu0 0
  %684 = vmatpush1.bf16.msra.mxu0 %v184
  %685 = vmatprep.subr.bf16.mxu0 0
  %686 = vmatpush2.bf16.msra.mxu0 0
  %687 = vmatprep.subr.bf16.mxu0 0
  %688 = vmatpush2.bf16.msra.mxu0 0
  %689 = vmatprep.subr.bf16.mxu0 0
  %690 = vmatpush2.bf16.msra.mxu0 0
  %691 = vmatprep.subr.bf16.mxu0 0
  %692 = vmatpush2.bf16.msra.mxu0 0
  %693 = vmatprep.subr.bf16.mxu0 0
  %694 = vmatpush2.bf16.msra.mxu0 0
  %695 = vmatprep.subr.bf16.mxu0 0
  %696 = vmatpush2.bf16.msra.mxu0 0
  %697 = vmatprep.subr.bf16.mxu0 0
  %698 = vmatpush2.bf16.msra.mxu0 0
  %699 = vmatprep.subr.bf16.mxu0 0
  %700 = vmatpush2.bf16.msra.mxu0 0
  %701 = vmatprep.mubr.bf16.mxu0 0
  %702 = vmatmul.mubr.bf16.gmra.mxu0 %v667
  %v703 = vpop.f32.mrf.mxu0
  %v704 = vadd.f32 0.0, %v703
  %v705 = vpop.f32.mrf.mxu0
  %v706 = vpop.f32.mrf.mxu0
  %v707 = vpop.f32.mrf.mxu0
  %708 = vdwg.mxu0
  %v709 = vadd.f32 %v663, %v704
  %v710 = vmul.f32 %v709, 0.5
  %v711 = vtanh.pop %v710
  %v712 = vmul.f32 %v711, 0.5
  %v713 = vadd.f32 %v712, 0.5
  %v714 = vtanh.pop %v709
  %v715 = vmul.f32 %v713, %v646
  %717 = vrot.lane.b32.xlu0 %v714, 64
  %v718 = vpop.permute.xlu0 %717
  %v720 = vmul.f32 %v713, %v718
  %722 = vrot.lane.b32.xlu0 %v720, 32
  %v723 = vpop.permute.xlu0 %722
  %v725 = vadd.f32 %v715, %v723
  %v726 = vtanh.pop %v725
  %728 = vrot.lane.b32.xlu0 %v726, 64
  %v729 = vpop.permute.xlu0 %728
  %v731 = vmul.f32 %v713, %v729
  %v732 = vpack.c.bf16 %v731, %v731
  %v734 = vunpack.c.l.b16 %v732
  %v735 = vpack.c.b16 %v734, %v734
  %736 = vrot.lane.b32.xlu0 %v735, 32
  %v737 = vpop.permute.xlu0 %736
  %s739 = scalar_lea.vmem [#allocation5], 24
  %740 = vst.msk [vmem:[%s739] sm:$0xf] %vm265, %v737
  %s741 = scalar_lea.vmem [#allocation4], 56
  %v742 = vld [vmem:[%s741] sm:$0xff]
  %743 = vrot.lane.b32.xlu0 %v732, 32
  %v744 = vpop.permute.xlu0 %743
  %v746 = vsel %vm82, %v744, 0
  %748 = vmatprep.subr.bf16.mxu0 0
  %749 = vmatpush1.bf16.msra.mxu0 0
  %750 = vmatprep.subr.bf16.mxu0 0
  %751 = vmatpush1.bf16.msra.mxu0 0
  %752 = vmatprep.subr.bf16.mxu0 0
  %753 = vmatpush1.bf16.msra.mxu0 0
  %754 = vmatprep.subr.bf16.mxu0 0
  %755 = vmatpush1.bf16.msra.mxu0 0
  %756 = vmatprep.subr.bf16.mxu0 0
  %757 = vmatpush1.bf16.msra.mxu0 0
  %758 = vmatprep.subr.bf16.mxu0 0
  %759 = vmatpush1.bf16.msra.mxu0 0
  %760 = vmatprep.subr.bf16.mxu0 0
  %761 = vmatpush1.bf16.msra.mxu0 %v185
  %762 = vmatprep.subr.bf16.mxu0 0
  %763 = vmatpush1.bf16.msra.mxu0 %v184
  %764 = vmatprep.subr.bf16.mxu0 0
  %765 = vmatpush2.bf16.msra.mxu0 0
  %766 = vmatprep.subr.bf16.mxu0 0
  %767 = vmatpush2.bf16.msra.mxu0 0
  %768 = vmatprep.subr.bf16.mxu0 0
  %769 = vmatpush2.bf16.msra.mxu0 0
  %770 = vmatprep.subr.bf16.mxu0 0
  %771 = vmatpush2.bf16.msra.mxu0 0
  %772 = vmatprep.subr.bf16.mxu0 0
  %773 = vmatpush2.bf16.msra.mxu0 0
  %774 = vmatprep.subr.bf16.mxu0 0
  %775 = vmatpush2.bf16.msra.mxu0 0
  %776 = vmatprep.subr.bf16.mxu0 0
  %777 = vmatpush2.bf16.msra.mxu0 0
  %778 = vmatprep.subr.bf16.mxu0 0
  %779 = vmatpush2.bf16.msra.mxu0 0
  %780 = vmatprep.mubr.bf16.mxu0 0
  %781 = vmatmul.mubr.bf16.gmra.mxu0 %v746
  %v782 = vpop.f32.mrf.mxu0
  %v783 = vadd.f32 0.0, %v782
  %v784 = vpop.f32.mrf.mxu0
  %v785 = vpop.f32.mrf.mxu0
  %v786 = vpop.f32.mrf.mxu0
  %787 = vdwg.mxu0
  %v788 = vadd.f32 %v742, %v783
  %v789 = vmul.f32 %v788, 0.5
  %v790 = vtanh.pop %v789
  %v791 = vmul.f32 %v790, 0.5
  %v792 = vadd.f32 %v791, 0.5
  %v793 = vtanh.pop %v788
  %v794 = vmul.f32 %v792, %v725
  %796 = vrot.lane.b32.xlu0 %v793, 64
  %v797 = vpop.permute.xlu0 %796
  %v799 = vmul.f32 %v792, %v797
  %801 = vrot.lane.b32.xlu0 %v799, 32
  %v802 = vpop.permute.xlu0 %801
  %v804 = vadd.f32 %v794, %v802
  %v805 = vtanh.pop %v804
  %807 = vrot.lane.b32.xlu0 %v805, 64
  %v808 = vpop.permute.xlu0 %807
  %v810 = vmul.f32 %v792, %v808
  %v811 = vpack.c.bf16 %v810, %v810
  %v813 = vunpack.c.l.b16 %v811
  %v814 = vpack.c.b16 %v813, %v813
  %815 = vrot.lane.b32.xlu0 %v814, 32
  %v816 = vpop.permute.xlu0 %815
  %s818 = scalar_lea.vmem [#allocation5], 28
  %819 = vst.msk [vmem:[%s818] sm:$0xf] %vm265, %v816
  %821 = vrot.lane.b32.xlu0 %v810, 32
  %v822 = vpop.permute.xlu0 %821
  %824 = vst.msk [vmem:[#allocation2] sm:$0xff] %vm82, %v822
  %826 = vrot.lane.b32.xlu0 %v804, 96
  %v827 = vpop.permute.xlu0 %826
  %829 = vst.msk [vmem:[#allocation3] sm:$0xff] %vm82, %v827
  %v830 = vld [vmem:[#allocation5] sm:$0xf]
  %v831 = vld [vmem:[#allocation5 + $0x4] sm:$0xf]
  %v832 = vld [vmem:[#allocation5 + $0x8] sm:$0xf]
  %v833 = vld [vmem:[#allocation5 + $0xc] sm:$0xf]
  %v834 = vld [vmem:[#allocation5 + $0x10] sm:$0xf]
  %v835 = vld [vmem:[#allocation5 + $0x14] sm:$0xf]
  %v836 = vld [vmem:[#allocation5 + $0x18] sm:$0xf]
  %v837 = vld [vmem:[#allocation5 + $0x1c] sm:$0xf]
  %v838 = vld [vmem:[%s4] sm:$0xf]
  %v839 = vld [vmem:[%s4 + $0x4] sm:$0xf]
  %v840 = vld [vmem:[%s4 + $0x8] sm:$0xf]
  %v841 = vld [vmem:[%s4 + $0xc] sm:$0xf]
  %v842 = vld [vmem:[%s5] sm:$0x1]
  %v844 = vlaneseq
  %v845 = vshrl.u32 %v844, 7
  %v846 = vsub.s32 0, %v845
  %v847 = vrot.slane %v842, %v846
  %v857 = vunpack.c.l.b16 %v830
  %v858 = vunpack.c.l.b16 %v831
  %v859 = vunpack.c.l.b16 %v832
  %v860 = vunpack.c.l.b16 %v833
  %v861 = vunpack.c.l.b16 %v834
  %v862 = vunpack.c.l.b16 %v835
  %v863 = vunpack.c.l.b16 %v836
  %v864 = vunpack.c.l.b16 %v837
  %v865 = vpack.c.b16 %v858, %v857
  %v866 = vpack.c.b16 %v860, %v859
  %v867 = vpack.c.b16 %v862, %v861
  %v868 = vpack.c.b16 %v864, %v863
  %v873 = vunpack.c.l.b16 %v838
  %v874 = vunpack.c.l.b16 %v839
  %v875 = vunpack.c.l.b16 %v840
  %v876 = vunpack.c.l.b16 %v841
  %v877 = vpack.c.b16 %v874, %v873
  %v878 = vpack.c.b16 %v876, %v875
  %v882 = vsel %vm82, %v865, 0
  %v885 = vsel %vm82, %v866, 0
  %v888 = vsel %vm82, %v867, 0
  %v891 = vsel %vm82, %v868, 0
  %893 = vmatprep.subr.bf16.mxu0 0
  %894 = vmatpush1.bf16.msra.mxu0 0
  %895 = vmatprep.subr.bf16.mxu0 0
  %896 = vmatpush1.bf16.msra.mxu0 0
  %897 = vmatprep.subr.bf16.mxu0 0
  %898 = vmatpush1.bf16.msra.mxu0 0
  %899 = vmatprep.subr.bf16.mxu0 0
  %900 = vmatpush1.bf16.msra.mxu0 0
  %901 = vmatprep.subr.bf16.mxu0 0
  %902 = vmatpush1.bf16.msra.mxu0 0
  %903 = vmatprep.subr.bf16.mxu0 0
  %904 = vmatpush1.bf16.msra.mxu0 0
  %905 = vmatprep.subr.bf16.mxu0 0
  %906 = vmatpush1.bf16.msra.mxu0 %v878
  %907 = vmatprep.subr.bf16.mxu0 0
  %908 = vmatpush1.bf16.msra.mxu0 %v877
  %909 = vmatprep.subr.bf16.mxu0 0
  %910 = vmatpush2.bf16.msra.mxu0 0
  %911 = vmatprep.subr.bf16.mxu0 0
  %912 = vmatpush2.bf16.msra.mxu0 0
  %913 = vmatprep.subr.bf16.mxu0 0
  %914 = vmatpush2.bf16.msra.mxu0 0
  %915 = vmatprep.subr.bf16.mxu0 0
  %916 = vmatpush2.bf16.msra.mxu0 0
  %917 = vmatprep.subr.bf16.mxu0 0
  %918 = vmatpush2.bf16.msra.mxu0 0
  %919 = vmatprep.subr.bf16.mxu0 0
  %920 = vmatpush2.bf16.msra.mxu0 0
  %921 = vmatprep.subr.bf16.mxu0 0
  %922 = vmatpush2.bf16.msra.mxu0 0
  %923 = vmatprep.subr.bf16.mxu0 0
  %924 = vmatpush2.bf16.msra.mxu0 0
  %925 = vmatprep.mubr.bf16.mxu0 0
  %926 = vmatmul.mubr.bf16.gmra.mxu0 %v882
  %v927 = vpop.f32.mrf.mxu0
  %v928 = vadd.f32 %v847, %v927
  %v929 = vpop.f32.mrf.mxu0
  %v930 = vpop.f32.mrf.mxu0
  %v931 = vadd.f32 %v847, %v930
  %v932 = vpop.f32.mrf.mxu0
  %933 = vmatprep.mubr.bf16.mxu0 0
  %934 = vmatmul.mubr.bf16.gmra.mxu0 %v885
  %v935 = vpop.f32.mrf.mxu0
  %v936 = vadd.f32 %v847, %v935
  %v937 = vpop.f32.mrf.mxu0
  %v938 = vpop.f32.mrf.mxu0
  %v939 = vadd.f32 %v847, %v938
  %v940 = vpop.f32.mrf.mxu0
  %941 = vmatprep.mubr.bf16.mxu0 0
  %942 = vmatmul.mubr.bf16.gmra.mxu0 %v888
  %v943 = vpop.f32.mrf.mxu0
  %v944 = vadd.f32 %v847, %v943
  %v945 = vpop.f32.mrf.mxu0
  %v946 = vpop.f32.mrf.mxu0
  %v947 = vadd.f32 %v847, %v946
  %v948 = vpop.f32.mrf.mxu0
  %949 = vmatprep.mubr.bf16.mxu0 0
  %950 = vmatmul.mubr.bf16.gmra.mxu0 %v891
  %v951 = vpop.f32.mrf.mxu0
  %v952 = vadd.f32 %v847, %v951
  %v953 = vpop.f32.mrf.mxu0
  %v954 = vpop.f32.mrf.mxu0
  %v955 = vadd.f32 %v847, %v954
  %v956 = vpop.f32.mrf.mxu0
  %957 = vdwg.mxu0
  %958 = vst [vmem:[%s6] sm:$0xff] %v928
  %959 = vst [vmem:[%s6 + $0x8] sm:$0xff] %v931
  %960 = vst [vmem:[%s6 + $0x10] sm:$0xff] %v936
  %961 = vst [vmem:[%s6 + $0x18] sm:$0xff] %v939
  %962 = vst [vmem:[%s6 + $0x20] sm:$0xff] %v944
  %963 = vst [vmem:[%s6 + $0x28] sm:$0xff] %v947
  %964 = vst [vmem:[%s6 + $0x30] sm:$0xff] %v952
  %965 = vst [vmem:[%s6 + $0x38] sm:$0xff] %v955
  // Predicated region
  $region30: #{lstm_model_forward.3} parent=0 // pred_check
    _
  $region31: #{lstm_model_forward.3} parent=0 // pred_check_branch
    %967 = sbr.rel (0) target = $region33
  $region32: #{lstm_model_forward.3} parent=0 // pred_region
    _
  $region33: #{lstm_model_forward.3} parent=0 // pred_fallthru
    _
  // Predicated region
  $region34: #{lstm_model_forward.3} parent=0 // pred_check
    _
  $region35: #{lstm_model_forward.3} parent=0 // pred_check_branch
    %969 = sbr.rel (0) target = $region37
  $region36: #{lstm_model_forward.3} parent=0 // pred_region
    _
  $region37: #{lstm_model_forward.3} parent=0 // pred_fallthru
    _

</llo_original>
